<compile_context>
chip_gen: v6e
topology: v6e:2x2x1
jax: 0.10.0
libtpu: 0.0.40
codegen_flags: <defaults>
</compile_context>

<pallas_src>
import functools

import jax
import jax.numpy as jnp
from jax import lax
from jax.experimental import pallas as pl
from jax.experimental.pallas import tpu as pltpu

_LANE = 128
_VMEM_LIMIT_CACHE = None


def _vmem_limit_bytes():
    """Generation-dependent scoped-VMEM limit (~3/4 of physical, capped)."""
    global _VMEM_LIMIT_CACHE
    if _VMEM_LIMIT_CACHE is None:
        try:
            info = pltpu.get_tpu_info()
            cap = int(getattr(info, "vmem_capacity_bytes", 0)) or 64 * 1024 * 1024
        except Exception:
            cap = 64 * 1024 * 1024  # conservative (v7x) fallback
        _VMEM_LIMIT_CACHE = int(min(cap * 3 // 4, 100 * 1024 * 1024))
    return _VMEM_LIMIT_CACHE


def _pick_row_tile(Hout, Wout, target_rows=512):
    """Pick TH (output rows per tile): divisor of Hout, TM=TH*Wout ~ target, TM%8==0."""
    th_target = max(1, target_rows // max(Wout, 1))
    if th_target >= Hout:
        return Hout
    best = None
    for th in range(1, th_target + 1):
        if Hout % th == 0 and (th * Wout) % 8 == 0:
            best = th
    return best if best is not None else Hout


def _conv_taps_kernel(xp_ref, w_ref, y_ref, stat_ref, *, kh, kw, stride, TH, Wout, Cout):
    """One (image, row-tile) step: kh*kw conv taps accumulated into a per-tile f32
    accumulator via MXU matmuls; emits bf16 pre-BN conv result (Cout wide) and
    per-tile per-channel sum / sumsq partials for the two-pass BatchNorm."""
    TM = TH * Wout
    cin = xp_ref.shape[-1]
    cpad = w_ref.shape[-1]
    row_span = (TH - 1) * stride + kh

    mt = pl.program_id(1)
    row0 = pl.multiple_of(mt * (TH * stride), TH * stride)
    # Single dynamic load of the padded-input row window for this tile (VMEM-resident).
    rows = xp_ref[pl.ds(row0, row_span), :, :]          # (row_span, Wp, Cin) bf16

    acc = jnp.zeros((TM, cpad), jnp.float32)
    for dy in range(kh):                                # unrolled tap loop
        for dx in range(kw):
            tap = rows[dy: dy + (TH - 1) * stride + 1: stride,
                       dx: dx + (Wout - 1) * stride + 1: stride, :]
            tap = tap.reshape(TM, cin)
            acc = acc + jnp.dot(tap, w_ref[dy * kw + dx],
                                preferred_element_type=jnp.float32)

    y = acc[:, :Cout] if cpad != Cout else acc          # drop MXU channel pad
    # BN partial stats from the f32 accumulator (before the bf16 cast).
    stat_ref[0:1, :] = jnp.sum(y, axis=0, keepdims=True)
    stat_ref[1:2, :] = jnp.sum(y * y, axis=0, keepdims=True)
    y_ref[...] = y.astype(y_ref.dtype)                  # bf16, Cout-wide HBM store


def _bn_relu_kernel(y_ref, scale_ref, bias_ref, o_ref):
    """Elementwise BatchNorm affine (pre-folded scale/bias) + ReLU per tile."""
    y = y_ref[...].astype(jnp.float32)
    o_ref[...] = jnp.maximum(y * scale_ref[...] + bias_ref[...], 0.0)


def conv_bn_relu(x_nhwc, w_hwio, gamma, beta, *, stride=1, padding=1, eps=1e-5):
    """Fused Conv2d(bias=False) + BatchNorm2d (batch stats) + ReLU.

    x_nhwc : (N, H, W, Cin) float32
    w_hwio : (kh, kw, Cin, Cout) float32
    returns: (N, Hout, Wout, Cout) float32
    """
    N, H, W, Cin = x_nhwc.shape
    kh, kw, _, Cout = w_hwio.shape
    Hout = (H + 2 * padding - kh) // stride + 1
    Wout = (W + 2 * padding - kw) // stride + 1
    M = Hout * Wout
    Hp, Wp = H + 2 * padding, W + 2 * padding
    Cpad = ((Cout + _LANE - 1) // _LANE) * _LANE        # lane-dense matmul N dim

    TH = _pick_row_tile(Hout, Wout)                     # output rows per tile
    MT = Hout // TH                                     # tiles per image
    TM = TH * Wout                                      # rows per tile

    # Halo pad once; bf16 operands for the MXU / halved DMA bytes.
    xp = jnp.pad(x_nhwc.astype(jnp.bfloat16),
                 ((0, 0), (padding, padding), (padding, padding), (0, 0)))
    wmat = jnp.pad(w_hwio.astype(jnp.float32),
                   ((0, 0), (0, 0), (0, 0), (0, Cpad - Cout)))
    wmat = wmat.reshape(kh * kw, Cin, Cpad).astype(jnp.bfloat16)

    cparams = pltpu.CompilerParams(dimension_semantics=("parallel", "parallel"),
                                   vmem_limit_bytes=_vmem_limit_bytes())

    # ---- pass 1: tiled conv + per-tile BN statistics -------------------------
    y_pre, stats = pl.pallas_call(
        functools.partial(_conv_taps_kernel, kh=kh, kw=kw, stride=stride,
                          TH=TH, Wout=Wout, Cout=Cout),
        out_shape=(jax.ShapeDtypeStruct((N, M, Cout), jnp.bfloat16),
                   jax.ShapeDtypeStruct((N * MT, 2, Cout), jnp.float32)),
        grid=(N, MT),
        in_specs=[
            # padded image stays VMEM-resident across the mt axis (index constant)
            pl.BlockSpec((None, Hp, Wp, Cin), lambda n, mt: (n, 0, 0, 0)),
            pl.BlockSpec((kh * kw, Cin, Cpad), lambda n, mt: (0, 0, 0)),
        ],
        out_specs=(
            pl.BlockSpec((None, TM, Cout), lambda n, mt: (n, mt, 0)),
            pl.BlockSpec((None, 2, Cout), lambda n, mt: (n * MT + mt, 0, 0)),
        ),
        compiler_params=cparams,
    )(xp, wmat)

    # ---- tiny hierarchical reduction + BN scale/bias fold (plain JAX) --------
    count = jnp.float32(N * M)
    total = jnp.sum(stats[:, 0, :], axis=0)
    total_sq = jnp.sum(stats[:, 1, :], axis=0)
    mean = total / count
    var = jnp.maximum(total_sq / count - mean * mean, 0.0)   # biased variance
    scale = gamma.astype(jnp.float32) * lax.rsqrt(var + eps)
    bias = beta.astype(jnp.float32) - mean * scale
    scale2 = scale.reshape(1, Cout)
    bias2 = bias.reshape(1, Cout)

    # ---- pass 2: tiled elementwise BN affine + ReLU ---------------------------
    out = pl.pallas_call(
        _bn_relu_kernel,
        out_shape=jax.ShapeDtypeStruct((N, M, Cout), jnp.float32),
        grid=(N, MT),
        in_specs=[
            pl.BlockSpec((None, TM, Cout), lambda n, mt: (n, mt, 0)),
            pl.BlockSpec((1, Cout), lambda n, mt: (0, 0)),
            pl.BlockSpec((1, Cout), lambda n, mt: (0, 0)),
        ],
        out_specs=pl.BlockSpec((None, TM, Cout), lambda n, mt: (n, mt, 0)),
        compiler_params=cparams,
    )(y_pre, scale2, bias2)

    return out.reshape(N, Hout, Wout, Cout)


@functools.partial(jax.jit, static_argnames=("stride", "padding"))
def _forward(x_nchw, w, gamma, beta, stride, padding):
    x = jnp.transpose(x_nchw, (0, 2, 3, 1)).astype(jnp.float32)   # NCHW -> NHWC
    y = conv_bn_relu(x, w, gamma, beta, stride=stride, padding=padding)
    return jnp.transpose(y, (0, 3, 1, 2))                          # back to NCHW


class ConvBasic:
    """JAX/Pallas port of ConvBasic: Conv2d(bias=False) -> BatchNorm2d -> ReLU."""

    def __init__(self, nIn, nOut, kernel=3, stride=1, padding=1, *, key):
        self.stride = stride
        self.padding = padding
        k1, k2, k3 = jax.random.split(key, 3)
        fan_in = nIn * kernel * kernel
        self.w = (jax.random.normal(k1, (kernel, kernel, nIn, nOut), jnp.float32)
                  * (2.0 / fan_in) ** 0.5)                          # HWIO
        self.gamma = 1.0 + 0.1 * jax.random.normal(k2, (nOut,), jnp.float32)
        self.beta = 0.1 * jax.random.normal(k3, (nOut,), jnp.float32)

    def __call__(self, x_nchw):
        return _forward(x_nchw, self.w, self.gamma, self.beta,
                        self.stride, self.padding)


# ---------------------- pure-JAX reference (for checking) --------------------
def _ref_forward(mod: ConvBasic, x_nchw, eps=1e-5):
    x = jnp.transpose(x_nchw, (0, 2, 3, 1)).astype(jnp.float32)
    y = lax.conv_general_dilated(
        x, mod.w, window_strides=(mod.stride, mod.stride),
        padding=[(mod.padding, mod.padding), (mod.padding, mod.padding)],
        dimension_numbers=("NHWC", "HWIO", "NHWC"))
    mean = y.mean(axis=(0, 1, 2), keepdims=True)
    var = ((y - mean) ** 2).mean(axis=(0, 1, 2), keepdims=True)
    y = (y - mean) * lax.rsqrt(var + eps) * mod.gamma + mod.beta
    y = jnp.maximum(y, 0.0)
    return jnp.transpose(y, (0, 3, 1, 2))


if __name__ == "__main__":
    key = jax.random.PRNGKey(0)
    kx, kp = jax.random.split(key, 2)

    nIn, nOut = 16, 8
    x = jax.random.normal(kx, (2, nIn, 16, 16), jnp.float32)   # NCHW

    mod = ConvBasic(nIn, nOut, kernel=3, stride=1, padding=1, key=kp)
    out = jax.block_until_ready(mod(x))
    assert out.shape == (2, nOut, 16, 16), out.shape

    ref = _ref_forward(mod, x)
    # bf16 matmul operands + bf16 intermediate (f32 accumulation & f32 stats)
    # -> loosened tolerance vs the f32 reference.
    assert jnp.allclose(out, ref, rtol=5e-2, atol=5e-2), (
        "mismatch: max abs err = %f" % float(jnp.max(jnp.abs(out - ref))))

    print("KERNEL_OK")
</pallas_src>

<mosaic_0001>
module attributes {stable_mosaic.version = 11 : i64} {
  func.func @_conv_taps_kernel(%arg0: i32, %arg1: i32, %arg2: memref<1x18x18x16xbf16, #tpu.memory_space<vmem>>, %arg3: memref<9x16x128xbf16, #tpu.memory_space<vmem>>, %arg4: memref<1x256x8xbf16, #tpu.memory_space<vmem>>, %arg5: memref<1x2x8xf32, #tpu.memory_space<vmem>>) attributes {dimension_semantics = [#tpu.dimension_semantics<parallel>, #tpu.dimension_semantics<parallel>], iteration_bounds = array<i64: 2, 1>, scalar_prefetch = 0 : i64, scratch_operands = 0 : i64, tpu.core_type = #tpu.core_type<tc>, window_params = [{transform_indices = @transform_0, window_bounds = array<i64: 1, 18, 18, 16>}, {pipeline_mode = #tpu.pipeline_mode<synchronous>, transform_indices = @transform_1, window_bounds = array<i64: 9, 16, 128>}, {transform_indices = @transform_2, window_bounds = array<i64: 1, 256, 8>}, {transform_indices = @transform_3, window_bounds = array<i64: 1, 2, 8>}]} {
    %c16_i32 = arith.constant 16 : i32
    %0 = arith.muli %arg1, %c16_i32 : i32
    %1 = tpu.assume_multiple %0, 16 : i32
    %c0 = arith.constant 0 : index
    %2 = arith.index_cast %1 : i32 to index
    %c0_0 = arith.constant 0 : index
    %c0_1 = arith.constant 0 : index
    %3 = vector.load %arg2[%c0, %2, %c0_0, %c0_1] : memref<1x18x18x16xbf16, #tpu.memory_space<vmem>>, vector<1x18x18x16xbf16>
    %4 = vector.shape_cast %3 : vector<1x18x18x16xbf16> to vector<18x18x16xbf16>
    %cst = arith.constant 0.000000e+00 : f32
    %5 = vector.broadcast %cst : f32 to vector<256x128xf32>
    %6 = vector.extract_strided_slice %4 {offsets = [0, 0, 0], sizes = [16, 16, 16], strides = [1, 1, 1]} : vector<18x18x16xbf16> to vector<16x16x16xbf16>
    %7 = vector.shape_cast %6 : vector<16x16x16xbf16> to vector<256x16xbf16>
    %c0_2 = arith.constant 0 : index
    %c0_3 = arith.constant 0 : index
    %c0_4 = arith.constant 0 : index
    %8 = vector.load %arg3[%c0_2, %c0_3, %c0_4] : memref<9x16x128xbf16, #tpu.memory_space<vmem>>, vector<1x16x128xbf16>
    %9 = vector.shape_cast %8 : vector<1x16x128xbf16> to vector<16x128xbf16>
    %cst_5 = arith.constant dense<0.000000e+00> : vector<256x128xf32>
    %10 = tpu.matmul %7, %9, %cst_5 {dimension_numbers = #tpu.dot_dimension_numbers<[1], [0], [0], [1], [0, 0, 1, 1], [], []>} : vector<256x16xbf16>, vector<16x128xbf16>, vector<256x128xf32> -> vector<256x128xf32>
    %11 = arith.addf %5, %10 : vector<256x128xf32>
    %12 = vector.extract_strided_slice %4 {offsets = [0, 1, 0], sizes = [16, 16, 16], strides = [1, 1, 1]} : vector<18x18x16xbf16> to vector<16x16x16xbf16>
    %13 = vector.shape_cast %12 : vector<16x16x16xbf16> to vector<256x16xbf16>
    %c1 = arith.constant 1 : index
    %c0_6 = arith.constant 0 : index
    %c0_7 = arith.constant 0 : index
    %14 = vector.load %arg3[%c1, %c0_6, %c0_7] : memref<9x16x128xbf16, #tpu.memory_space<vmem>>, vector<1x16x128xbf16>
    %15 = vector.shape_cast %14 : vector<1x16x128xbf16> to vector<16x128xbf16>
    %cst_8 = arith.constant dense<0.000000e+00> : vector<256x128xf32>
    %16 = tpu.matmul %13, %15, %cst_8 {dimension_numbers = #tpu.dot_dimension_numbers<[1], [0], [0], [1], [0, 0, 1, 1], [], []>} : vector<256x16xbf16>, vector<16x128xbf16>, vector<256x128xf32> -> vector<256x128xf32>
    %17 = arith.addf %11, %16 : vector<256x128xf32>
    %18 = vector.extract_strided_slice %4 {offsets = [0, 2, 0], sizes = [16, 16, 16], strides = [1, 1, 1]} : vector<18x18x16xbf16> to vector<16x16x16xbf16>
    %19 = vector.shape_cast %18 : vector<16x16x16xbf16> to vector<256x16xbf16>
    %c2 = arith.constant 2 : index
    %c0_9 = arith.constant 0 : index
    %c0_10 = arith.constant 0 : index
    %20 = vector.load %arg3[%c2, %c0_9, %c0_10] : memref<9x16x128xbf16, #tpu.memory_space<vmem>>, vector<1x16x128xbf16>
    %21 = vector.shape_cast %20 : vector<1x16x128xbf16> to vector<16x128xbf16>
    %cst_11 = arith.constant dense<0.000000e+00> : vector<256x128xf32>
    %22 = tpu.matmul %19, %21, %cst_11 {dimension_numbers = #tpu.dot_dimension_numbers<[1], [0], [0], [1], [0, 0, 1, 1], [], []>} : vector<256x16xbf16>, vector<16x128xbf16>, vector<256x128xf32> -> vector<256x128xf32>
    %23 = arith.addf %17, %22 : vector<256x128xf32>
    %24 = vector.extract_strided_slice %4 {offsets = [1, 0, 0], sizes = [16, 16, 16], strides = [1, 1, 1]} : vector<18x18x16xbf16> to vector<16x16x16xbf16>
    %25 = vector.shape_cast %24 : vector<16x16x16xbf16> to vector<256x16xbf16>
    %c3 = arith.constant 3 : index
    %c0_12 = arith.constant 0 : index
    %c0_13 = arith.constant 0 : index
    %26 = vector.load %arg3[%c3, %c0_12, %c0_13] : memref<9x16x128xbf16, #tpu.memory_space<vmem>>, vector<1x16x128xbf16>
    %27 = vector.shape_cast %26 : vector<1x16x128xbf16> to vector<16x128xbf16>
    %cst_14 = arith.constant dense<0.000000e+00> : vector<256x128xf32>
    %28 = tpu.matmul %25, %27, %cst_14 {dimension_numbers = #tpu.dot_dimension_numbers<[1], [0], [0], [1], [0, 0, 1, 1], [], []>} : vector<256x16xbf16>, vector<16x128xbf16>, vector<256x128xf32> -> vector<256x128xf32>
    %29 = arith.addf %23, %28 : vector<256x128xf32>
    %30 = vector.extract_strided_slice %4 {offsets = [1, 1, 0], sizes = [16, 16, 16], strides = [1, 1, 1]} : vector<18x18x16xbf16> to vector<16x16x16xbf16>
    %31 = vector.shape_cast %30 : vector<16x16x16xbf16> to vector<256x16xbf16>
    %c4 = arith.constant 4 : index
    %c0_15 = arith.constant 0 : index
    %c0_16 = arith.constant 0 : index
    %32 = vector.load %arg3[%c4, %c0_15, %c0_16] : memref<9x16x128xbf16, #tpu.memory_space<vmem>>, vector<1x16x128xbf16>
    %33 = vector.shape_cast %32 : vector<1x16x128xbf16> to vector<16x128xbf16>
    %cst_17 = arith.constant dense<0.000000e+00> : vector<256x128xf32>
    %34 = tpu.matmul %31, %33, %cst_17 {dimension_numbers = #tpu.dot_dimension_numbers<[1], [0], [0], [1], [0, 0, 1, 1], [], []>} : vector<256x16xbf16>, vector<16x128xbf16>, vector<256x128xf32> -> vector<256x128xf32>
    %35 = arith.addf %29, %34 : vector<256x128xf32>
    %36 = vector.extract_strided_slice %4 {offsets = [1, 2, 0], sizes = [16, 16, 16], strides = [1, 1, 1]} : vector<18x18x16xbf16> to vector<16x16x16xbf16>
    %37 = vector.shape_cast %36 : vector<16x16x16xbf16> to vector<256x16xbf16>
    %c5 = arith.constant 5 : index
    %c0_18 = arith.constant 0 : index
    %c0_19 = arith.constant 0 : index
    %38 = vector.load %arg3[%c5, %c0_18, %c0_19] : memref<9x16x128xbf16, #tpu.memory_space<vmem>>, vector<1x16x128xbf16>
    %39 = vector.shape_cast %38 : vector<1x16x128xbf16> to vector<16x128xbf16>
    %cst_20 = arith.constant dense<0.000000e+00> : vector<256x128xf32>
    %40 = tpu.matmul %37, %39, %cst_20 {dimension_numbers = #tpu.dot_dimension_numbers<[1], [0], [0], [1], [0, 0, 1, 1], [], []>} : vector<256x16xbf16>, vector<16x128xbf16>, vector<256x128xf32> -> vector<256x128xf32>
    %41 = arith.addf %35, %40 : vector<256x128xf32>
    %42 = vector.extract_strided_slice %4 {offsets = [2, 0, 0], sizes = [16, 16, 16], strides = [1, 1, 1]} : vector<18x18x16xbf16> to vector<16x16x16xbf16>
    %43 = vector.shape_cast %42 : vector<16x16x16xbf16> to vector<256x16xbf16>
    %c6 = arith.constant 6 : index
    %c0_21 = arith.constant 0 : index
    %c0_22 = arith.constant 0 : index
    %44 = vector.load %arg3[%c6, %c0_21, %c0_22] : memref<9x16x128xbf16, #tpu.memory_space<vmem>>, vector<1x16x128xbf16>
    %45 = vector.shape_cast %44 : vector<1x16x128xbf16> to vector<16x128xbf16>
    %cst_23 = arith.constant dense<0.000000e+00> : vector<256x128xf32>
    %46 = tpu.matmul %43, %45, %cst_23 {dimension_numbers = #tpu.dot_dimension_numbers<[1], [0], [0], [1], [0, 0, 1, 1], [], []>} : vector<256x16xbf16>, vector<16x128xbf16>, vector<256x128xf32> -> vector<256x128xf32>
    %47 = arith.addf %41, %46 : vector<256x128xf32>
    %48 = vector.extract_strided_slice %4 {offsets = [2, 1, 0], sizes = [16, 16, 16], strides = [1, 1, 1]} : vector<18x18x16xbf16> to vector<16x16x16xbf16>
    %49 = vector.shape_cast %48 : vector<16x16x16xbf16> to vector<256x16xbf16>
    %c7 = arith.constant 7 : index
    %c0_24 = arith.constant 0 : index
    %c0_25 = arith.constant 0 : index
    %50 = vector.load %arg3[%c7, %c0_24, %c0_25] : memref<9x16x128xbf16, #tpu.memory_space<vmem>>, vector<1x16x128xbf16>
    %51 = vector.shape_cast %50 : vector<1x16x128xbf16> to vector<16x128xbf16>
    %cst_26 = arith.constant dense<0.000000e+00> : vector<256x128xf32>
    %52 = tpu.matmul %49, %51, %cst_26 {dimension_numbers = #tpu.dot_dimension_numbers<[1], [0], [0], [1], [0, 0, 1, 1], [], []>} : vector<256x16xbf16>, vector<16x128xbf16>, vector<256x128xf32> -> vector<256x128xf32>
    %53 = arith.addf %47, %52 : vector<256x128xf32>
    %54 = vector.extract_strided_slice %4 {offsets = [2, 2, 0], sizes = [16, 16, 16], strides = [1, 1, 1]} : vector<18x18x16xbf16> to vector<16x16x16xbf16>
    %55 = vector.shape_cast %54 : vector<16x16x16xbf16> to vector<256x16xbf16>
    %c8 = arith.constant 8 : index
    %c0_27 = arith.constant 0 : index
    %c0_28 = arith.constant 0 : index
    %56 = vector.load %arg3[%c8, %c0_27, %c0_28] : memref<9x16x128xbf16, #tpu.memory_space<vmem>>, vector<1x16x128xbf16>
    %57 = vector.shape_cast %56 : vector<1x16x128xbf16> to vector<16x128xbf16>
    %cst_29 = arith.constant dense<0.000000e+00> : vector<256x128xf32>
    %58 = tpu.matmul %55, %57, %cst_29 {dimension_numbers = #tpu.dot_dimension_numbers<[1], [0], [0], [1], [0, 0, 1, 1], [], []>} : vector<256x16xbf16>, vector<16x128xbf16>, vector<256x128xf32> -> vector<256x128xf32>
    %59 = arith.addf %53, %58 : vector<256x128xf32>
    %60 = vector.extract_strided_slice %59 {offsets = [0, 0], sizes = [256, 8], strides = [1, 1]} : vector<256x128xf32> to vector<256x8xf32>
    %cst_30 = arith.constant dense<0.000000e+00> : vector<8xf32>
    %61 = vector.multi_reduction <add>, %60, %cst_30 [0] : vector<256x8xf32> to vector<8xf32>
    %62 = vector.shape_cast %61 : vector<8xf32> to vector<1x8xf32>
    %c0_31 = arith.constant 0 : index
    %c0_32 = arith.constant 0 : index
    %c0_33 = arith.constant 0 : index
    %63 = vector.load %arg5[%c0_31, %c0_32, %c0_33] : memref<1x2x8xf32, #tpu.memory_space<vmem>>, vector<1x1x8xf32>
    %64 = vector.shape_cast %63 : vector<1x1x8xf32> to vector<1x8xf32>
    %65 = vector.shape_cast %62 : vector<1x8xf32> to vector<1x1x8xf32>
    tpu.vector_store %arg5[%c0_31, %c0_32, %c0_33], %65 {strides = array<i32>} : memref<1x2x8xf32, #tpu.memory_space<vmem>>, vector<1x1x8xf32>,
    %66 = arith.mulf %60, %60 : vector<256x8xf32>
    %cst_34 = arith.constant dense<0.000000e+00> : vector<8xf32>
    %67 = vector.multi_reduction <add>, %66, %cst_34 [0] : vector<256x8xf32> to vector<8xf32>
    %68 = vector.shape_cast %67 : vector<8xf32> to vector<1x8xf32>
    %c0_35 = arith.constant 0 : index
    %c1_36 = arith.constant 1 : index
    %c0_37 = arith.constant 0 : index
    %69 = vector.load %arg5[%c0_35, %c1_36, %c0_37] : memref<1x2x8xf32, #tpu.memory_space<vmem>>, vector<1x1x8xf32>
    %70 = vector.shape_cast %69 : vector<1x1x8xf32> to vector<1x8xf32>
    %71 = vector.shape_cast %68 : vector<1x8xf32> to vector<1x1x8xf32>
    tpu.vector_store %arg5[%c0_35, %c1_36, %c0_37], %71 {strides = array<i32>} : memref<1x2x8xf32, #tpu.memory_space<vmem>>, vector<1x1x8xf32>,
    %72 = arith.truncf %60 : vector<256x8xf32> to vector<256x8xbf16>
    %c0_38 = arith.constant 0 : index
    %c0_39 = arith.constant 0 : index
    %c0_40 = arith.constant 0 : index
    %73 = vector.load %arg4[%c0_38, %c0_39, %c0_40] : memref<1x256x8xbf16, #tpu.memory_space<vmem>>, vector<1x256x8xbf16>
    %74 = vector.shape_cast %73 : vector<1x256x8xbf16> to vector<256x8xbf16>
    %75 = vector.shape_cast %72 : vector<256x8xbf16> to vector<1x256x8xbf16>
    tpu.vector_store %arg4[%c0_38, %c0_39, %c0_40], %75 {strides = array<i32>} : memref<1x256x8xbf16, #tpu.memory_space<vmem>>, vector<1x256x8xbf16>,
    return
  }
  func.func @transform_0(%arg0: i32, %arg1: i32) -> (i32, i32, i32, i32) {
    %c0_i32 = arith.constant 0 : i32
    %c0_i32_0 = arith.constant 0 : i32
    %c0_i32_1 = arith.constant 0 : i32
    %c0_i32_2 = arith.constant 0 : i32
    return %arg0, %c0_i32, %c0_i32_0, %c0_i32_1 : i32, i32, i32, i32
  }
  func.func @transform_1(%arg0: i32, %arg1: i32) -> (i32, i32, i32) {
    %c0_i32 = arith.constant 0 : i32
    %c0_i32_0 = arith.constant 0 : i32
    %c0_i32_1 = arith.constant 0 : i32
    %c0_i32_2 = arith.constant 0 : i32
    return %c0_i32, %c0_i32_0, %c0_i32_1 : i32, i32, i32
  }
  func.func @transform_2(%arg0: i32, %arg1: i32) -> (i32, i32, i32) {
    %c0_i32 = arith.constant 0 : i32
    %c0_i32_0 = arith.constant 0 : i32
    return %arg0, %arg1, %c0_i32 : i32, i32, i32
  }
  func.func @transform_3(%arg0: i32, %arg1: i32) -> (i32, i32, i32) {
    %c1_i32 = arith.constant 1 : i32
    %0 = arith.muli %arg0, %c1_i32 : i32
    %1 = arith.addi %0, %arg1 : i32
    %c0_i32 = arith.constant 0 : i32
    %c0_i32_0 = arith.constant 0 : i32
    %c0_i32_1 = arith.constant 0 : i32
    return %1, %c0_i32, %c0_i32_0 : i32, i32, i32
  }
}

module attributes {stable_mosaic.version = 11 : i64} {
  func.func @_bn_relu_kernel(%arg0: i32, %arg1: i32, %arg2: memref<1x256x8xbf16, #tpu.memory_space<vmem>>, %arg3: memref<1x8xf32, #tpu.memory_space<vmem>>, %arg4: memref<1x8xf32, #tpu.memory_space<vmem>>, %arg5: memref<1x256x8xf32, #tpu.memory_space<vmem>>) attributes {dimension_semantics = [#tpu.dimension_semantics<parallel>, #tpu.dimension_semantics<parallel>], iteration_bounds = array<i64: 2, 1>, scalar_prefetch = 0 : i64, scratch_operands = 0 : i64, tpu.core_type = #tpu.core_type<tc>, window_params = [{transform_indices = @transform_0, window_bounds = array<i64: 1, 256, 8>}, {pipeline_mode = #tpu.pipeline_mode<synchronous>, transform_indices = @transform_1, window_bounds = array<i64: 1, 8>}, {pipeline_mode = #tpu.pipeline_mode<synchronous>, transform_indices = @transform_2, window_bounds = array<i64: 1, 8>}, {transform_indices = @transform_3, window_bounds = array<i64: 1, 256, 8>}]} {
    %c0 = arith.constant 0 : index
    %c0_0 = arith.constant 0 : index
    %c0_1 = arith.constant 0 : index
    %0 = vector.load %arg2[%c0, %c0_0, %c0_1] : memref<1x256x8xbf16, #tpu.memory_space<vmem>>, vector<1x256x8xbf16>
    %1 = vector.shape_cast %0 : vector<1x256x8xbf16> to vector<256x8xbf16>
    %2 = arith.extf %1 : vector<256x8xbf16> to vector<256x8xf32>
    %c0_2 = arith.constant 0 : index
    %c0_3 = arith.constant 0 : index
    %3 = vector.load %arg3[%c0_2, %c0_3] : memref<1x8xf32, #tpu.memory_space<vmem>>, vector<1x8xf32>
    %4 = vector.broadcast %3 : vector<1x8xf32> to vector<256x8xf32>
    %5 = arith.mulf %2, %4 : vector<256x8xf32>
    %c0_4 = arith.constant 0 : index
    %c0_5 = arith.constant 0 : index
    %6 = vector.load %arg4[%c0_4, %c0_5] : memref<1x8xf32, #tpu.memory_space<vmem>>, vector<1x8xf32>
    %7 = vector.broadcast %6 : vector<1x8xf32> to vector<256x8xf32>
    %8 = arith.addf %5, %7 : vector<256x8xf32>
    %cst = arith.constant 0.000000e+00 : f32
    %9 = vector.broadcast %cst : f32 to vector<256x8xf32>
    %10 = arith.maximumf %8, %9 : vector<256x8xf32>
    %c0_6 = arith.constant 0 : index
    %c0_7 = arith.constant 0 : index
    %c0_8 = arith.constant 0 : index
    %11 = vector.load %arg5[%c0_6, %c0_7, %c0_8] : memref<1x256x8xf32, #tpu.memory_space<vmem>>, vector<1x256x8xf32>
    %12 = vector.shape_cast %11 : vector<1x256x8xf32> to vector<256x8xf32>
    %13 = vector.shape_cast %10 : vector<256x8xf32> to vector<1x256x8xf32>
    tpu.vector_store %arg5[%c0_6, %c0_7, %c0_8], %13 {strides = array<i32>} : memref<1x256x8xf32, #tpu.memory_space<vmem>>, vector<1x256x8xf32>,
    return
  }
  func.func @transform_0(%arg0: i32, %arg1: i32) -> (i32, i32, i32) {
    %c0_i32 = arith.constant 0 : i32
    %c0_i32_0 = arith.constant 0 : i32
    return %arg0, %arg1, %c0_i32 : i32, i32, i32
  }
  func.func @transform_1(%arg0: i32, %arg1: i32) -> (i32, i32) {
    %c0_i32 = arith.constant 0 : i32
    %c0_i32_0 = arith.constant 0 : i32
    %c0_i32_1 = arith.constant 0 : i32
    return %c0_i32, %c0_i32_0 : i32, i32
  }
  func.func @transform_2(%arg0: i32, %arg1: i32) -> (i32, i32) {
    %c0_i32 = arith.constant 0 : i32
    %c0_i32_0 = arith.constant 0 : i32
    %c0_i32_1 = arith.constant 0 : i32
    return %c0_i32, %c0_i32_0 : i32, i32
  }
  func.func @transform_3(%arg0: i32, %arg1: i32) -> (i32, i32, i32) {
    %c0_i32 = arith.constant 0 : i32
    %c0_i32_0 = arith.constant 0 : i32
    return %arg0, %arg1, %c0_i32 : i32, i32, i32
  }
}

</mosaic_0001>

<llo_original>
// kernel: _forward.3
$region0: #{_forward.3}
  #allocation0 [shape = 'u32[]', space=smem, size = 0x4, offset = 0x4, fixed_abs, tag = 'smem constant byte address 0x4 - core index']
  #allocation1 [shape = 'u32[144,128]{1,0:T(1,128)}', space=vmem, size = 0x12000, scoped, tag = 'internal scratch']
  %s0 = inlined_call_operand.vmem [shape: bf16[2,256,8], index: 0, kind: input, shape index: {}]
  %s1 = inlined_call_operand.vmem [shape: f32[1,8], index: 1, kind: input, shape index: {}]
  %s2 = inlined_call_operand.vmem [shape: f32[1,8], index: 2, kind: input, shape index: {}]
  %s3 = inlined_call_operand.vmem [shape: f32[2,256,8], index: 3, kind: output, shape index: {}]
  %s4 = sld [smem:[#allocation0]]
  $region45: #{_forward.3} parent=0
    _
  %s6 = ssub.s32 1, %s4
  %s7 = scalar_select 0, %s6, %s4
  loop: start=0, step=1, limit=4
  $region2: #{_forward.3} parent=0 // loop_pre_header
    _
  $region3: #{_forward.3} parent=0 // loop_header
    %s9 = sphi 0, %s13
    %p10 = scmp.ge.s32.totalorder %s9, 4
    %s16 = sphi 0, %s28
    %s17 = sphi 0, %s24
    %s18 = sphi 0, %s16
    %s19 = sphi 0, %s17
    %s20 = sphi 0, %s18
    %s21 = sphi 0, %s19
    %s33 = sphi 0, %s35
    %s36 = sphi 0, %s33
    %s37 = sphi 0, %s36
    %s53 = sphi 0, %s37
    %s57 = sphi 0, %s57
    %s59 = sphi 0, %s57
    %s60 = sphi 0, %s59
    %s74 = sphi 0, %s60
    %s78 = sphi 0, %s78
    %s80 = sphi 0, %s78
    %s81 = sphi 0, %s80
    %s95 = sphi 0, %s81
    %s103 = sphi 0, %s105
    %s106 = sphi 0, %s103
    %s107 = sphi 0, %s106
    %s123 = sphi 0, %s107
  $region4: #{_forward.3} parent=0 // loop_header_branch
    %12 = sbr.rel (%p10) target = $region8
  $region5: #{_forward.3} parent=0 // loop_body
    %s14 = ssub.s32 %s9, 1
    %s15 = ssub.s32 %s9, 2
    %s22 = sadd.s32 1, %s17
    %p23 = scmp.ge.s32.totalorder %s22, 1
    %s24 = scalar_select %p23, 0, %s22
    %s25 = sadd.s32 1, %s16
    %s26 = scalar_select %p23, %s25, %s16
    %p27 = scmp.ge.s32.totalorder %s26, 2
    %s28 = scalar_select %p27, 0, %s26
    %s29 = ssub.s32 %s16, %s28
    %s30 = ssub.s32 %s17, %s24
    %s31 = sor.u32 %s29, %s30
    %p32 = scmp.eq.s32.totalorder %s31, 0
    %s34 = sadd.s32 %s33, 1
    %s35 = scalar_select %p32, %s33, %s34
    %p38 = pneg %p32
    %p39 = scmp.eq.s32.totalorder %s9, 1
    %p40 = por %p38, %p39
    %p41 = scmp.ne.s32.totalorder %s33, %s36
    %p42 = scmp.eq.s32.totalorder %s9, 0
    %p43 = por %p41, %p42
    %p44 = scmp.ne.s32.totalorder %s33, %s36
    %p45 = scmp.eq.s32.totalorder %s14, 1
    %p46 = por %p44, %p45
    %p47 = scmp.ne.s32.totalorder %s36, %s37
    %p48 = scmp.eq.s32.totalorder %s14, 0
    %p49 = por %p47, %p48
    %p50 = scmp.ne.s32.totalorder %s36, %s37
    %p51 = scmp.eq.s32.totalorder %s15, 1
    %p52 = por %p50, %p51
    %p54 = scmp.ne.s32.totalorder %s37, %s53
    %p55 = scmp.eq.s32.totalorder %s15, 0
    %p56 = por %p54, %p55
    %s58 = sadd.s32 %s57, 1
    %p61 = scmp.eq.s32.totalorder %s9, 1
    %p62 = scmp.ne.s32.totalorder %s57, %s59
    %p63 = scmp.eq.s32.totalorder %s9, 0
    %p64 = por %p62, %p63
    %p65 = scmp.ne.s32.totalorder %s57, %s59
    %p66 = scmp.eq.s32.totalorder %s14, 1
    %p67 = por %p65, %p66
    %p68 = scmp.ne.s32.totalorder %s59, %s60
    %p69 = scmp.eq.s32.totalorder %s14, 0
    %p70 = por %p68, %p69
    %p71 = scmp.ne.s32.totalorder %s59, %s60
    %p72 = scmp.eq.s32.totalorder %s15, 1
    %p73 = por %p71, %p72
    %p75 = scmp.ne.s32.totalorder %s60, %s74
    %p76 = scmp.eq.s32.totalorder %s15, 0
    %p77 = por %p75, %p76
    %s79 = sadd.s32 %s78, 1
    %p82 = scmp.eq.s32.totalorder %s9, 1
    %p83 = scmp.ne.s32.totalorder %s78, %s80
    %p84 = scmp.eq.s32.totalorder %s9, 0
    %p85 = por %p83, %p84
    %p86 = scmp.ne.s32.totalorder %s78, %s80
    %p87 = scmp.eq.s32.totalorder %s14, 1
    %p88 = por %p86, %p87
    %p89 = scmp.ne.s32.totalorder %s80, %s81
    %p90 = scmp.eq.s32.totalorder %s14, 0
    %p91 = por %p89, %p90
    %p92 = scmp.ne.s32.totalorder %s80, %s81
    %p93 = scmp.eq.s32.totalorder %s15, 1
    %p94 = por %p92, %p93
    %p96 = scmp.ne.s32.totalorder %s81, %s95
    %p97 = scmp.eq.s32.totalorder %s15, 0
    %p98 = por %p96, %p97
    %s99 = ssub.s32 %s16, %s28
    %s100 = ssub.s32 %s17, %s24
    %s101 = sor.u32 %s99, %s100
    %p102 = scmp.eq.s32.totalorder %s101, 0
    %s104 = sadd.s32 %s103, 1
    %s105 = scalar_select %p102, %s103, %s104
    %p108 = pneg %p102
    %p109 = scmp.eq.s32.totalorder %s9, 1
    %p110 = por %p108, %p109
    %p111 = scmp.ne.s32.totalorder %s103, %s106
    %p112 = scmp.eq.s32.totalorder %s9, 0
    %p113 = por %p111, %p112
    %p114 = scmp.ne.s32.totalorder %s103, %s106
    %p115 = scmp.eq.s32.totalorder %s14, 1
    %p116 = por %p114, %p115
    %p117 = scmp.ne.s32.totalorder %s106, %s107
    %p118 = scmp.eq.s32.totalorder %s14, 0
    %p119 = por %p117, %p118
    %p120 = scmp.ne.s32.totalorder %s106, %s107
    %p121 = scmp.eq.s32.totalorder %s15, 1
    %p122 = por %p120, %p121
    %p124 = scmp.ne.s32.totalorder %s107, %s123
    %p125 = scmp.eq.s32.totalorder %s15, 0
    %p126 = por %p124, %p125
    %p127 = scmp.le.s32.totalorder 1, %s9
    %p128 = scmp.lt.s32.totalorder %s9, 3
    %p129 = pnand %p127, %p128
    %p130 = pneg %p129
    // Predicated region
    $region9: #{_forward.3} parent=5 // pred_check
      _
    $region10: #{_forward.3} parent=5 // pred_check_branch
      %132 = sbr.rel (%p129) target = $region12
    $region11: #{_forward.3} parent=5 // pred_region
      %s133 = ssub.s32 %s9, 1
      // Predicated region
      $region13: #{_forward.3} parent=11 // pred_check
        %p134 = pneg %p70
      $region14: #{_forward.3} parent=11 // pred_check_branch
        %136 = sbr.rel (%p134) target = $region16
      $region15: #{_forward.3} parent=11 // pred_region
        _
      $region16: #{_forward.3} parent=11 // pred_fallthru
        _
      // Predicated region
      $region17: #{_forward.3} parent=11 // pred_check
        %p137 = pneg %p91
      $region18: #{_forward.3} parent=11 // pred_check_branch
        %139 = sbr.rel (%p137) target = $region20
      $region19: #{_forward.3} parent=11 // pred_region
        _
      $region20: #{_forward.3} parent=11 // pred_fallthru
        _
    $region12: #{_forward.3} parent=5 // pred_fallthru
      _
    %p140 = scmp.lt.s32.totalorder %s9, 2
    // Predicated region
    $region21: #{_forward.3} parent=5 // pred_check
      %p141 = pneg %p140
    $region22: #{_forward.3} parent=5 // pred_check_branch
      %143 = sbr.rel (%p141) target = $region24
    $region23: #{_forward.3} parent=5 // pred_region
      // Predicated region
      $region25: #{_forward.3} parent=23 // pred_check
        %p144 = pneg %p43
      $region26: #{_forward.3} parent=23 // pred_check_branch
        %146 = sbr.rel (%p144) target = $region28
      $region27: #{_forward.3} parent=23 // pred_region
        %s147 = smul.u32 32, %s17
        %p148 = scmp.lt.s32.totalorder %s16, 1
        %s149 = scalar_select %p148, %s16, 1
        %p150 = scmp.lt.s32.totalorder %s147, 31
        %s151 = scalar_select %p150, %s147, 31
        %s152 = smul.addr %s149, 32
        %s153 = sadd.s32 %s151, %s152
        %s154 = smul.addr %s153, 4
        %s155 = scalar_lea.vmem %s0, %s154
        %s156 = smul.u32 32, %s17
      $region28: #{_forward.3} parent=23 // pred_fallthru
        _
    $region24: #{_forward.3} parent=5 // pred_fallthru
      _
    %p157 = scmp.le.s32.totalorder 1, %s9
    %p158 = scmp.lt.s32.totalorder %s9, 3
    %p159 = pnand %p157, %p158
    %p160 = pneg %p159
    // Predicated region
    $region29: #{_forward.3} parent=5 // pred_check
      _
    $region30: #{_forward.3} parent=5 // pred_check_branch
      %162 = sbr.rel (%p159) target = $region32
    $region31: #{_forward.3} parent=5 // pred_region
      %s163 = ssub.s32 %s9, 1
      %s164 = smul.u32 32, %s19
      %p165 = scmp.lt.s32.totalorder %s18, 1
      %s166 = scalar_select %p165, %s18, 1
      %p167 = scmp.lt.s32.totalorder %s164, 31
      %s168 = scalar_select %p167, %s164, 31
      %s169 = smul.addr %s166, 32
      %s170 = sadd.s32 %s168, %s169
      %s171 = smul.addr %s170, 4
      %s172 = scalar_lea.vmem %s0, %s171
      %p173 = pneg %p49
      %p174 = pneg %p46
      %p175 = pneg %p70
      %p176 = pneg %p67
      %p177 = pneg %p91
      %p178 = pneg %p88
      %p179 = pneg %p119
      %p180 = pneg %p116
      %s181 = smul.u32 32, %s19
      %p182 = scmp.lt.s32.totalorder %s18, 1
      %s183 = scalar_select %p182, %s18, 1
      %p184 = scmp.lt.s32.totalorder %s181, 31
      %s185 = scalar_select %p184, %s181, 31
      %s186 = smul.addr %s183, 32
      %s187 = sadd.s32 %s185, %s186
      %s188 = smul.addr %s187, 8
      %s189 = scalar_lea.vmem %s3, %s188
      %s190 = smul.u32 32, %s19
      %p191 = scmp.lt.s32.totalorder %s18, 1
      %s192 = scalar_select %p191, %s18, 1
      %p193 = scmp.lt.s32.totalorder %s190, 31
      %s194 = scalar_select %p193, %s190, 31
      %s195 = smul.addr %s192, 32
      %s196 = sadd.s32 %s194, %s195
      %s197 = smul.addr %s196, 4
      %s198 = scalar_lea.vmem %s0, %s197
      %s199 = smul.u32 32, %s19
      %s200 = smul.u32 32, %s19
      %p201 = scmp.lt.s32.totalorder %s18, 1
      %s202 = scalar_select %p201, %s18, 1
      %p203 = scmp.lt.s32.totalorder %s200, 31
      %s204 = scalar_select %p203, %s200, 31
      %s205 = smul.addr %s202, 32
      %s206 = sadd.s32 %s204, %s205
      %s207 = smul.addr %s206, 8
      %s208 = scalar_lea.vmem %s3, %s207
      %s209 = smul.u32 32, %s19
      %v210 = vld [vmem:[%s198] sm:$0xf]
      %v211 = vld [vmem:[%s198 + $0x4] sm:$0xf]
      %v212 = vld [vmem:[%s198 + $0x8] sm:$0xf]
      %v213 = vld [vmem:[%s198 + $0xc] sm:$0xf]
      %v214 = vld [vmem:[%s198 + $0x10] sm:$0xf]
      %v215 = vld [vmem:[%s198 + $0x14] sm:$0xf]
      %v216 = vld [vmem:[%s198 + $0x18] sm:$0xf]
      %v217 = vld [vmem:[%s198 + $0x1c] sm:$0xf]
      %v218 = vld [vmem:[%s198 + $0x20] sm:$0xf]
      %v219 = vld [vmem:[%s198 + $0x24] sm:$0xf]
      %v220 = vld [vmem:[%s198 + $0x28] sm:$0xf]
      %v221 = vld [vmem:[%s198 + $0x2c] sm:$0xf]
      %v222 = vld [vmem:[%s198 + $0x30] sm:$0xf]
      %v223 = vld [vmem:[%s198 + $0x34] sm:$0xf]
      %v224 = vld [vmem:[%s198 + $0x38] sm:$0xf]
      %v225 = vld [vmem:[%s198 + $0x3c] sm:$0xf]
      %v226 = vld [vmem:[%s198 + $0x40] sm:$0xf]
      %v227 = vld [vmem:[%s198 + $0x44] sm:$0xf]
      %v228 = vld [vmem:[%s198 + $0x48] sm:$0xf]
      %v229 = vld [vmem:[%s198 + $0x4c] sm:$0xf]
      %v230 = vld [vmem:[%s198 + $0x50] sm:$0xf]
      %v231 = vld [vmem:[%s198 + $0x54] sm:$0xf]
      %v232 = vld [vmem:[%s198 + $0x58] sm:$0xf]
      %v233 = vld [vmem:[%s198 + $0x5c] sm:$0xf]
      %v234 = vld [vmem:[%s198 + $0x60] sm:$0xf]
      %v235 = vld [vmem:[%s198 + $0x64] sm:$0xf]
      %v236 = vld [vmem:[%s198 + $0x68] sm:$0xf]
      %v237 = vld [vmem:[%s198 + $0x6c] sm:$0xf]
      %v238 = vld [vmem:[%s198 + $0x70] sm:$0xf]
      %v239 = vld [vmem:[%s198 + $0x74] sm:$0xf]
      %v240 = vld [vmem:[%s198 + $0x78] sm:$0xf]
      %v241 = vld [vmem:[%s198 + $0x7c] sm:$0xf]
      %v242 = vunpack.c.l.bf16 %v210
      %v243 = vunpack.c.l.bf16 %v211
      %v244 = vunpack.c.l.bf16 %v212
      %v245 = vunpack.c.l.bf16 %v213
      %v246 = vunpack.c.l.bf16 %v214
      %v247 = vunpack.c.l.bf16 %v215
      %v248 = vunpack.c.l.bf16 %v216
      %v249 = vunpack.c.l.bf16 %v217
      %v250 = vunpack.c.l.bf16 %v218
      %v251 = vunpack.c.l.bf16 %v219
      %v252 = vunpack.c.l.bf16 %v220
      %v253 = vunpack.c.l.bf16 %v221
      %v254 = vunpack.c.l.bf16 %v222
      %v255 = vunpack.c.l.bf16 %v223
      %v256 = vunpack.c.l.bf16 %v224
      %v257 = vunpack.c.l.bf16 %v225
      %v258 = vunpack.c.l.bf16 %v226
      %v259 = vunpack.c.l.bf16 %v227
      %v260 = vunpack.c.l.bf16 %v228
      %v261 = vunpack.c.l.bf16 %v229
      %v262 = vunpack.c.l.bf16 %v230
      %v263 = vunpack.c.l.bf16 %v231
      %v264 = vunpack.c.l.bf16 %v232
      %v265 = vunpack.c.l.bf16 %v233
      %v266 = vunpack.c.l.bf16 %v234
      %v267 = vunpack.c.l.bf16 %v235
      %v268 = vunpack.c.l.bf16 %v236
      %v269 = vunpack.c.l.bf16 %v237
      %v270 = vunpack.c.l.bf16 %v238
      %v271 = vunpack.c.l.bf16 %v239
      %v272 = vunpack.c.l.bf16 %v240
      %v273 = vunpack.c.l.bf16 %v241
      %v274 = vld [vmem:[%s1] sm:$0x1]
      %v276 = vlaneseq
      %v277 = vshrl.u32 %v276, 7
      %v278 = vsub.s32 0, %v277
      %v279 = vrot.slane %v274, %v278
      %v281 = vmul.f32 %v242, %v279
      %v282 = vmul.f32 %v243, %v279
      %v283 = vmul.f32 %v244, %v279
      %v284 = vmul.f32 %v245, %v279
      %v285 = vmul.f32 %v246, %v279
      %v286 = vmul.f32 %v247, %v279
      %v287 = vmul.f32 %v248, %v279
      %v288 = vmul.f32 %v249, %v279
      %v289 = vmul.f32 %v250, %v279
      %v290 = vmul.f32 %v251, %v279
      %v291 = vmul.f32 %v252, %v279
      %v292 = vmul.f32 %v253, %v279
      %v293 = vmul.f32 %v254, %v279
      %v294 = vmul.f32 %v255, %v279
      %v295 = vmul.f32 %v256, %v279
      %v296 = vmul.f32 %v257, %v279
      %v297 = vmul.f32 %v258, %v279
      %v298 = vmul.f32 %v259, %v279
      %v299 = vmul.f32 %v260, %v279
      %v300 = vmul.f32 %v261, %v279
      %v301 = vmul.f32 %v262, %v279
      %v302 = vmul.f32 %v263, %v279
      %v303 = vmul.f32 %v264, %v279
      %v304 = vmul.f32 %v265, %v279
      %v305 = vmul.f32 %v266, %v279
      %v306 = vmul.f32 %v267, %v279
      %v307 = vmul.f32 %v268, %v279
      %v308 = vmul.f32 %v269, %v279
      %v309 = vmul.f32 %v270, %v279
      %v310 = vmul.f32 %v271, %v279
      %v311 = vmul.f32 %v272, %v279
      %v312 = vmul.f32 %v273, %v279
      %v313 = vld [vmem:[%s2] sm:$0x1]
      %v315 = vlaneseq
      %v316 = vshrl.u32 %v315, 7
      %v317 = vsub.s32 0, %v316
      %v318 = vrot.slane %v313, %v317
      %v320 = vadd.f32 %v281, %v318
      %v321 = vadd.f32 %v282, %v318
      %v322 = vadd.f32 %v283, %v318
      %v323 = vadd.f32 %v284, %v318
      %v324 = vadd.f32 %v285, %v318
      %v325 = vadd.f32 %v286, %v318
      %v326 = vadd.f32 %v287, %v318
      %v327 = vadd.f32 %v288, %v318
      %v328 = vadd.f32 %v289, %v318
      %v329 = vadd.f32 %v290, %v318
      %v330 = vadd.f32 %v291, %v318
      %v331 = vadd.f32 %v292, %v318
      %v332 = vadd.f32 %v293, %v318
      %v333 = vadd.f32 %v294, %v318
      %v334 = vadd.f32 %v295, %v318
      %v335 = vadd.f32 %v296, %v318
      %v336 = vadd.f32 %v297, %v318
      %v337 = vadd.f32 %v298, %v318
      %v338 = vadd.f32 %v299, %v318
      %v339 = vadd.f32 %v300, %v318
      %v340 = vadd.f32 %v301, %v318
      %v341 = vadd.f32 %v302, %v318
      %v342 = vadd.f32 %v303, %v318
      %v343 = vadd.f32 %v304, %v318
      %v344 = vadd.f32 %v305, %v318
      %v345 = vadd.f32 %v306, %v318
      %v346 = vadd.f32 %v307, %v318
      %v347 = vadd.f32 %v308, %v318
      %v348 = vadd.f32 %v309, %v318
      %v349 = vadd.f32 %v310, %v318
      %v350 = vadd.f32 %v311, %v318
      %v351 = vadd.f32 %v312, %v318
      %v352 = vmax.f32 %v320, 0.0
      %v353 = vmax.f32 %v321, 0.0
      %v354 = vmax.f32 %v322, 0.0
      %v355 = vmax.f32 %v323, 0.0
      %v356 = vmax.f32 %v324, 0.0
      %v357 = vmax.f32 %v325, 0.0
      %v358 = vmax.f32 %v326, 0.0
      %v359 = vmax.f32 %v327, 0.0
      %v360 = vmax.f32 %v328, 0.0
      %v361 = vmax.f32 %v329, 0.0
      %v362 = vmax.f32 %v330, 0.0
      %v363 = vmax.f32 %v331, 0.0
      %v364 = vmax.f32 %v332, 0.0
      %v365 = vmax.f32 %v333, 0.0
      %v366 = vmax.f32 %v334, 0.0
      %v367 = vmax.f32 %v335, 0.0
      %v368 = vmax.f32 %v336, 0.0
      %v369 = vmax.f32 %v337, 0.0
      %v370 = vmax.f32 %v338, 0.0
      %v371 = vmax.f32 %v339, 0.0
      %v372 = vmax.f32 %v340, 0.0
      %v373 = vmax.f32 %v341, 0.0
      %v374 = vmax.f32 %v342, 0.0
      %v375 = vmax.f32 %v343, 0.0
      %v376 = vmax.f32 %v344, 0.0
      %v377 = vmax.f32 %v345, 0.0
      %v378 = vmax.f32 %v346, 0.0
      %v379 = vmax.f32 %v347, 0.0
      %v380 = vmax.f32 %v348, 0.0
      %v381 = vmax.f32 %v349, 0.0
      %v382 = vmax.f32 %v350, 0.0
      %v383 = vmax.f32 %v351, 0.0
      %vm384 = vcmask 64512
      %385 = vst.msk [vmem:[%s208] sm:$0xff] %vm384, %v352
      %386 = vst.msk [vmem:[%s208 + $0x8] sm:$0xff] %vm384, %v353
      %387 = vst.msk [vmem:[%s208 + $0x10] sm:$0xff] %vm384, %v354
      %388 = vst.msk [vmem:[%s208 + $0x18] sm:$0xff] %vm384, %v355
      %389 = vst.msk [vmem:[%s208 + $0x20] sm:$0xff] %vm384, %v356
      %390 = vst.msk [vmem:[%s208 + $0x28] sm:$0xff] %vm384, %v357
      %391 = vst.msk [vmem:[%s208 + $0x30] sm:$0xff] %vm384, %v358
      %392 = vst.msk [vmem:[%s208 + $0x38] sm:$0xff] %vm384, %v359
      %393 = vst.msk [vmem:[%s208 + $0x40] sm:$0xff] %vm384, %v360
      %394 = vst.msk [vmem:[%s208 + $0x48] sm:$0xff] %vm384, %v361
      %395 = vst.msk [vmem:[%s208 + $0x50] sm:$0xff] %vm384, %v362
      %396 = vst.msk [vmem:[%s208 + $0x58] sm:$0xff] %vm384, %v363
      %397 = vst.msk [vmem:[%s208 + $0x60] sm:$0xff] %vm384, %v364
      %398 = vst.msk [vmem:[%s208 + $0x68] sm:$0xff] %vm384, %v365
      %399 = vst.msk [vmem:[%s208 + $0x70] sm:$0xff] %vm384, %v366
      %400 = vst.msk [vmem:[%s208 + $0x78] sm:$0xff] %vm384, %v367
      %401 = vst.msk [vmem:[%s208 + $0x80] sm:$0xff] %vm384, %v368
      %402 = vst.msk [vmem:[%s208 + $0x88] sm:$0xff] %vm384, %v369
      %403 = vst.msk [vmem:[%s208 + $0x90] sm:$0xff] %vm384, %v370
      %404 = vst.msk [vmem:[%s208 + $0x98] sm:$0xff] %vm384, %v371
      %405 = vst.msk [vmem:[%s208 + $0xa0] sm:$0xff] %vm384, %v372
      %406 = vst.msk [vmem:[%s208 + $0xa8] sm:$0xff] %vm384, %v373
      %407 = vst.msk [vmem:[%s208 + $0xb0] sm:$0xff] %vm384, %v374
      %408 = vst.msk [vmem:[%s208 + $0xb8] sm:$0xff] %vm384, %v375
      %409 = vst.msk [vmem:[%s208 + $0xc0] sm:$0xff] %vm384, %v376
      %410 = vst.msk [vmem:[%s208 + $0xc8] sm:$0xff] %vm384, %v377
      %411 = vst.msk [vmem:[%s208 + $0xd0] sm:$0xff] %vm384, %v378
      %412 = vst.msk [vmem:[%s208 + $0xd8] sm:$0xff] %vm384, %v379
      %413 = vst.msk [vmem:[%s208 + $0xe0] sm:$0xff] %vm384, %v380
      %414 = vst.msk [vmem:[%s208 + $0xe8] sm:$0xff] %vm384, %v381
      %415 = vst.msk [vmem:[%s208 + $0xf0] sm:$0xff] %vm384, %v382
      %416 = vst.msk [vmem:[%s208 + $0xf8] sm:$0xff] %vm384, %v383
      %s417 = smul.u32 32, %s19
      %p418 = scmp.lt.s32.totalorder %s18, 1
      %s419 = scalar_select %p418, %s18, 1
      %p420 = scmp.lt.s32.totalorder %s417, 31
      %s421 = scalar_select %p420, %s417, 31
      %s422 = smul.addr %s419, 32
      %s423 = sadd.s32 %s421, %s422
      %s424 = smul.addr %s423, 8
      %s425 = scalar_lea.vmem %s3, %s424
      // Predicated region
      $region33: #{_forward.3} parent=31 // pred_check
        %p426 = pneg %p116
      $region34: #{_forward.3} parent=31 // pred_check_branch
        %428 = sbr.rel (%p426) target = $region36
      $region35: #{_forward.3} parent=31 // pred_region
        %s429 = smul.u32 32, %s19
      $region36: #{_forward.3} parent=31 // pred_fallthru
        _
    $region32: #{_forward.3} parent=5 // pred_fallthru
      _
    %p430 = scmp.le.s32.totalorder 2, %s9
    // Predicated region
    $region37: #{_forward.3} parent=5 // pred_check
      %p431 = pneg %p430
    $region38: #{_forward.3} parent=5 // pred_check_branch
      %433 = sbr.rel (%p431) target = $region40
    $region39: #{_forward.3} parent=5 // pred_region
      %s434 = ssub.s32 %s9, 2
      // Predicated region
      $region41: #{_forward.3} parent=39 // pred_check
        %p435 = pneg %p122
      $region42: #{_forward.3} parent=39 // pred_check_branch
        %437 = sbr.rel (%p435) target = $region44
      $region43: #{_forward.3} parent=39 // pred_region
        %s438 = smul.u32 32, %s21
        %p439 = scmp.lt.s32.totalorder %s20, 1
        %s440 = scalar_select %p439, %s20, 1
        %p441 = scmp.lt.s32.totalorder %s438, 31
        %s442 = scalar_select %p441, %s438, 31
        %s443 = smul.addr %s440, 32
        %s444 = sadd.s32 %s442, %s443
        %s445 = smul.addr %s444, 8
        %s446 = scalar_lea.vmem %s3, %s445
      $region44: #{_forward.3} parent=39 // pred_fallthru
        _
    $region40: #{_forward.3} parent=5 // pred_fallthru
      _
  $region6: #{_forward.3} parent=0 // loop_footer
    %s13 = sadd.s32 1, %s9
  $region7: #{_forward.3} parent=0 // loop_footer_branch
    %8 = sbr.rel target = $region3
  $region8: #{_forward.3} parent=0 // loop_exit
    _

// kernel: _forward.2
$region0: #{_forward.2}
  #allocation0 [shape = 'u32[]', space=smem, size = 0x4, offset = 0x4, fixed_abs, tag = 'smem constant byte address 0x4 - core index']
  #allocation1 [shape = 'u32[144,128]{1,0:T(1,128)}', space=vmem, size = 0x12000, scoped, tag = 'internal scratch']
  %s0 = inlined_call_operand.vmem [shape: bf16[2,18,18,16], index: 0, kind: input, shape index: {}]
  %s1 = inlined_call_operand.vmem [shape: bf16[9,16,128], index: 1, kind: input, shape index: {}]
  %s2 = inlined_call_operand.vmem [shape: bf16[2,256,8], index: 2, kind: output, shape index: {0}]
  %s3 = inlined_call_operand.vmem [shape: f32[2,2,8], index: 3, kind: output, shape index: {1}]
  %4 = xla_tuple %s2, %s3
  %s5 = sld [smem:[#allocation0]]
  $region49: #{_forward.2} parent=0
    _
  %s7 = ssub.s32 1, %s5
  %s8 = scalar_select 0, %s7, %s5
  loop: start=0, step=1, limit=4
  $region2: #{_forward.2} parent=0 // loop_pre_header
    _
  $region3: #{_forward.2} parent=0 // loop_header
    %s10 = sphi 0, %s14
    %p11 = scmp.ge.s32.totalorder %s10, 4
    %s17 = sphi 0, %s29
    %s18 = sphi 0, %s25
    %s19 = sphi 0, %s17
    %s20 = sphi 0, %s18
    %s21 = sphi 0, %s19
    %s22 = sphi 0, %s20
    %s32 = sphi 0, %s34
    %s35 = sphi 0, %s32
    %s36 = sphi 0, %s35
    %s52 = sphi 0, %s36
    %s56 = sphi 0, %s56
    %s58 = sphi 0, %s56
    %s59 = sphi 0, %s58
    %s73 = sphi 0, %s59
    %s81 = sphi 0, %s83
    %s84 = sphi 0, %s81
    %s85 = sphi 0, %s84
    %s101 = sphi 0, %s85
    %s109 = sphi 0, %s111
    %s112 = sphi 0, %s109
    %s113 = sphi 0, %s112
    %s129 = sphi 0, %s113
  $region4: #{_forward.2} parent=0 // loop_header_branch
    %13 = sbr.rel (%p11) target = $region8
  $region5: #{_forward.2} parent=0 // loop_body
    %s15 = ssub.s32 %s10, 1
    %s16 = ssub.s32 %s10, 2
    %s23 = sadd.s32 1, %s18
    %p24 = scmp.ge.s32.totalorder %s23, 1
    %s25 = scalar_select %p24, 0, %s23
    %s26 = sadd.s32 1, %s17
    %s27 = scalar_select %p24, %s26, %s17
    %p28 = scmp.ge.s32.totalorder %s27, 2
    %s29 = scalar_select %p28, 0, %s27
    %s30 = ssub.s32 %s17, %s29
    %p31 = scmp.eq.s32.totalorder %s30, 0
    %s33 = sadd.s32 %s32, 1
    %s34 = scalar_select %p31, %s32, %s33
    %p37 = pneg %p31
    %p38 = scmp.eq.s32.totalorder %s10, 1
    %p39 = por %p37, %p38
    %p40 = scmp.ne.s32.totalorder %s32, %s35
    %p41 = scmp.eq.s32.totalorder %s10, 0
    %p42 = por %p40, %p41
    %p43 = scmp.ne.s32.totalorder %s32, %s35
    %p44 = scmp.eq.s32.totalorder %s15, 1
    %p45 = por %p43, %p44
    %p46 = scmp.ne.s32.totalorder %s35, %s36
    %p47 = scmp.eq.s32.totalorder %s15, 0
    %p48 = por %p46, %p47
    %p49 = scmp.ne.s32.totalorder %s35, %s36
    %p50 = scmp.eq.s32.totalorder %s16, 1
    %p51 = por %p49, %p50
    %p53 = scmp.ne.s32.totalorder %s36, %s52
    %p54 = scmp.eq.s32.totalorder %s16, 0
    %p55 = por %p53, %p54
    %s57 = sadd.s32 %s56, 1
    %p60 = scmp.eq.s32.totalorder %s10, 1
    %p61 = scmp.ne.s32.totalorder %s56, %s58
    %p62 = scmp.eq.s32.totalorder %s10, 0
    %p63 = por %p61, %p62
    %p64 = scmp.ne.s32.totalorder %s56, %s58
    %p65 = scmp.eq.s32.totalorder %s15, 1
    %p66 = por %p64, %p65
    %p67 = scmp.ne.s32.totalorder %s58, %s59
    %p68 = scmp.eq.s32.totalorder %s15, 0
    %p69 = por %p67, %p68
    %p70 = scmp.ne.s32.totalorder %s58, %s59
    %p71 = scmp.eq.s32.totalorder %s16, 1
    %p72 = por %p70, %p71
    %p74 = scmp.ne.s32.totalorder %s59, %s73
    %p75 = scmp.eq.s32.totalorder %s16, 0
    %p76 = por %p74, %p75
    %s77 = ssub.s32 %s17, %s29
    %s78 = ssub.s32 %s18, %s25
    %s79 = sor.u32 %s77, %s78
    %p80 = scmp.eq.s32.totalorder %s79, 0
    %s82 = sadd.s32 %s81, 1
    %s83 = scalar_select %p80, %s81, %s82
    %p86 = pneg %p80
    %p87 = scmp.eq.s32.totalorder %s10, 1
    %p88 = por %p86, %p87
    %p89 = scmp.ne.s32.totalorder %s81, %s84
    %p90 = scmp.eq.s32.totalorder %s10, 0
    %p91 = por %p89, %p90
    %p92 = scmp.ne.s32.totalorder %s81, %s84
    %p93 = scmp.eq.s32.totalorder %s15, 1
    %p94 = por %p92, %p93
    %p95 = scmp.ne.s32.totalorder %s84, %s85
    %p96 = scmp.eq.s32.totalorder %s15, 0
    %p97 = por %p95, %p96
    %p98 = scmp.ne.s32.totalorder %s84, %s85
    %p99 = scmp.eq.s32.totalorder %s16, 1
    %p100 = por %p98, %p99
    %p102 = scmp.ne.s32.totalorder %s85, %s101
    %p103 = scmp.eq.s32.totalorder %s16, 0
    %p104 = por %p102, %p103
    %s105 = sadd.s32 %s17, %s18
    %s106 = sadd.s32 %s29, %s25
    %s107 = ssub.s32 %s105, %s106
    %p108 = scmp.eq.s32.totalorder %s107, 0
    %s110 = sadd.s32 %s109, 1
    %s111 = scalar_select %p108, %s109, %s110
    %p114 = pneg %p108
    %p115 = scmp.eq.s32.totalorder %s10, 1
    %p116 = por %p114, %p115
    %p117 = scmp.ne.s32.totalorder %s109, %s112
    %p118 = scmp.eq.s32.totalorder %s10, 0
    %p119 = por %p117, %p118
    %p120 = scmp.ne.s32.totalorder %s109, %s112
    %p121 = scmp.eq.s32.totalorder %s15, 1
    %p122 = por %p120, %p121
    %p123 = scmp.ne.s32.totalorder %s112, %s113
    %p124 = scmp.eq.s32.totalorder %s15, 0
    %p125 = por %p123, %p124
    %p126 = scmp.ne.s32.totalorder %s112, %s113
    %p127 = scmp.eq.s32.totalorder %s16, 1
    %p128 = por %p126, %p127
    %p130 = scmp.ne.s32.totalorder %s113, %s129
    %p131 = scmp.eq.s32.totalorder %s16, 0
    %p132 = por %p130, %p131
    %p133 = scmp.le.s32.totalorder 1, %s10
    %p134 = scmp.lt.s32.totalorder %s10, 3
    %p135 = pnand %p133, %p134
    %p136 = pneg %p135
    // Predicated region
    $region9: #{_forward.2} parent=5 // pred_check
      _
    $region10: #{_forward.2} parent=5 // pred_check_branch
      %138 = sbr.rel (%p135) target = $region12
    $region11: #{_forward.2} parent=5 // pred_region
      %s139 = ssub.s32 %s10, 1
      // Predicated region
      $region13: #{_forward.2} parent=11 // pred_check
        %p140 = pneg %p69
      $region14: #{_forward.2} parent=11 // pred_check_branch
        %142 = sbr.rel (%p140) target = $region16
      $region15: #{_forward.2} parent=11 // pred_region
        _
      $region16: #{_forward.2} parent=11 // pred_fallthru
        _
    $region12: #{_forward.2} parent=5 // pred_fallthru
      _
    %p143 = scmp.lt.s32.totalorder %s10, 2
    // Predicated region
    $region17: #{_forward.2} parent=5 // pred_check
      %p144 = pneg %p143
    $region18: #{_forward.2} parent=5 // pred_check_branch
      %146 = sbr.rel (%p144) target = $region20
    $region19: #{_forward.2} parent=5 // pred_region
      // Predicated region
      $region21: #{_forward.2} parent=19 // pred_check
        %p147 = pneg %p42
      $region22: #{_forward.2} parent=19 // pred_check_branch
        %149 = sbr.rel (%p147) target = $region24
      $region23: #{_forward.2} parent=19 // pred_region
        %p150 = scmp.lt.s32.totalorder %s17, 1
        %s151 = scalar_select %p150, %s17, 1
        %s152 = smul.addr %s151, 54
        %s153 = smul.addr %s152, 4
        %s154 = scalar_lea.vmem %s0, %s153
      $region24: #{_forward.2} parent=19 // pred_fallthru
        _
    $region20: #{_forward.2} parent=5 // pred_fallthru
      _
    %p155 = scmp.le.s32.totalorder 1, %s10
    %p156 = scmp.lt.s32.totalorder %s10, 3
    %p157 = pnand %p155, %p156
    %p158 = pneg %p157
    // Predicated region
    $region25: #{_forward.2} parent=5 // pred_check
      _
    $region26: #{_forward.2} parent=5 // pred_check_branch
      %160 = sbr.rel (%p157) target = $region28
    $region27: #{_forward.2} parent=5 // pred_region
      %s161 = ssub.s32 %s10, 1
      %p162 = scmp.lt.s32.totalorder %s19, 1
      %s163 = scalar_select %p162, %s19, 1
      %s164 = smul.addr %s163, 54
      %s165 = smul.addr %s164, 4
      %s166 = scalar_lea.vmem %s0, %s165
      %p167 = pneg %p48
      %p168 = pneg %p45
      %p169 = pneg %p69
      %p170 = pneg %p66
      %p171 = pneg %p97
      %p172 = pneg %p94
      %s173 = smul.u32 32, %s20
      %p174 = scmp.lt.s32.totalorder %s19, 1
      %s175 = scalar_select %p174, %s19, 1
      %p176 = scmp.lt.s32.totalorder %s173, 31
      %s177 = scalar_select %p176, %s173, 31
      %s178 = smul.addr %s175, 32
      %s179 = sadd.s32 %s177, %s178
      %s180 = smul.addr %s179, 4
      %s181 = scalar_lea.vmem %s2, %s180
      %p182 = pneg %p125
      %p183 = pneg %p122
      %s184 = sadd.s32 %s19, %s20
      %p185 = scmp.lt.s32.totalorder %s184, 1
      %s186 = scalar_select %p185, %s184, 1
      %s187 = smul.addr %s186, 2
      %s188 = scalar_lea.vmem %s3, %s187
      %p189 = scmp.lt.s32.totalorder %s19, 1
      %s190 = scalar_select %p189, %s19, 1
      %s191 = smul.addr %s190, 54
      %s192 = smul.addr %s191, 4
      %s193 = scalar_lea.vmem %s0, %s192
      %s194 = smul.u32 32, %s20
      %p195 = scmp.lt.s32.totalorder %s19, 1
      %s196 = scalar_select %p195, %s19, 1
      %p197 = scmp.lt.s32.totalorder %s194, 31
      %s198 = scalar_select %p197, %s194, 31
      %s199 = smul.addr %s196, 32
      %s200 = sadd.s32 %s198, %s199
      %s201 = smul.addr %s200, 4
      %s202 = scalar_lea.vmem %s2, %s201
      %s203 = smul.u32 32, %s20
      %s204 = sadd.s32 %s19, %s20
      %p205 = scmp.lt.s32.totalorder %s204, 1
      %s206 = scalar_select %p205, %s204, 1
      %s207 = smul.addr %s206, 2
      %s208 = scalar_lea.vmem %s3, %s207
      %s209 = sadd.s32 %s19, %s20
      %s211 = smul.u32 %s20, 16
      %s212 = smul.u32 %s211, 3
      %s213 = smul.addr %s212, 4
      %s214 = scalar_lea.vmem %s193, %s213
      %v215 = vld [vmem:[%s214] sm:$0xf]
      %v216 = vld [vmem:[%s214 + $0x4] sm:$0xf]
      %v217 = vld [vmem:[%s214 + $0x8] sm:$0x1]
      %v218 = vld [vmem:[%s214 + $0xc] sm:$0xf]
      %v219 = vld [vmem:[%s214 + $0x10] sm:$0xf]
      %v220 = vld [vmem:[%s214 + $0x14] sm:$0x1]
      %v221 = vld [vmem:[%s214 + $0x18] sm:$0xf]
      %v222 = vld [vmem:[%s214 + $0x1c] sm:$0xf]
      %v223 = vld [vmem:[%s214 + $0x20] sm:$0x1]
      %v224 = vld [vmem:[%s214 + $0x24] sm:$0xf]
      %v225 = vld [vmem:[%s214 + $0x28] sm:$0xf]
      %v226 = vld [vmem:[%s214 + $0x2c] sm:$0x1]
      %v227 = vld [vmem:[%s214 + $0x30] sm:$0xf]
      %v228 = vld [vmem:[%s214 + $0x34] sm:$0xf]
      %v229 = vld [vmem:[%s214 + $0x38] sm:$0x1]
      %v230 = vld [vmem:[%s214 + $0x3c] sm:$0xf]
      %v231 = vld [vmem:[%s214 + $0x40] sm:$0xf]
      %v232 = vld [vmem:[%s214 + $0x44] sm:$0x1]
      %v233 = vld [vmem:[%s214 + $0x48] sm:$0xf]
      %v234 = vld [vmem:[%s214 + $0x4c] sm:$0xf]
      %v235 = vld [vmem:[%s214 + $0x50] sm:$0x1]
      %v236 = vld [vmem:[%s214 + $0x54] sm:$0xf]
      %v237 = vld [vmem:[%s214 + $0x58] sm:$0xf]
      %v238 = vld [vmem:[%s214 + $0x5c] sm:$0x1]
      %v239 = vld [vmem:[%s214 + $0x60] sm:$0xf]
      %v240 = vld [vmem:[%s214 + $0x64] sm:$0xf]
      %v241 = vld [vmem:[%s214 + $0x68] sm:$0x1]
      %v242 = vld [vmem:[%s214 + $0x6c] sm:$0xf]
      %v243 = vld [vmem:[%s214 + $0x70] sm:$0xf]
      %v244 = vld [vmem:[%s214 + $0x74] sm:$0x1]
      %v245 = vld [vmem:[%s214 + $0x78] sm:$0xf]
      %v246 = vld [vmem:[%s214 + $0x7c] sm:$0xf]
      %v247 = vld [vmem:[%s214 + $0x80] sm:$0x1]
      %v248 = vld [vmem:[%s214 + $0x84] sm:$0xf]
      %v249 = vld [vmem:[%s214 + $0x88] sm:$0xf]
      %v250 = vld [vmem:[%s214 + $0x8c] sm:$0x1]
      %v251 = vld [vmem:[%s214 + $0x90] sm:$0xf]
      %v252 = vld [vmem:[%s214 + $0x94] sm:$0xf]
      %v253 = vld [vmem:[%s214 + $0x98] sm:$0x1]
      %v254 = vld [vmem:[%s214 + $0x9c] sm:$0xf]
      %v255 = vld [vmem:[%s214 + $0xa0] sm:$0xf]
      %v256 = vld [vmem:[%s214 + $0xa4] sm:$0x1]
      %v257 = vld [vmem:[%s214 + $0xa8] sm:$0xf]
      %v258 = vld [vmem:[%s214 + $0xac] sm:$0xf]
      %v259 = vld [vmem:[%s214 + $0xb0] sm:$0x1]
      %v260 = vld [vmem:[%s214 + $0xb4] sm:$0xf]
      %v261 = vld [vmem:[%s214 + $0xb8] sm:$0xf]
      %v262 = vld [vmem:[%s214 + $0xbc] sm:$0x1]
      %v263 = vld [vmem:[%s214 + $0xc0] sm:$0xf]
      %v264 = vld [vmem:[%s214 + $0xc4] sm:$0xf]
      %v265 = vld [vmem:[%s214 + $0xc8] sm:$0x1]
      %v266 = vld [vmem:[%s214 + $0xcc] sm:$0xf]
      %v267 = vld [vmem:[%s214 + $0xd0] sm:$0xf]
      %v268 = vld [vmem:[%s214 + $0xd4] sm:$0x1]
      %v269 = vld [vmem:[%s1] sm:$0xf]
      %v270 = vld [vmem:[%s1 + $0x4] sm:$0xf]
      %vm271 = vsmask.f32 3328
      %vm272 = vsmask.f32 7440
      %vm273 = vmor %vm271, %vm272
      %v275 = vshrl.u32 %v215, 16
      %v277 = vrot.slane %v275, 4
      %v278 = vshll.u32 %v215, 16
      %v280 = vrot.slane %v278, 5
      %v281 = vor.u32 %v277, %v280
      %v282 = vrot.slane %v281, 4
      %v284 = vshll.u32 %v216, 16
      %v286 = vrot.slane %v284, 5
      %v287 = vsel %vm273, %v282, %v286
      %v288 = vshrl.u32 %v216, 16
      %v290 = vrot.slane %v288, 4
      %v291 = vor.u32 %v290, %v286
      %v292 = vrot.slane %v291, 4
      %v294 = vshll.u32 %v217, 16
      %v296 = vrot.slane %v294, 5
      %v297 = vsel %vm273, %v292, %v296
      %v299 = vshrl.u32 %v218, 16
      %v301 = vrot.slane %v299, 4
      %v302 = vshll.u32 %v218, 16
      %v304 = vrot.slane %v302, 5
      %v305 = vor.u32 %v301, %v304
      %v306 = vrot.slane %v305, 4
      %v308 = vshll.u32 %v219, 16
      %v310 = vrot.slane %v308, 5
      %v311 = vsel %vm273, %v306, %v310
      %v312 = vshrl.u32 %v219, 16
      %v314 = vrot.slane %v312, 4
      %v315 = vor.u32 %v314, %v310
      %v316 = vrot.slane %v315, 4
      %v318 = vshll.u32 %v220, 16
      %v320 = vrot.slane %v318, 5
      %v321 = vsel %vm273, %v316, %v320
      %v323 = vshrl.u32 %v221, 16
      %v325 = vrot.slane %v323, 4
      %v326 = vshll.u32 %v221, 16
      %v328 = vrot.slane %v326, 5
      %v329 = vor.u32 %v325, %v328
      %v330 = vrot.slane %v329, 4
      %v332 = vshll.u32 %v222, 16
      %v334 = vrot.slane %v332, 5
      %v335 = vsel %vm273, %v330, %v334
      %v336 = vshrl.u32 %v222, 16
      %v338 = vrot.slane %v336, 4
      %v339 = vor.u32 %v338, %v334
      %v340 = vrot.slane %v339, 4
      %v342 = vshll.u32 %v223, 16
      %v344 = vrot.slane %v342, 5
      %v345 = vsel %vm273, %v340, %v344
      %v347 = vshrl.u32 %v224, 16
      %v349 = vrot.slane %v347, 4
      %v350 = vshll.u32 %v224, 16
      %v352 = vrot.slane %v350, 5
      %v353 = vor.u32 %v349, %v352
      %v354 = vrot.slane %v353, 4
      %v356 = vshll.u32 %v225, 16
      %v358 = vrot.slane %v356, 5
      %v359 = vsel %vm273, %v354, %v358
      %v360 = vshrl.u32 %v225, 16
      %v362 = vrot.slane %v360, 4
      %v363 = vor.u32 %v362, %v358
      %v364 = vrot.slane %v363, 4
      %v366 = vshll.u32 %v226, 16
      %v368 = vrot.slane %v366, 5
      %v369 = vsel %vm273, %v364, %v368
      %v371 = vshrl.u32 %v227, 16
      %v373 = vrot.slane %v371, 4
      %v374 = vshll.u32 %v227, 16
      %v376 = vrot.slane %v374, 5
      %v377 = vor.u32 %v373, %v376
      %v378 = vrot.slane %v377, 4
      %v380 = vshll.u32 %v228, 16
      %v382 = vrot.slane %v380, 5
      %v383 = vsel %vm273, %v378, %v382
      %v384 = vshrl.u32 %v228, 16
      %v386 = vrot.slane %v384, 4
      %v387 = vor.u32 %v386, %v382
      %v388 = vrot.slane %v387, 4
      %v390 = vshll.u32 %v229, 16
      %v392 = vrot.slane %v390, 5
      %v393 = vsel %vm273, %v388, %v392
      %v395 = vshrl.u32 %v230, 16
      %v397 = vrot.slane %v395, 4
      %v398 = vshll.u32 %v230, 16
      %v400 = vrot.slane %v398, 5
      %v401 = vor.u32 %v397, %v400
      %v402 = vrot.slane %v401, 4
      %v404 = vshll.u32 %v231, 16
      %v406 = vrot.slane %v404, 5
      %v407 = vsel %vm273, %v402, %v406
      %v408 = vshrl.u32 %v231, 16
      %v410 = vrot.slane %v408, 4
      %v411 = vor.u32 %v410, %v406
      %v412 = vrot.slane %v411, 4
      %v414 = vshll.u32 %v232, 16
      %v416 = vrot.slane %v414, 5
      %v417 = vsel %vm273, %v412, %v416
      %v419 = vshrl.u32 %v233, 16
      %v421 = vrot.slane %v419, 4
      %v422 = vshll.u32 %v233, 16
      %v424 = vrot.slane %v422, 5
      %v425 = vor.u32 %v421, %v424
      %v426 = vrot.slane %v425, 4
      %v428 = vshll.u32 %v234, 16
      %v430 = vrot.slane %v428, 5
      %v431 = vsel %vm273, %v426, %v430
      %v432 = vshrl.u32 %v234, 16
      %v434 = vrot.slane %v432, 4
      %v435 = vor.u32 %v434, %v430
      %v436 = vrot.slane %v435, 4
      %v438 = vshll.u32 %v235, 16
      %v440 = vrot.slane %v438, 5
      %v441 = vsel %vm273, %v436, %v440
      %v443 = vshrl.u32 %v236, 16
      %v445 = vrot.slane %v443, 4
      %v446 = vshll.u32 %v236, 16
      %v448 = vrot.slane %v446, 5
      %v449 = vor.u32 %v445, %v448
      %v450 = vrot.slane %v449, 4
      %v452 = vshll.u32 %v237, 16
      %v454 = vrot.slane %v452, 5
      %v455 = vsel %vm273, %v450, %v454
      %v456 = vshrl.u32 %v237, 16
      %v458 = vrot.slane %v456, 4
      %v459 = vor.u32 %v458, %v454
      %v460 = vrot.slane %v459, 4
      %v462 = vshll.u32 %v238, 16
      %v464 = vrot.slane %v462, 5
      %v465 = vsel %vm273, %v460, %v464
      %v467 = vshrl.u32 %v239, 16
      %v469 = vrot.slane %v467, 4
      %v470 = vshll.u32 %v239, 16
      %v472 = vrot.slane %v470, 5
      %v473 = vor.u32 %v469, %v472
      %v474 = vrot.slane %v473, 4
      %v476 = vshll.u32 %v240, 16
      %v478 = vrot.slane %v476, 5
      %v479 = vsel %vm273, %v474, %v478
      %v480 = vshrl.u32 %v240, 16
      %v482 = vrot.slane %v480, 4
      %v483 = vor.u32 %v482, %v478
      %v484 = vrot.slane %v483, 4
      %v486 = vshll.u32 %v241, 16
      %v488 = vrot.slane %v486, 5
      %v489 = vsel %vm273, %v484, %v488
      %v491 = vshrl.u32 %v242, 16
      %v493 = vrot.slane %v491, 4
      %v494 = vshll.u32 %v242, 16
      %v496 = vrot.slane %v494, 5
      %v497 = vor.u32 %v493, %v496
      %v498 = vrot.slane %v497, 4
      %v500 = vshll.u32 %v243, 16
      %v502 = vrot.slane %v500, 5
      %v503 = vsel %vm273, %v498, %v502
      %v504 = vshrl.u32 %v243, 16
      %v506 = vrot.slane %v504, 4
      %v507 = vor.u32 %v506, %v502
      %v508 = vrot.slane %v507, 4
      %v510 = vshll.u32 %v244, 16
      %v512 = vrot.slane %v510, 5
      %v513 = vsel %vm273, %v508, %v512
      %v515 = vshrl.u32 %v245, 16
      %v517 = vrot.slane %v515, 4
      %v518 = vshll.u32 %v245, 16
      %v520 = vrot.slane %v518, 5
      %v521 = vor.u32 %v517, %v520
      %v522 = vrot.slane %v521, 4
      %v524 = vshll.u32 %v246, 16
      %v526 = vrot.slane %v524, 5
      %v527 = vsel %vm273, %v522, %v526
      %v528 = vshrl.u32 %v246, 16
      %v530 = vrot.slane %v528, 4
      %v531 = vor.u32 %v530, %v526
      %v532 = vrot.slane %v531, 4
      %v534 = vshll.u32 %v247, 16
      %v536 = vrot.slane %v534, 5
      %v537 = vsel %vm273, %v532, %v536
      %v539 = vshrl.u32 %v248, 16
      %v541 = vrot.slane %v539, 4
      %v542 = vshll.u32 %v248, 16
      %v544 = vrot.slane %v542, 5
      %v545 = vor.u32 %v541, %v544
      %v546 = vrot.slane %v545, 4
      %v548 = vshll.u32 %v249, 16
      %v550 = vrot.slane %v548, 5
      %v551 = vsel %vm273, %v546, %v550
      %v552 = vshrl.u32 %v249, 16
      %v554 = vrot.slane %v552, 4
      %v555 = vor.u32 %v554, %v550
      %v556 = vrot.slane %v555, 4
      %v558 = vshll.u32 %v250, 16
      %v560 = vrot.slane %v558, 5
      %v561 = vsel %vm273, %v556, %v560
      %v563 = vshrl.u32 %v251, 16
      %v565 = vrot.slane %v563, 4
      %v566 = vshll.u32 %v251, 16
      %v568 = vrot.slane %v566, 5
      %v569 = vor.u32 %v565, %v568
      %v570 = vrot.slane %v569, 4
      %v572 = vshll.u32 %v252, 16
      %v574 = vrot.slane %v572, 5
      %v575 = vsel %vm273, %v570, %v574
      %v576 = vshrl.u32 %v252, 16
      %v578 = vrot.slane %v576, 4
      %v579 = vor.u32 %v578, %v574
      %v580 = vrot.slane %v579, 4
      %v582 = vshll.u32 %v253, 16
      %v584 = vrot.slane %v582, 5
      %v585 = vsel %vm273, %v580, %v584
      %v587 = vshrl.u32 %v254, 16
      %v589 = vrot.slane %v587, 4
      %v590 = vshll.u32 %v254, 16
      %v592 = vrot.slane %v590, 5
      %v593 = vor.u32 %v589, %v592
      %v594 = vrot.slane %v593, 4
      %v596 = vshll.u32 %v255, 16
      %v598 = vrot.slane %v596, 5
      %v599 = vsel %vm273, %v594, %v598
      %v600 = vshrl.u32 %v255, 16
      %v602 = vrot.slane %v600, 4
      %v603 = vor.u32 %v602, %v598
      %v604 = vrot.slane %v603, 4
      %v606 = vshll.u32 %v256, 16
      %v608 = vrot.slane %v606, 5
      %v609 = vsel %vm273, %v604, %v608
      %v611 = vshrl.u32 %v257, 16
      %v613 = vrot.slane %v611, 4
      %v614 = vshll.u32 %v257, 16
      %v616 = vrot.slane %v614, 5
      %v617 = vor.u32 %v613, %v616
      %v618 = vrot.slane %v617, 4
      %v620 = vshll.u32 %v258, 16
      %v622 = vrot.slane %v620, 5
      %v623 = vsel %vm273, %v618, %v622
      %v624 = vshrl.u32 %v258, 16
      %v626 = vrot.slane %v624, 4
      %v627 = vor.u32 %v626, %v622
      %v628 = vrot.slane %v627, 4
      %v630 = vshll.u32 %v259, 16
      %v632 = vrot.slane %v630, 5
      %v633 = vsel %vm273, %v628, %v632
      %v635 = vshrl.u32 %v260, 16
      %v637 = vrot.slane %v635, 4
      %v638 = vshll.u32 %v260, 16
      %v640 = vrot.slane %v638, 5
      %v641 = vor.u32 %v637, %v640
      %v642 = vrot.slane %v641, 4
      %v644 = vshll.u32 %v261, 16
      %v646 = vrot.slane %v644, 5
      %v647 = vsel %vm273, %v642, %v646
      %v648 = vshrl.u32 %v261, 16
      %v650 = vrot.slane %v648, 4
      %v651 = vor.u32 %v650, %v646
      %v652 = vrot.slane %v651, 4
      %v654 = vshll.u32 %v262, 16
      %v656 = vrot.slane %v654, 5
      %v657 = vsel %vm273, %v652, %v656
      %s658 = scalar_lea.vmem %s1, 8
      %v659 = vld [vmem:[%s658] sm:$0xf]
      %v660 = vld [vmem:[%s658 + $0x4] sm:$0xf]
      %v661 = vunpack.c.l.b16 %v287
      %v662 = vunpack.c.l.b16 %v297
      %v663 = vunpack.c.l.b16 %v311
      %v664 = vunpack.c.l.b16 %v321
      %v665 = vunpack.c.l.b16 %v335
      %v666 = vunpack.c.l.b16 %v345
      %v667 = vunpack.c.l.b16 %v359
      %v668 = vunpack.c.l.b16 %v369
      %v669 = vunpack.c.l.b16 %v383
      %v670 = vunpack.c.l.b16 %v393
      %v671 = vunpack.c.l.b16 %v407
      %v672 = vunpack.c.l.b16 %v417
      %v673 = vunpack.c.l.b16 %v431
      %v674 = vunpack.c.l.b16 %v441
      %v675 = vunpack.c.l.b16 %v455
      %v676 = vunpack.c.l.b16 %v465
      %v677 = vunpack.c.l.b16 %v479
      %v678 = vunpack.c.l.b16 %v489
      %v679 = vunpack.c.l.b16 %v503
      %v680 = vunpack.c.l.b16 %v513
      %v681 = vunpack.c.l.b16 %v527
      %v682 = vunpack.c.l.b16 %v537
      %v683 = vunpack.c.l.b16 %v551
      %v684 = vunpack.c.l.b16 %v561
      %v685 = vunpack.c.l.b16 %v575
      %v686 = vunpack.c.l.b16 %v585
      %v687 = vunpack.c.l.b16 %v599
      %v688 = vunpack.c.l.b16 %v609
      %v689 = vunpack.c.l.b16 %v623
      %v690 = vunpack.c.l.b16 %v633
      %v691 = vunpack.c.l.b16 %v647
      %v692 = vunpack.c.l.b16 %v657
      %v693 = vpack.c.b16 %v662, %v661
      %v694 = vpack.c.b16 %v664, %v663
      %v695 = vpack.c.b16 %v666, %v665
      %v696 = vpack.c.b16 %v668, %v667
      %v697 = vpack.c.b16 %v670, %v669
      %v698 = vpack.c.b16 %v672, %v671
      %v699 = vpack.c.b16 %v674, %v673
      %v700 = vpack.c.b16 %v676, %v675
      %v701 = vpack.c.b16 %v678, %v677
      %v702 = vpack.c.b16 %v680, %v679
      %v703 = vpack.c.b16 %v682, %v681
      %v704 = vpack.c.b16 %v684, %v683
      %v705 = vpack.c.b16 %v686, %v685
      %v706 = vpack.c.b16 %v688, %v687
      %v707 = vpack.c.b16 %v690, %v689
      %v708 = vpack.c.b16 %v692, %v691
      %v711 = vunpack.c.l.b16 %v659
      %v712 = vunpack.c.l.b16 %v660
      %v713 = vpack.c.b16 %v712, %v711
      %vm715 = vcmask 130048
      %v717 = vsel %vm715, %v693, 0
      %v720 = vsel %vm715, %v694, 0
      %v723 = vsel %vm715, %v695, 0
      %v726 = vsel %vm715, %v696, 0
      %v729 = vsel %vm715, %v697, 0
      %v732 = vsel %vm715, %v698, 0
      %v735 = vsel %vm715, %v699, 0
      %v738 = vsel %vm715, %v700, 0
      %v741 = vsel %vm715, %v701, 0
      %v744 = vsel %vm715, %v702, 0
      %v747 = vsel %vm715, %v703, 0
      %v750 = vsel %vm715, %v704, 0
      %v753 = vsel %vm715, %v705, 0
      %v756 = vsel %vm715, %v706, 0
      %v759 = vsel %vm715, %v707, 0
      %v762 = vsel %vm715, %v708, 0
      %764 = vmatprep.subr.bf16.mxu0 0
      %765 = vmatpush1.bf16.msra.mxu0 0
      %766 = vmatprep.subr.bf16.mxu0 0
      %767 = vmatpush1.bf16.msra.mxu0 0
      %768 = vmatprep.subr.bf16.mxu0 0
      %769 = vmatpush1.bf16.msra.mxu0 0
      %770 = vmatprep.subr.bf16.mxu0 0
      %771 = vmatpush1.bf16.msra.mxu0 0
      %772 = vmatprep.subr.bf16.mxu0 0
      %773 = vmatpush1.bf16.msra.mxu0 0
      %774 = vmatprep.subr.bf16.mxu0 0
      %775 = vmatpush1.bf16.msra.mxu0 0
      %776 = vmatprep.subr.bf16.mxu0 0
      %777 = vmatpush1.bf16.msra.mxu0 0
      %778 = vmatprep.subr.bf16.mxu0 0
      %779 = vmatpush1.bf16.msra.mxu0 %v713
      %780 = vmatprep.subr.bf16.mxu0 0
      %781 = vmatpush2.bf16.msra.mxu0 0
      %782 = vmatprep.subr.bf16.mxu0 0
      %783 = vmatpush2.bf16.msra.mxu0 0
      %784 = vmatprep.subr.bf16.mxu0 0
      %785 = vmatpush2.bf16.msra.mxu0 0
      %786 = vmatprep.subr.bf16.mxu0 0
      %787 = vmatpush2.bf16.msra.mxu0 0
      %788 = vmatprep.subr.bf16.mxu0 0
      %789 = vmatpush2.bf16.msra.mxu0 0
      %790 = vmatprep.subr.bf16.mxu0 0
      %791 = vmatpush2.bf16.msra.mxu0 0
      %792 = vmatprep.subr.bf16.mxu0 0
      %793 = vmatpush2.bf16.msra.mxu0 0
      %794 = vmatprep.subr.bf16.mxu0 0
      %795 = vmatpush2.bf16.msra.mxu0 0
      %796 = vmatprep.mubr.bf16.mxu0 0
      %797 = vmatmul.mubr.bf16.gmra.mxu0 %v717
      %v798 = vpop.f32.mrf.mxu0
      %v799 = vadd.f32 0.0, %v798
      %v800 = vpop.f32.mrf.mxu0
      %v801 = vpop.f32.mrf.mxu0
      %v802 = vadd.f32 0.0, %v801
      %v803 = vpop.f32.mrf.mxu0
      %804 = vmatprep.mubr.bf16.mxu0 0
      %805 = vmatmul.mubr.bf16.gmra.mxu0 %v720
      %v806 = vpop.f32.mrf.mxu0
      %v807 = vadd.f32 0.0, %v806
      %v808 = vpop.f32.mrf.mxu0
      %v809 = vpop.f32.mrf.mxu0
      %v810 = vadd.f32 0.0, %v809
      %v811 = vpop.f32.mrf.mxu0
      %812 = vmatprep.mubr.bf16.mxu0 0
      %813 = vmatmul.mubr.bf16.gmra.mxu0 %v723
      %v814 = vpop.f32.mrf.mxu0
      %v815 = vadd.f32 0.0, %v814
      %v816 = vpop.f32.mrf.mxu0
      %v817 = vpop.f32.mrf.mxu0
      %v818 = vadd.f32 0.0, %v817
      %v819 = vpop.f32.mrf.mxu0
      %820 = vmatprep.mubr.bf16.mxu0 0
      %821 = vmatmul.mubr.bf16.gmra.mxu0 %v726
      %v822 = vpop.f32.mrf.mxu0
      %v823 = vadd.f32 0.0, %v822
      %v824 = vpop.f32.mrf.mxu0
      %v825 = vpop.f32.mrf.mxu0
      %v826 = vadd.f32 0.0, %v825
      %v827 = vpop.f32.mrf.mxu0
      %828 = vmatprep.mubr.bf16.mxu0 0
      %829 = vmatmul.mubr.bf16.gmra.mxu0 %v729
      %v830 = vpop.f32.mrf.mxu0
      %v831 = vadd.f32 0.0, %v830
      %v832 = vpop.f32.mrf.mxu0
      %v833 = vpop.f32.mrf.mxu0
      %v834 = vadd.f32 0.0, %v833
      %v835 = vpop.f32.mrf.mxu0
      %836 = vmatprep.mubr.bf16.mxu0 0
      %837 = vmatmul.mubr.bf16.gmra.mxu0 %v732
      %v838 = vpop.f32.mrf.mxu0
      %v839 = vadd.f32 0.0, %v838
      %v840 = vpop.f32.mrf.mxu0
      %v841 = vpop.f32.mrf.mxu0
      %v842 = vadd.f32 0.0, %v841
      %v843 = vpop.f32.mrf.mxu0
      %844 = vmatprep.mubr.bf16.mxu0 0
      %845 = vmatmul.mubr.bf16.gmra.mxu0 %v735
      %v846 = vpop.f32.mrf.mxu0
      %v847 = vadd.f32 0.0, %v846
      %v848 = vpop.f32.mrf.mxu0
      %v849 = vpop.f32.mrf.mxu0
      %v850 = vadd.f32 0.0, %v849
      %v851 = vpop.f32.mrf.mxu0
      %852 = vmatprep.mubr.bf16.mxu0 0
      %853 = vmatmul.mubr.bf16.gmra.mxu0 %v738
      %v854 = vpop.f32.mrf.mxu0
      %v855 = vadd.f32 0.0, %v854
      %v856 = vpop.f32.mrf.mxu0
      %v857 = vpop.f32.mrf.mxu0
      %v858 = vadd.f32 0.0, %v857
      %v859 = vpop.f32.mrf.mxu0
      %860 = vmatprep.mubr.bf16.mxu0 0
      %861 = vmatmul.mubr.bf16.gmra.mxu0 %v741
      %v862 = vpop.f32.mrf.mxu0
      %v863 = vadd.f32 0.0, %v862
      %v864 = vpop.f32.mrf.mxu0
      %v865 = vpop.f32.mrf.mxu0
      %v866 = vadd.f32 0.0, %v865
      %v867 = vpop.f32.mrf.mxu0
      %868 = vmatprep.mubr.bf16.mxu0 0
      %869 = vmatmul.mubr.bf16.gmra.mxu0 %v744
      %v870 = vpop.f32.mrf.mxu0
      %v871 = vadd.f32 0.0, %v870
      %v872 = vpop.f32.mrf.mxu0
      %v873 = vpop.f32.mrf.mxu0
      %v874 = vadd.f32 0.0, %v873
      %v875 = vpop.f32.mrf.mxu0
      %876 = vmatprep.mubr.bf16.mxu0 0
      %877 = vmatmul.mubr.bf16.gmra.mxu0 %v747
      %v878 = vpop.f32.mrf.mxu0
      %v879 = vadd.f32 0.0, %v878
      %v880 = vpop.f32.mrf.mxu0
      %v881 = vpop.f32.mrf.mxu0
      %v882 = vadd.f32 0.0, %v881
      %v883 = vpop.f32.mrf.mxu0
      %884 = vmatprep.mubr.bf16.mxu0 0
      %885 = vmatmul.mubr.bf16.gmra.mxu0 %v750
      %v886 = vpop.f32.mrf.mxu0
      %v887 = vadd.f32 0.0, %v886
      %v888 = vpop.f32.mrf.mxu0
      %v889 = vpop.f32.mrf.mxu0
      %v890 = vadd.f32 0.0, %v889
      %v891 = vpop.f32.mrf.mxu0
      %892 = vmatprep.mubr.bf16.mxu0 0
      %893 = vmatmul.mubr.bf16.gmra.mxu0 %v753
      %v894 = vpop.f32.mrf.mxu0
      %v895 = vadd.f32 0.0, %v894
      %v896 = vpop.f32.mrf.mxu0
      %v897 = vpop.f32.mrf.mxu0
      %v898 = vadd.f32 0.0, %v897
      %v899 = vpop.f32.mrf.mxu0
      %900 = vmatprep.mubr.bf16.mxu0 0
      %901 = vmatmul.mubr.bf16.gmra.mxu0 %v756
      %v902 = vpop.f32.mrf.mxu0
      %v903 = vadd.f32 0.0, %v902
      %v904 = vpop.f32.mrf.mxu0
      %v905 = vpop.f32.mrf.mxu0
      %v906 = vadd.f32 0.0, %v905
      %v907 = vpop.f32.mrf.mxu0
      %908 = vmatprep.mubr.bf16.mxu0 0
      %909 = vmatmul.mubr.bf16.gmra.mxu0 %v759
      %v910 = vpop.f32.mrf.mxu0
      %v911 = vadd.f32 0.0, %v910
      %v912 = vpop.f32.mrf.mxu0
      %v913 = vpop.f32.mrf.mxu0
      %v914 = vadd.f32 0.0, %v913
      %v915 = vpop.f32.mrf.mxu0
      %916 = vmatprep.mubr.bf16.mxu0 0
      %917 = vmatmul.mubr.bf16.gmra.mxu0 %v762
      %v918 = vpop.f32.mrf.mxu0
      %v919 = vadd.f32 0.0, %v918
      %v920 = vpop.f32.mrf.mxu0
      %v921 = vpop.f32.mrf.mxu0
      %v922 = vadd.f32 0.0, %v921
      %v923 = vpop.f32.mrf.mxu0
      %924 = vdwg.mxu0
      %v957 = vunpack.c.l.b16 %v215
      %v958 = vunpack.c.l.b16 %v216
      %v959 = vunpack.c.l.b16 %v218
      %v960 = vunpack.c.l.b16 %v219
      %v961 = vunpack.c.l.b16 %v221
      %v962 = vunpack.c.l.b16 %v222
      %v963 = vunpack.c.l.b16 %v224
      %v964 = vunpack.c.l.b16 %v225
      %v965 = vunpack.c.l.b16 %v227
      %v966 = vunpack.c.l.b16 %v228
      %v967 = vunpack.c.l.b16 %v230
      %v968 = vunpack.c.l.b16 %v231
      %v969 = vunpack.c.l.b16 %v233
      %v970 = vunpack.c.l.b16 %v234
      %v971 = vunpack.c.l.b16 %v236
      %v972 = vunpack.c.l.b16 %v237
      %v973 = vunpack.c.l.b16 %v239
      %v974 = vunpack.c.l.b16 %v240
      %v975 = vunpack.c.l.b16 %v242
      %v976 = vunpack.c.l.b16 %v243
      %v977 = vunpack.c.l.b16 %v245
      %v978 = vunpack.c.l.b16 %v246
      %v979 = vunpack.c.l.b16 %v248
      %v980 = vunpack.c.l.b16 %v249
      %v981 = vunpack.c.l.b16 %v251
      %v982 = vunpack.c.l.b16 %v252
      %v983 = vunpack.c.l.b16 %v254
      %v984 = vunpack.c.l.b16 %v255
      %v985 = vunpack.c.l.b16 %v257
      %v986 = vunpack.c.l.b16 %v258
      %v987 = vunpack.c.l.b16 %v260
      %v988 = vunpack.c.l.b16 %v261
      %v989 = vpack.c.b16 %v958, %v957
      %v990 = vpack.c.b16 %v960, %v959
      %v991 = vpack.c.b16 %v962, %v961
      %v992 = vpack.c.b16 %v964, %v963
      %v993 = vpack.c.b16 %v966, %v965
      %v994 = vpack.c.b16 %v968, %v967
      %v995 = vpack.c.b16 %v970, %v969
      %v996 = vpack.c.b16 %v972, %v971
      %v997 = vpack.c.b16 %v974, %v973
      %v998 = vpack.c.b16 %v976, %v975
      %v999 = vpack.c.b16 %v978, %v977
      %v1000 = vpack.c.b16 %v980, %v979
      %v1001 = vpack.c.b16 %v982, %v981
      %v1002 = vpack.c.b16 %v984, %v983
      %v1003 = vpack.c.b16 %v986, %v985
      %v1004 = vpack.c.b16 %v988, %v987
      %v1007 = vunpack.c.l.b16 %v269
      %v1008 = vunpack.c.l.b16 %v270
      %v1009 = vpack.c.b16 %v1008, %v1007
      %v1012 = vsel %vm715, %v989, 0
      %v1015 = vsel %vm715, %v990, 0
      %v1018 = vsel %vm715, %v991, 0
      %v1021 = vsel %vm715, %v992, 0
      %v1024 = vsel %vm715, %v993, 0
      %v1027 = vsel %vm715, %v994, 0
      %v1030 = vsel %vm715, %v995, 0
      %v1033 = vsel %vm715, %v996, 0
      %v1036 = vsel %vm715, %v997, 0
      %v1039 = vsel %vm715, %v998, 0
      %v1042 = vsel %vm715, %v999, 0
      %v1045 = vsel %vm715, %v1000, 0
      %v1048 = vsel %vm715, %v1001, 0
      %v1051 = vsel %vm715, %v1002, 0
      %v1054 = vsel %vm715, %v1003, 0
      %v1057 = vsel %vm715, %v1004, 0
      %1059 = vmatprep.subr.bf16.mxu0 0
      %1060 = vmatpush1.bf16.msra.mxu0 0
      %1061 = vmatprep.subr.bf16.mxu0 0
      %1062 = vmatpush1.bf16.msra.mxu0 0
      %1063 = vmatprep.subr.bf16.mxu0 0
      %1064 = vmatpush1.bf16.msra.mxu0 0
      %1065 = vmatprep.subr.bf16.mxu0 0
      %1066 = vmatpush1.bf16.msra.mxu0 0
      %1067 = vmatprep.subr.bf16.mxu0 0
      %1068 = vmatpush1.bf16.msra.mxu0 0
      %1069 = vmatprep.subr.bf16.mxu0 0
      %1070 = vmatpush1.bf16.msra.mxu0 0
      %1071 = vmatprep.subr.bf16.mxu0 0
      %1072 = vmatpush1.bf16.msra.mxu0 0
      %1073 = vmatprep.subr.bf16.mxu0 0
      %1074 = vmatpush1.bf16.msra.mxu0 %v1009
      %1075 = vmatprep.subr.bf16.mxu0 0
      %1076 = vmatpush2.bf16.msra.mxu0 0
      %1077 = vmatprep.subr.bf16.mxu0 0
      %1078 = vmatpush2.bf16.msra.mxu0 0
      %1079 = vmatprep.subr.bf16.mxu0 0
      %1080 = vmatpush2.bf16.msra.mxu0 0
      %1081 = vmatprep.subr.bf16.mxu0 0
      %1082 = vmatpush2.bf16.msra.mxu0 0
      %1083 = vmatprep.subr.bf16.mxu0 0
      %1084 = vmatpush2.bf16.msra.mxu0 0
      %1085 = vmatprep.subr.bf16.mxu0 0
      %1086 = vmatpush2.bf16.msra.mxu0 0
      %1087 = vmatprep.subr.bf16.mxu0 0
      %1088 = vmatpush2.bf16.msra.mxu0 0
      %1089 = vmatprep.subr.bf16.mxu0 0
      %1090 = vmatpush2.bf16.msra.mxu0 0
      %1091 = vmatprep.mubr.bf16.mxu0 0
      %1092 = vmatmul.mubr.bf16.gmra.mxu0 %v1012
      %v1093 = vpop.f32.mrf.mxu0
      %v1094 = vadd.f32 %v799, %v1093
      %v1095 = vpop.f32.mrf.mxu0
      %v1096 = vpop.f32.mrf.mxu0
      %v1097 = vadd.f32 %v802, %v1096
      %v1098 = vpop.f32.mrf.mxu0
      %1099 = vmatprep.mubr.bf16.mxu0 0
      %1100 = vmatmul.mubr.bf16.gmra.mxu0 %v1015
      %v1101 = vpop.f32.mrf.mxu0
      %v1102 = vadd.f32 %v807, %v1101
      %v1103 = vpop.f32.mrf.mxu0
      %v1104 = vpop.f32.mrf.mxu0
      %v1105 = vadd.f32 %v810, %v1104
      %v1106 = vpop.f32.mrf.mxu0
      %1107 = vmatprep.mubr.bf16.mxu0 0
      %1108 = vmatmul.mubr.bf16.gmra.mxu0 %v1018
      %v1109 = vpop.f32.mrf.mxu0
      %v1110 = vadd.f32 %v815, %v1109
      %v1111 = vpop.f32.mrf.mxu0
      %v1112 = vpop.f32.mrf.mxu0
      %v1113 = vadd.f32 %v818, %v1112
      %v1114 = vpop.f32.mrf.mxu0
      %1115 = vmatprep.mubr.bf16.mxu0 0
      %1116 = vmatmul.mubr.bf16.gmra.mxu0 %v1021
      %v1117 = vpop.f32.mrf.mxu0
      %v1118 = vadd.f32 %v823, %v1117
      %v1119 = vpop.f32.mrf.mxu0
      %v1120 = vpop.f32.mrf.mxu0
      %v1121 = vadd.f32 %v826, %v1120
      %v1122 = vpop.f32.mrf.mxu0
      %1123 = vmatprep.mubr.bf16.mxu0 0
      %1124 = vmatmul.mubr.bf16.gmra.mxu0 %v1024
      %v1125 = vpop.f32.mrf.mxu0
      %v1126 = vadd.f32 %v831, %v1125
      %v1127 = vpop.f32.mrf.mxu0
      %v1128 = vpop.f32.mrf.mxu0
      %v1129 = vadd.f32 %v834, %v1128
      %v1130 = vpop.f32.mrf.mxu0
      %1131 = vmatprep.mubr.bf16.mxu0 0
      %1132 = vmatmul.mubr.bf16.gmra.mxu0 %v1027
      %v1133 = vpop.f32.mrf.mxu0
      %v1134 = vadd.f32 %v839, %v1133
      %v1135 = vpop.f32.mrf.mxu0
      %v1136 = vpop.f32.mrf.mxu0
      %v1137 = vadd.f32 %v842, %v1136
      %v1138 = vpop.f32.mrf.mxu0
      %1139 = vmatprep.mubr.bf16.mxu0 0
      %1140 = vmatmul.mubr.bf16.gmra.mxu0 %v1030
      %v1141 = vpop.f32.mrf.mxu0
      %v1142 = vadd.f32 %v847, %v1141
      %v1143 = vpop.f32.mrf.mxu0
      %v1144 = vpop.f32.mrf.mxu0
      %v1145 = vadd.f32 %v850, %v1144
      %v1146 = vpop.f32.mrf.mxu0
      %1147 = vmatprep.mubr.bf16.mxu0 0
      %1148 = vmatmul.mubr.bf16.gmra.mxu0 %v1033
      %v1149 = vpop.f32.mrf.mxu0
      %v1150 = vadd.f32 %v855, %v1149
      %v1151 = vpop.f32.mrf.mxu0
      %v1152 = vpop.f32.mrf.mxu0
      %v1153 = vadd.f32 %v858, %v1152
      %v1154 = vpop.f32.mrf.mxu0
      %1155 = vmatprep.mubr.bf16.mxu0 0
      %1156 = vmatmul.mubr.bf16.gmra.mxu0 %v1036
      %v1157 = vpop.f32.mrf.mxu0
      %v1158 = vadd.f32 %v863, %v1157
      %v1159 = vpop.f32.mrf.mxu0
      %v1160 = vpop.f32.mrf.mxu0
      %v1161 = vadd.f32 %v866, %v1160
      %v1162 = vpop.f32.mrf.mxu0
      %1163 = vmatprep.mubr.bf16.mxu0 0
      %1164 = vmatmul.mubr.bf16.gmra.mxu0 %v1039
      %v1165 = vpop.f32.mrf.mxu0
      %v1166 = vadd.f32 %v871, %v1165
      %v1167 = vpop.f32.mrf.mxu0
      %v1168 = vpop.f32.mrf.mxu0
      %v1169 = vadd.f32 %v874, %v1168
      %v1170 = vpop.f32.mrf.mxu0
      %1171 = vmatprep.mubr.bf16.mxu0 0
      %1172 = vmatmul.mubr.bf16.gmra.mxu0 %v1042
      %v1173 = vpop.f32.mrf.mxu0
      %v1174 = vadd.f32 %v879, %v1173
      %v1175 = vpop.f32.mrf.mxu0
      %v1176 = vpop.f32.mrf.mxu0
      %v1177 = vadd.f32 %v882, %v1176
      %v1178 = vpop.f32.mrf.mxu0
      %1179 = vmatprep.mubr.bf16.mxu0 0
      %1180 = vmatmul.mubr.bf16.gmra.mxu0 %v1045
      %v1181 = vpop.f32.mrf.mxu0
      %v1182 = vadd.f32 %v887, %v1181
      %v1183 = vpop.f32.mrf.mxu0
      %v1184 = vpop.f32.mrf.mxu0
      %v1185 = vadd.f32 %v890, %v1184
      %v1186 = vpop.f32.mrf.mxu0
      %1187 = vmatprep.mubr.bf16.mxu0 0
      %1188 = vmatmul.mubr.bf16.gmra.mxu0 %v1048
      %v1189 = vpop.f32.mrf.mxu0
      %v1190 = vadd.f32 %v895, %v1189
      %v1191 = vpop.f32.mrf.mxu0
      %v1192 = vpop.f32.mrf.mxu0
      %v1193 = vadd.f32 %v898, %v1192
      %v1194 = vpop.f32.mrf.mxu0
      %1195 = vmatprep.mubr.bf16.mxu0 0
      %1196 = vmatmul.mubr.bf16.gmra.mxu0 %v1051
      %v1197 = vpop.f32.mrf.mxu0
      %v1198 = vadd.f32 %v903, %v1197
      %v1199 = vpop.f32.mrf.mxu0
      %v1200 = vpop.f32.mrf.mxu0
      %v1201 = vadd.f32 %v906, %v1200
      %v1202 = vpop.f32.mrf.mxu0
      %1203 = vmatprep.mubr.bf16.mxu0 0
      %1204 = vmatmul.mubr.bf16.gmra.mxu0 %v1054
      %v1205 = vpop.f32.mrf.mxu0
      %v1206 = vadd.f32 %v911, %v1205
      %v1207 = vpop.f32.mrf.mxu0
      %v1208 = vpop.f32.mrf.mxu0
      %v1209 = vadd.f32 %v914, %v1208
      %v1210 = vpop.f32.mrf.mxu0
      %1211 = vmatprep.mubr.bf16.mxu0 0
      %1212 = vmatmul.mubr.bf16.gmra.mxu0 %v1057
      %v1213 = vpop.f32.mrf.mxu0
      %v1214 = vadd.f32 %v919, %v1213
      %v1215 = vpop.f32.mrf.mxu0
      %v1216 = vpop.f32.mrf.mxu0
      %v1217 = vadd.f32 %v922, %v1216
      %v1218 = vpop.f32.mrf.mxu0
      %1219 = vdwg.mxu0
      %vm1236 = vcmask 1042432
      %vm1237 = vcmask 1046532
      %vm1238 = vmor %vm1236, %vm1237
      %v1239 = vrot.slane %v215, 5
      %v1240 = vrot.slane %v1239, 4
      %v1241 = vrot.slane %v216, 5
      %v1242 = vsel %vm1238, %v1240, %v1241
      %v1243 = vrot.slane %v1241, 4
      %v1244 = vrot.slane %v217, 5
      %v1245 = vsel %vm1238, %v1243, %v1244
      %v1246 = vrot.slane %v218, 5
      %v1247 = vrot.slane %v1246, 4
      %v1248 = vrot.slane %v219, 5
      %v1249 = vsel %vm1238, %v1247, %v1248
      %v1250 = vrot.slane %v1248, 4
      %v1251 = vrot.slane %v220, 5
      %v1252 = vsel %vm1238, %v1250, %v1251
      %v1253 = vrot.slane %v221, 5
      %v1254 = vrot.slane %v1253, 4
      %v1255 = vrot.slane %v222, 5
      %v1256 = vsel %vm1238, %v1254, %v1255
      %v1257 = vrot.slane %v1255, 4
      %v1258 = vrot.slane %v223, 5
      %v1259 = vsel %vm1238, %v1257, %v1258
      %v1260 = vrot.slane %v224, 5
      %v1261 = vrot.slane %v1260, 4
      %v1262 = vrot.slane %v225, 5
      %v1263 = vsel %vm1238, %v1261, %v1262
      %v1264 = vrot.slane %v1262, 4
      %v1265 = vrot.slane %v226, 5
      %v1266 = vsel %vm1238, %v1264, %v1265
      %v1267 = vrot.slane %v227, 5
      %v1268 = vrot.slane %v1267, 4
      %v1269 = vrot.slane %v228, 5
      %v1270 = vsel %vm1238, %v1268, %v1269
      %v1271 = vrot.slane %v1269, 4
      %v1272 = vrot.slane %v229, 5
      %v1273 = vsel %vm1238, %v1271, %v1272
      %v1274 = vrot.slane %v230, 5
      %v1275 = vrot.slane %v1274, 4
      %v1276 = vrot.slane %v231, 5
      %v1277 = vsel %vm1238, %v1275, %v1276
      %v1278 = vrot.slane %v1276, 4
      %v1279 = vrot.slane %v232, 5
      %v1280 = vsel %vm1238, %v1278, %v1279
      %v1281 = vrot.slane %v233, 5
      %v1282 = vrot.slane %v1281, 4
      %v1283 = vrot.slane %v234, 5
      %v1284 = vsel %vm1238, %v1282, %v1283
      %v1285 = vrot.slane %v1283, 4
      %v1286 = vrot.slane %v235, 5
      %v1287 = vsel %vm1238, %v1285, %v1286
      %v1288 = vrot.slane %v236, 5
      %v1289 = vrot.slane %v1288, 4
      %v1290 = vrot.slane %v237, 5
      %v1291 = vsel %vm1238, %v1289, %v1290
      %v1292 = vrot.slane %v1290, 4
      %v1293 = vrot.slane %v238, 5
      %v1294 = vsel %vm1238, %v1292, %v1293
      %v1295 = vrot.slane %v239, 5
      %v1296 = vrot.slane %v1295, 4
      %v1297 = vrot.slane %v240, 5
      %v1298 = vsel %vm1238, %v1296, %v1297
      %v1299 = vrot.slane %v1297, 4
      %v1300 = vrot.slane %v241, 5
      %v1301 = vsel %vm1238, %v1299, %v1300
      %v1302 = vrot.slane %v242, 5
      %v1303 = vrot.slane %v1302, 4
      %v1304 = vrot.slane %v243, 5
      %v1305 = vsel %vm1238, %v1303, %v1304
      %v1306 = vrot.slane %v1304, 4
      %v1307 = vrot.slane %v244, 5
      %v1308 = vsel %vm1238, %v1306, %v1307
      %v1309 = vrot.slane %v245, 5
      %v1310 = vrot.slane %v1309, 4
      %v1311 = vrot.slane %v246, 5
      %v1312 = vsel %vm1238, %v1310, %v1311
      %v1313 = vrot.slane %v1311, 4
      %v1314 = vrot.slane %v247, 5
      %v1315 = vsel %vm1238, %v1313, %v1314
      %v1316 = vrot.slane %v248, 5
      %v1317 = vrot.slane %v1316, 4
      %v1318 = vrot.slane %v249, 5
      %v1319 = vsel %vm1238, %v1317, %v1318
      %v1320 = vrot.slane %v1318, 4
      %v1321 = vrot.slane %v250, 5
      %v1322 = vsel %vm1238, %v1320, %v1321
      %v1323 = vrot.slane %v251, 5
      %v1324 = vrot.slane %v1323, 4
      %v1325 = vrot.slane %v252, 5
      %v1326 = vsel %vm1238, %v1324, %v1325
      %v1327 = vrot.slane %v1325, 4
      %v1328 = vrot.slane %v253, 5
      %v1329 = vsel %vm1238, %v1327, %v1328
      %v1330 = vrot.slane %v254, 5
      %v1331 = vrot.slane %v1330, 4
      %v1332 = vrot.slane %v255, 5
      %v1333 = vsel %vm1238, %v1331, %v1332
      %v1334 = vrot.slane %v1332, 4
      %v1335 = vrot.slane %v256, 5
      %v1336 = vsel %vm1238, %v1334, %v1335
      %v1337 = vrot.slane %v257, 5
      %v1338 = vrot.slane %v1337, 4
      %v1339 = vrot.slane %v258, 5
      %v1340 = vsel %vm1238, %v1338, %v1339
      %v1341 = vrot.slane %v1339, 4
      %v1342 = vrot.slane %v259, 5
      %v1343 = vsel %vm1238, %v1341, %v1342
      %v1344 = vrot.slane %v260, 5
      %v1345 = vrot.slane %v1344, 4
      %v1346 = vrot.slane %v261, 5
      %v1347 = vsel %vm1238, %v1345, %v1346
      %v1348 = vrot.slane %v1346, 4
      %v1349 = vrot.slane %v262, 5
      %v1350 = vsel %vm1238, %v1348, %v1349
      %s1351 = scalar_lea.vmem %s1, 16
      %v1352 = vld [vmem:[%s1351] sm:$0xf]
      %v1353 = vld [vmem:[%s1351 + $0x4] sm:$0xf]
      %v1354 = vunpack.c.l.b16 %v1242
      %v1355 = vunpack.c.l.b16 %v1245
      %v1356 = vunpack.c.l.b16 %v1249
      %v1357 = vunpack.c.l.b16 %v1252
      %v1358 = vunpack.c.l.b16 %v1256
      %v1359 = vunpack.c.l.b16 %v1259
      %v1360 = vunpack.c.l.b16 %v1263
      %v1361 = vunpack.c.l.b16 %v1266
      %v1362 = vunpack.c.l.b16 %v1270
      %v1363 = vunpack.c.l.b16 %v1273
      %v1364 = vunpack.c.l.b16 %v1277
      %v1365 = vunpack.c.l.b16 %v1280
      %v1366 = vunpack.c.l.b16 %v1284
      %v1367 = vunpack.c.l.b16 %v1287
      %v1368 = vunpack.c.l.b16 %v1291
      %v1369 = vunpack.c.l.b16 %v1294
      %v1370 = vunpack.c.l.b16 %v1298
      %v1371 = vunpack.c.l.b16 %v1301
      %v1372 = vunpack.c.l.b16 %v1305
      %v1373 = vunpack.c.l.b16 %v1308
      %v1374 = vunpack.c.l.b16 %v1312
      %v1375 = vunpack.c.l.b16 %v1315
      %v1376 = vunpack.c.l.b16 %v1319
      %v1377 = vunpack.c.l.b16 %v1322
      %v1378 = vunpack.c.l.b16 %v1326
      %v1379 = vunpack.c.l.b16 %v1329
      %v1380 = vunpack.c.l.b16 %v1333
      %v1381 = vunpack.c.l.b16 %v1336
      %v1382 = vunpack.c.l.b16 %v1340
      %v1383 = vunpack.c.l.b16 %v1343
      %v1384 = vunpack.c.l.b16 %v1347
      %v1385 = vunpack.c.l.b16 %v1350
      %v1386 = vpack.c.b16 %v1355, %v1354
      %v1387 = vpack.c.b16 %v1357, %v1356
      %v1388 = vpack.c.b16 %v1359, %v1358
      %v1389 = vpack.c.b16 %v1361, %v1360
      %v1390 = vpack.c.b16 %v1363, %v1362
      %v1391 = vpack.c.b16 %v1365, %v1364
      %v1392 = vpack.c.b16 %v1367, %v1366
      %v1393 = vpack.c.b16 %v1369, %v1368
      %v1394 = vpack.c.b16 %v1371, %v1370
      %v1395 = vpack.c.b16 %v1373, %v1372
      %v1396 = vpack.c.b16 %v1375, %v1374
      %v1397 = vpack.c.b16 %v1377, %v1376
      %v1398 = vpack.c.b16 %v1379, %v1378
      %v1399 = vpack.c.b16 %v1381, %v1380
      %v1400 = vpack.c.b16 %v1383, %v1382
      %v1401 = vpack.c.b16 %v1385, %v1384
      %v1404 = vunpack.c.l.b16 %v1352
      %v1405 = vunpack.c.l.b16 %v1353
      %v1406 = vpack.c.b16 %v1405, %v1404
      %v1409 = vsel %vm715, %v1386, 0
      %v1412 = vsel %vm715, %v1387, 0
      %v1415 = vsel %vm715, %v1388, 0
      %v1418 = vsel %vm715, %v1389, 0
      %v1421 = vsel %vm715, %v1390, 0
      %v1424 = vsel %vm715, %v1391, 0
      %v1427 = vsel %vm715, %v1392, 0
      %v1430 = vsel %vm715, %v1393, 0
      %v1433 = vsel %vm715, %v1394, 0
      %v1436 = vsel %vm715, %v1395, 0
      %v1439 = vsel %vm715, %v1396, 0
      %v1442 = vsel %vm715, %v1397, 0
      %v1445 = vsel %vm715, %v1398, 0
      %v1448 = vsel %vm715, %v1399, 0
      %v1451 = vsel %vm715, %v1400, 0
      %v1454 = vsel %vm715, %v1401, 0
      %1456 = vmatprep.subr.bf16.mxu0 0
      %1457 = vmatpush1.bf16.msra.mxu0 0
      %1458 = vmatprep.subr.bf16.mxu0 0
      %1459 = vmatpush1.bf16.msra.mxu0 0
      %1460 = vmatprep.subr.bf16.mxu0 0
      %1461 = vmatpush1.bf16.msra.mxu0 0
      %1462 = vmatprep.subr.bf16.mxu0 0
      %1463 = vmatpush1.bf16.msra.mxu0 0
      %1464 = vmatprep.subr.bf16.mxu0 0
      %1465 = vmatpush1.bf16.msra.mxu0 0
      %1466 = vmatprep.subr.bf16.mxu0 0
      %1467 = vmatpush1.bf16.msra.mxu0 0
      %1468 = vmatprep.subr.bf16.mxu0 0
      %1469 = vmatpush1.bf16.msra.mxu0 0
      %1470 = vmatprep.subr.bf16.mxu0 0
      %1471 = vmatpush1.bf16.msra.mxu0 %v1406
      %1472 = vmatprep.subr.bf16.mxu0 0
      %1473 = vmatpush2.bf16.msra.mxu0 0
      %1474 = vmatprep.subr.bf16.mxu0 0
      %1475 = vmatpush2.bf16.msra.mxu0 0
      %1476 = vmatprep.subr.bf16.mxu0 0
      %1477 = vmatpush2.bf16.msra.mxu0 0
      %1478 = vmatprep.subr.bf16.mxu0 0
      %1479 = vmatpush2.bf16.msra.mxu0 0
      %1480 = vmatprep.subr.bf16.mxu0 0
      %1481 = vmatpush2.bf16.msra.mxu0 0
      %1482 = vmatprep.subr.bf16.mxu0 0
      %1483 = vmatpush2.bf16.msra.mxu0 0
      %1484 = vmatprep.subr.bf16.mxu0 0
      %1485 = vmatpush2.bf16.msra.mxu0 0
      %1486 = vmatprep.subr.bf16.mxu0 0
      %1487 = vmatpush2.bf16.msra.mxu0 0
      %1488 = vmatprep.mubr.bf16.mxu0 0
      %1489 = vmatmul.mubr.bf16.gmra.mxu0 %v1409
      %v1490 = vpop.f32.mrf.mxu0
      %v1491 = vadd.f32 0.0, %v1490
      %v1492 = vpop.f32.mrf.mxu0
      %v1493 = vpop.f32.mrf.mxu0
      %v1494 = vadd.f32 0.0, %v1493
      %v1495 = vpop.f32.mrf.mxu0
      %1496 = vmatprep.mubr.bf16.mxu0 0
      %1497 = vmatmul.mubr.bf16.gmra.mxu0 %v1412
      %v1498 = vpop.f32.mrf.mxu0
      %v1499 = vadd.f32 0.0, %v1498
      %v1500 = vpop.f32.mrf.mxu0
      %v1501 = vpop.f32.mrf.mxu0
      %v1502 = vadd.f32 0.0, %v1501
      %v1503 = vpop.f32.mrf.mxu0
      %1504 = vmatprep.mubr.bf16.mxu0 0
      %1505 = vmatmul.mubr.bf16.gmra.mxu0 %v1415
      %v1506 = vpop.f32.mrf.mxu0
      %v1507 = vadd.f32 0.0, %v1506
      %v1508 = vpop.f32.mrf.mxu0
      %v1509 = vpop.f32.mrf.mxu0
      %v1510 = vadd.f32 0.0, %v1509
      %v1511 = vpop.f32.mrf.mxu0
      %1512 = vmatprep.mubr.bf16.mxu0 0
      %1513 = vmatmul.mubr.bf16.gmra.mxu0 %v1418
      %v1514 = vpop.f32.mrf.mxu0
      %v1515 = vadd.f32 0.0, %v1514
      %v1516 = vpop.f32.mrf.mxu0
      %v1517 = vpop.f32.mrf.mxu0
      %v1518 = vadd.f32 0.0, %v1517
      %v1519 = vpop.f32.mrf.mxu0
      %1520 = vmatprep.mubr.bf16.mxu0 0
      %1521 = vmatmul.mubr.bf16.gmra.mxu0 %v1421
      %v1522 = vpop.f32.mrf.mxu0
      %v1523 = vadd.f32 0.0, %v1522
      %v1524 = vpop.f32.mrf.mxu0
      %v1525 = vpop.f32.mrf.mxu0
      %v1526 = vadd.f32 0.0, %v1525
      %v1527 = vpop.f32.mrf.mxu0
      %1528 = vmatprep.mubr.bf16.mxu0 0
      %1529 = vmatmul.mubr.bf16.gmra.mxu0 %v1424
      %v1530 = vpop.f32.mrf.mxu0
      %v1531 = vadd.f32 0.0, %v1530
      %v1532 = vpop.f32.mrf.mxu0
      %v1533 = vpop.f32.mrf.mxu0
      %v1534 = vadd.f32 0.0, %v1533
      %v1535 = vpop.f32.mrf.mxu0
      %1536 = vmatprep.mubr.bf16.mxu0 0
      %1537 = vmatmul.mubr.bf16.gmra.mxu0 %v1427
      %v1538 = vpop.f32.mrf.mxu0
      %v1539 = vadd.f32 0.0, %v1538
      %v1540 = vpop.f32.mrf.mxu0
      %v1541 = vpop.f32.mrf.mxu0
      %v1542 = vadd.f32 0.0, %v1541
      %v1543 = vpop.f32.mrf.mxu0
      %1544 = vmatprep.mubr.bf16.mxu0 0
      %1545 = vmatmul.mubr.bf16.gmra.mxu0 %v1430
      %v1546 = vpop.f32.mrf.mxu0
      %v1547 = vadd.f32 0.0, %v1546
      %v1548 = vpop.f32.mrf.mxu0
      %v1549 = vpop.f32.mrf.mxu0
      %v1550 = vadd.f32 0.0, %v1549
      %v1551 = vpop.f32.mrf.mxu0
      %1552 = vmatprep.mubr.bf16.mxu0 0
      %1553 = vmatmul.mubr.bf16.gmra.mxu0 %v1433
      %v1554 = vpop.f32.mrf.mxu0
      %v1555 = vadd.f32 0.0, %v1554
      %v1556 = vpop.f32.mrf.mxu0
      %v1557 = vpop.f32.mrf.mxu0
      %v1558 = vadd.f32 0.0, %v1557
      %v1559 = vpop.f32.mrf.mxu0
      %1560 = vmatprep.mubr.bf16.mxu0 0
      %1561 = vmatmul.mubr.bf16.gmra.mxu0 %v1436
      %v1562 = vpop.f32.mrf.mxu0
      %v1563 = vadd.f32 0.0, %v1562
      %v1564 = vpop.f32.mrf.mxu0
      %v1565 = vpop.f32.mrf.mxu0
      %v1566 = vadd.f32 0.0, %v1565
      %v1567 = vpop.f32.mrf.mxu0
      %1568 = vmatprep.mubr.bf16.mxu0 0
      %1569 = vmatmul.mubr.bf16.gmra.mxu0 %v1439
      %v1570 = vpop.f32.mrf.mxu0
      %v1571 = vadd.f32 0.0, %v1570
      %v1572 = vpop.f32.mrf.mxu0
      %v1573 = vpop.f32.mrf.mxu0
      %v1574 = vadd.f32 0.0, %v1573
      %v1575 = vpop.f32.mrf.mxu0
      %1576 = vmatprep.mubr.bf16.mxu0 0
      %1577 = vmatmul.mubr.bf16.gmra.mxu0 %v1442
      %v1578 = vpop.f32.mrf.mxu0
      %v1579 = vadd.f32 0.0, %v1578
      %v1580 = vpop.f32.mrf.mxu0
      %v1581 = vpop.f32.mrf.mxu0
      %v1582 = vadd.f32 0.0, %v1581
      %v1583 = vpop.f32.mrf.mxu0
      %1584 = vmatprep.mubr.bf16.mxu0 0
      %1585 = vmatmul.mubr.bf16.gmra.mxu0 %v1445
      %v1586 = vpop.f32.mrf.mxu0
      %v1587 = vadd.f32 0.0, %v1586
      %v1588 = vpop.f32.mrf.mxu0
      %v1589 = vpop.f32.mrf.mxu0
      %v1590 = vadd.f32 0.0, %v1589
      %v1591 = vpop.f32.mrf.mxu0
      %1592 = vmatprep.mubr.bf16.mxu0 0
      %1593 = vmatmul.mubr.bf16.gmra.mxu0 %v1448
      %v1594 = vpop.f32.mrf.mxu0
      %v1595 = vadd.f32 0.0, %v1594
      %v1596 = vpop.f32.mrf.mxu0
      %v1597 = vpop.f32.mrf.mxu0
      %v1598 = vadd.f32 0.0, %v1597
      %v1599 = vpop.f32.mrf.mxu0
      %1600 = vmatprep.mubr.bf16.mxu0 0
      %1601 = vmatmul.mubr.bf16.gmra.mxu0 %v1451
      %v1602 = vpop.f32.mrf.mxu0
      %v1603 = vadd.f32 0.0, %v1602
      %v1604 = vpop.f32.mrf.mxu0
      %v1605 = vpop.f32.mrf.mxu0
      %v1606 = vadd.f32 0.0, %v1605
      %v1607 = vpop.f32.mrf.mxu0
      %1608 = vmatprep.mubr.bf16.mxu0 0
      %1609 = vmatmul.mubr.bf16.gmra.mxu0 %v1454
      %v1610 = vpop.f32.mrf.mxu0
      %v1611 = vadd.f32 0.0, %v1610
      %v1612 = vpop.f32.mrf.mxu0
      %v1613 = vpop.f32.mrf.mxu0
      %v1614 = vadd.f32 0.0, %v1613
      %v1615 = vpop.f32.mrf.mxu0
      %1616 = vdwg.mxu0
      %v1617 = vadd.f32 %v1094, %v1491
      %v1618 = vadd.f32 %v1097, %v1494
      %v1619 = vadd.f32 %v1102, %v1499
      %v1620 = vadd.f32 %v1105, %v1502
      %v1621 = vadd.f32 %v1110, %v1507
      %v1622 = vadd.f32 %v1113, %v1510
      %v1623 = vadd.f32 %v1118, %v1515
      %v1624 = vadd.f32 %v1121, %v1518
      %v1625 = vadd.f32 %v1126, %v1523
      %v1626 = vadd.f32 %v1129, %v1526
      %v1627 = vadd.f32 %v1134, %v1531
      %v1628 = vadd.f32 %v1137, %v1534
      %v1629 = vadd.f32 %v1142, %v1539
      %v1630 = vadd.f32 %v1145, %v1542
      %v1631 = vadd.f32 %v1150, %v1547
      %v1632 = vadd.f32 %v1153, %v1550
      %v1633 = vadd.f32 %v1158, %v1555
      %v1634 = vadd.f32 %v1161, %v1558
      %v1635 = vadd.f32 %v1166, %v1563
      %v1636 = vadd.f32 %v1169, %v1566
      %v1637 = vadd.f32 %v1174, %v1571
      %v1638 = vadd.f32 %v1177, %v1574
      %v1639 = vadd.f32 %v1182, %v1579
      %v1640 = vadd.f32 %v1185, %v1582
      %v1641 = vadd.f32 %v1190, %v1587
      %v1642 = vadd.f32 %v1193, %v1590
      %v1643 = vadd.f32 %v1198, %v1595
      %v1644 = vadd.f32 %v1201, %v1598
      %v1645 = vadd.f32 %v1206, %v1603
      %v1646 = vadd.f32 %v1209, %v1606
      %v1647 = vadd.f32 %v1214, %v1611
      %v1648 = vadd.f32 %v1217, %v1614
      %s1649 = scalar_lea.vmem %s1, 24
      %v1650 = vld [vmem:[%s1649] sm:$0xf]
      %v1651 = vld [vmem:[%s1649 + $0x4] sm:$0xf]
      %v1654 = vunpack.c.l.b16 %v263
      %v1655 = vunpack.c.l.b16 %v264
      %v1656 = vpack.c.b16 %v1655, %v1654
      %v1659 = vunpack.c.l.b16 %v1650
      %v1660 = vunpack.c.l.b16 %v1651
      %v1661 = vpack.c.b16 %v1660, %v1659
      %v1664 = vsel %vm715, %v1656, 0
      %1666 = vmatprep.subr.bf16.mxu0 0
      %1667 = vmatpush1.bf16.msra.mxu0 0
      %1668 = vmatprep.subr.bf16.mxu0 0
      %1669 = vmatpush1.bf16.msra.mxu0 0
      %1670 = vmatprep.subr.bf16.mxu0 0
      %1671 = vmatpush1.bf16.msra.mxu0 0
      %1672 = vmatprep.subr.bf16.mxu0 0
      %1673 = vmatpush1.bf16.msra.mxu0 0
      %1674 = vmatprep.subr.bf16.mxu0 0
      %1675 = vmatpush1.bf16.msra.mxu0 0
      %1676 = vmatprep.subr.bf16.mxu0 0
      %1677 = vmatpush1.bf16.msra.mxu0 0
      %1678 = vmatprep.subr.bf16.mxu0 0
      %1679 = vmatpush1.bf16.msra.mxu0 0
      %1680 = vmatprep.subr.bf16.mxu0 0
      %1681 = vmatpush1.bf16.msra.mxu0 %v1661
      %1682 = vmatprep.subr.bf16.mxu0 0
      %1683 = vmatpush2.bf16.msra.mxu0 0
      %1684 = vmatprep.subr.bf16.mxu0 0
      %1685 = vmatpush2.bf16.msra.mxu0 0
      %1686 = vmatprep.subr.bf16.mxu0 0
      %1687 = vmatpush2.bf16.msra.mxu0 0
      %1688 = vmatprep.subr.bf16.mxu0 0
      %1689 = vmatpush2.bf16.msra.mxu0 0
      %1690 = vmatprep.subr.bf16.mxu0 0
      %1691 = vmatpush2.bf16.msra.mxu0 0
      %1692 = vmatprep.subr.bf16.mxu0 0
      %1693 = vmatpush2.bf16.msra.mxu0 0
      %1694 = vmatprep.subr.bf16.mxu0 0
      %1695 = vmatpush2.bf16.msra.mxu0 0
      %1696 = vmatprep.subr.bf16.mxu0 0
      %1697 = vmatpush2.bf16.msra.mxu0 0
      %1698 = vmatprep.mubr.bf16.mxu0 0
      %1699 = vmatmul.mubr.bf16.gmra.mxu0 %v1015
      %v1700 = vpop.f32.mrf.mxu0
      %v1701 = vadd.f32 0.0, %v1700
      %v1702 = vpop.f32.mrf.mxu0
      %v1703 = vpop.f32.mrf.mxu0
      %v1704 = vadd.f32 0.0, %v1703
      %v1705 = vpop.f32.mrf.mxu0
      %1706 = vmatprep.mubr.bf16.mxu0 0
      %1707 = vmatmul.mubr.bf16.gmra.mxu0 %v1018
      %v1708 = vpop.f32.mrf.mxu0
      %v1709 = vadd.f32 0.0, %v1708
      %v1710 = vpop.f32.mrf.mxu0
      %v1711 = vpop.f32.mrf.mxu0
      %v1712 = vadd.f32 0.0, %v1711
      %v1713 = vpop.f32.mrf.mxu0
      %1714 = vmatprep.mubr.bf16.mxu0 0
      %1715 = vmatmul.mubr.bf16.gmra.mxu0 %v1021
      %v1716 = vpop.f32.mrf.mxu0
      %v1717 = vadd.f32 0.0, %v1716
      %v1718 = vpop.f32.mrf.mxu0
      %v1719 = vpop.f32.mrf.mxu0
      %v1720 = vadd.f32 0.0, %v1719
      %v1721 = vpop.f32.mrf.mxu0
      %1722 = vmatprep.mubr.bf16.mxu0 0
      %1723 = vmatmul.mubr.bf16.gmra.mxu0 %v1024
      %v1724 = vpop.f32.mrf.mxu0
      %v1725 = vadd.f32 0.0, %v1724
      %v1726 = vpop.f32.mrf.mxu0
      %v1727 = vpop.f32.mrf.mxu0
      %v1728 = vadd.f32 0.0, %v1727
      %v1729 = vpop.f32.mrf.mxu0
      %1730 = vmatprep.mubr.bf16.mxu0 0
      %1731 = vmatmul.mubr.bf16.gmra.mxu0 %v1027
      %v1732 = vpop.f32.mrf.mxu0
      %v1733 = vadd.f32 0.0, %v1732
      %v1734 = vpop.f32.mrf.mxu0
      %v1735 = vpop.f32.mrf.mxu0
      %v1736 = vadd.f32 0.0, %v1735
      %v1737 = vpop.f32.mrf.mxu0
      %1738 = vmatprep.mubr.bf16.mxu0 0
      %1739 = vmatmul.mubr.bf16.gmra.mxu0 %v1030
      %v1740 = vpop.f32.mrf.mxu0
      %v1741 = vadd.f32 0.0, %v1740
      %v1742 = vpop.f32.mrf.mxu0
      %v1743 = vpop.f32.mrf.mxu0
      %v1744 = vadd.f32 0.0, %v1743
      %v1745 = vpop.f32.mrf.mxu0
      %1746 = vmatprep.mubr.bf16.mxu0 0
      %1747 = vmatmul.mubr.bf16.gmra.mxu0 %v1033
      %v1748 = vpop.f32.mrf.mxu0
      %v1749 = vadd.f32 0.0, %v1748
      %v1750 = vpop.f32.mrf.mxu0
      %v1751 = vpop.f32.mrf.mxu0
      %v1752 = vadd.f32 0.0, %v1751
      %v1753 = vpop.f32.mrf.mxu0
      %1754 = vmatprep.mubr.bf16.mxu0 0
      %1755 = vmatmul.mubr.bf16.gmra.mxu0 %v1036
      %v1756 = vpop.f32.mrf.mxu0
      %v1757 = vadd.f32 0.0, %v1756
      %v1758 = vpop.f32.mrf.mxu0
      %v1759 = vpop.f32.mrf.mxu0
      %v1760 = vadd.f32 0.0, %v1759
      %v1761 = vpop.f32.mrf.mxu0
      %1762 = vmatprep.mubr.bf16.mxu0 0
      %1763 = vmatmul.mubr.bf16.gmra.mxu0 %v1039
      %v1764 = vpop.f32.mrf.mxu0
      %v1765 = vadd.f32 0.0, %v1764
      %v1766 = vpop.f32.mrf.mxu0
      %v1767 = vpop.f32.mrf.mxu0
      %v1768 = vadd.f32 0.0, %v1767
      %v1769 = vpop.f32.mrf.mxu0
      %1770 = vmatprep.mubr.bf16.mxu0 0
      %1771 = vmatmul.mubr.bf16.gmra.mxu0 %v1042
      %v1772 = vpop.f32.mrf.mxu0
      %v1773 = vadd.f32 0.0, %v1772
      %v1774 = vpop.f32.mrf.mxu0
      %v1775 = vpop.f32.mrf.mxu0
      %v1776 = vadd.f32 0.0, %v1775
      %v1777 = vpop.f32.mrf.mxu0
      %1778 = vmatprep.mubr.bf16.mxu0 0
      %1779 = vmatmul.mubr.bf16.gmra.mxu0 %v1045
      %v1780 = vpop.f32.mrf.mxu0
      %v1781 = vadd.f32 0.0, %v1780
      %v1782 = vpop.f32.mrf.mxu0
      %v1783 = vpop.f32.mrf.mxu0
      %v1784 = vadd.f32 0.0, %v1783
      %v1785 = vpop.f32.mrf.mxu0
      %1786 = vmatprep.mubr.bf16.mxu0 0
      %1787 = vmatmul.mubr.bf16.gmra.mxu0 %v1048
      %v1788 = vpop.f32.mrf.mxu0
      %v1789 = vadd.f32 0.0, %v1788
      %v1790 = vpop.f32.mrf.mxu0
      %v1791 = vpop.f32.mrf.mxu0
      %v1792 = vadd.f32 0.0, %v1791
      %v1793 = vpop.f32.mrf.mxu0
      %1794 = vmatprep.mubr.bf16.mxu0 0
      %1795 = vmatmul.mubr.bf16.gmra.mxu0 %v1051
      %v1796 = vpop.f32.mrf.mxu0
      %v1797 = vadd.f32 0.0, %v1796
      %v1798 = vpop.f32.mrf.mxu0
      %v1799 = vpop.f32.mrf.mxu0
      %v1800 = vadd.f32 0.0, %v1799
      %v1801 = vpop.f32.mrf.mxu0
      %1802 = vmatprep.mubr.bf16.mxu0 0
      %1803 = vmatmul.mubr.bf16.gmra.mxu0 %v1054
      %v1804 = vpop.f32.mrf.mxu0
      %v1805 = vadd.f32 0.0, %v1804
      %v1806 = vpop.f32.mrf.mxu0
      %v1807 = vpop.f32.mrf.mxu0
      %v1808 = vadd.f32 0.0, %v1807
      %v1809 = vpop.f32.mrf.mxu0
      %1810 = vmatprep.mubr.bf16.mxu0 0
      %1811 = vmatmul.mubr.bf16.gmra.mxu0 %v1057
      %v1812 = vpop.f32.mrf.mxu0
      %v1813 = vadd.f32 0.0, %v1812
      %v1814 = vpop.f32.mrf.mxu0
      %v1815 = vpop.f32.mrf.mxu0
      %v1816 = vadd.f32 0.0, %v1815
      %v1817 = vpop.f32.mrf.mxu0
      %1818 = vmatprep.mubr.bf16.mxu0 0
      %1819 = vmatmul.mubr.bf16.gmra.mxu0 %v1664
      %v1820 = vpop.f32.mrf.mxu0
      %v1821 = vadd.f32 0.0, %v1820
      %v1822 = vpop.f32.mrf.mxu0
      %v1823 = vpop.f32.mrf.mxu0
      %v1824 = vadd.f32 0.0, %v1823
      %v1825 = vpop.f32.mrf.mxu0
      %1826 = vdwg.mxu0
      %v1827 = vadd.f32 %v1617, %v1701
      %v1828 = vadd.f32 %v1618, %v1704
      %v1829 = vadd.f32 %v1619, %v1709
      %v1830 = vadd.f32 %v1620, %v1712
      %v1831 = vadd.f32 %v1621, %v1717
      %v1832 = vadd.f32 %v1622, %v1720
      %v1833 = vadd.f32 %v1623, %v1725
      %v1834 = vadd.f32 %v1624, %v1728
      %v1835 = vadd.f32 %v1625, %v1733
      %v1836 = vadd.f32 %v1626, %v1736
      %v1837 = vadd.f32 %v1627, %v1741
      %v1838 = vadd.f32 %v1628, %v1744
      %v1839 = vadd.f32 %v1629, %v1749
      %v1840 = vadd.f32 %v1630, %v1752
      %v1841 = vadd.f32 %v1631, %v1757
      %v1842 = vadd.f32 %v1632, %v1760
      %v1843 = vadd.f32 %v1633, %v1765
      %v1844 = vadd.f32 %v1634, %v1768
      %v1845 = vadd.f32 %v1635, %v1773
      %v1846 = vadd.f32 %v1636, %v1776
      %v1847 = vadd.f32 %v1637, %v1781
      %v1848 = vadd.f32 %v1638, %v1784
      %v1849 = vadd.f32 %v1639, %v1789
      %v1850 = vadd.f32 %v1640, %v1792
      %v1851 = vadd.f32 %v1641, %v1797
      %v1852 = vadd.f32 %v1642, %v1800
      %v1853 = vadd.f32 %v1643, %v1805
      %v1854 = vadd.f32 %v1644, %v1808
      %v1855 = vadd.f32 %v1645, %v1813
      %v1856 = vadd.f32 %v1646, %v1816
      %v1857 = vadd.f32 %v1647, %v1821
      %v1858 = vadd.f32 %v1648, %v1824
      %v1860 = vshrl.u32 %v263, 16
      %v1862 = vrot.slane %v1860, 4
      %v1863 = vshll.u32 %v263, 16
      %v1865 = vrot.slane %v1863, 5
      %v1866 = vor.u32 %v1862, %v1865
      %v1867 = vrot.slane %v1866, 4
      %v1869 = vshll.u32 %v264, 16
      %v1871 = vrot.slane %v1869, 5
      %v1872 = vsel %vm273, %v1867, %v1871
      %v1873 = vshrl.u32 %v264, 16
      %v1875 = vrot.slane %v1873, 4
      %v1876 = vor.u32 %v1875, %v1871
      %v1877 = vrot.slane %v1876, 4
      %v1879 = vshll.u32 %v265, 16
      %v1881 = vrot.slane %v1879, 5
      %v1882 = vsel %vm273, %v1877, %v1881
      %s1883 = scalar_lea.vmem %s1, 32
      %v1884 = vld [vmem:[%s1883] sm:$0xf]
      %v1885 = vld [vmem:[%s1883 + $0x4] sm:$0xf]
      %v1886 = vunpack.c.l.b16 %v1872
      %v1887 = vunpack.c.l.b16 %v1882
      %v1888 = vpack.c.b16 %v1887, %v1886
      %v1891 = vunpack.c.l.b16 %v1884
      %v1892 = vunpack.c.l.b16 %v1885
      %v1893 = vpack.c.b16 %v1892, %v1891
      %v1896 = vsel %vm715, %v1888, 0
      %1898 = vmatprep.subr.bf16.mxu0 0
      %1899 = vmatpush1.bf16.msra.mxu0 0
      %1900 = vmatprep.subr.bf16.mxu0 0
      %1901 = vmatpush1.bf16.msra.mxu0 0
      %1902 = vmatprep.subr.bf16.mxu0 0
      %1903 = vmatpush1.bf16.msra.mxu0 0
      %1904 = vmatprep.subr.bf16.mxu0 0
      %1905 = vmatpush1.bf16.msra.mxu0 0
      %1906 = vmatprep.subr.bf16.mxu0 0
      %1907 = vmatpush1.bf16.msra.mxu0 0
      %1908 = vmatprep.subr.bf16.mxu0 0
      %1909 = vmatpush1.bf16.msra.mxu0 0
      %1910 = vmatprep.subr.bf16.mxu0 0
      %1911 = vmatpush1.bf16.msra.mxu0 0
      %1912 = vmatprep.subr.bf16.mxu0 0
      %1913 = vmatpush1.bf16.msra.mxu0 %v1893
      %1914 = vmatprep.subr.bf16.mxu0 0
      %1915 = vmatpush2.bf16.msra.mxu0 0
      %1916 = vmatprep.subr.bf16.mxu0 0
      %1917 = vmatpush2.bf16.msra.mxu0 0
      %1918 = vmatprep.subr.bf16.mxu0 0
      %1919 = vmatpush2.bf16.msra.mxu0 0
      %1920 = vmatprep.subr.bf16.mxu0 0
      %1921 = vmatpush2.bf16.msra.mxu0 0
      %1922 = vmatprep.subr.bf16.mxu0 0
      %1923 = vmatpush2.bf16.msra.mxu0 0
      %1924 = vmatprep.subr.bf16.mxu0 0
      %1925 = vmatpush2.bf16.msra.mxu0 0
      %1926 = vmatprep.subr.bf16.mxu0 0
      %1927 = vmatpush2.bf16.msra.mxu0 0
      %1928 = vmatprep.subr.bf16.mxu0 0
      %1929 = vmatpush2.bf16.msra.mxu0 0
      %1930 = vmatprep.mubr.bf16.mxu0 0
      %1931 = vmatmul.mubr.bf16.gmra.mxu0 %v720
      %v1932 = vpop.f32.mrf.mxu0
      %v1933 = vadd.f32 0.0, %v1932
      %v1934 = vpop.f32.mrf.mxu0
      %v1935 = vpop.f32.mrf.mxu0
      %v1936 = vadd.f32 0.0, %v1935
      %v1937 = vpop.f32.mrf.mxu0
      %1938 = vmatprep.mubr.bf16.mxu0 0
      %1939 = vmatmul.mubr.bf16.gmra.mxu0 %v723
      %v1940 = vpop.f32.mrf.mxu0
      %v1941 = vadd.f32 0.0, %v1940
      %v1942 = vpop.f32.mrf.mxu0
      %v1943 = vpop.f32.mrf.mxu0
      %v1944 = vadd.f32 0.0, %v1943
      %v1945 = vpop.f32.mrf.mxu0
      %1946 = vmatprep.mubr.bf16.mxu0 0
      %1947 = vmatmul.mubr.bf16.gmra.mxu0 %v726
      %v1948 = vpop.f32.mrf.mxu0
      %v1949 = vadd.f32 0.0, %v1948
      %v1950 = vpop.f32.mrf.mxu0
      %v1951 = vpop.f32.mrf.mxu0
      %v1952 = vadd.f32 0.0, %v1951
      %v1953 = vpop.f32.mrf.mxu0
      %1954 = vmatprep.mubr.bf16.mxu0 0
      %1955 = vmatmul.mubr.bf16.gmra.mxu0 %v729
      %v1956 = vpop.f32.mrf.mxu0
      %v1957 = vadd.f32 0.0, %v1956
      %v1958 = vpop.f32.mrf.mxu0
      %v1959 = vpop.f32.mrf.mxu0
      %v1960 = vadd.f32 0.0, %v1959
      %v1961 = vpop.f32.mrf.mxu0
      %1962 = vmatprep.mubr.bf16.mxu0 0
      %1963 = vmatmul.mubr.bf16.gmra.mxu0 %v732
      %v1964 = vpop.f32.mrf.mxu0
      %v1965 = vadd.f32 0.0, %v1964
      %v1966 = vpop.f32.mrf.mxu0
      %v1967 = vpop.f32.mrf.mxu0
      %v1968 = vadd.f32 0.0, %v1967
      %v1969 = vpop.f32.mrf.mxu0
      %1970 = vmatprep.mubr.bf16.mxu0 0
      %1971 = vmatmul.mubr.bf16.gmra.mxu0 %v735
      %v1972 = vpop.f32.mrf.mxu0
      %v1973 = vadd.f32 0.0, %v1972
      %v1974 = vpop.f32.mrf.mxu0
      %v1975 = vpop.f32.mrf.mxu0
      %v1976 = vadd.f32 0.0, %v1975
      %v1977 = vpop.f32.mrf.mxu0
      %1978 = vmatprep.mubr.bf16.mxu0 0
      %1979 = vmatmul.mubr.bf16.gmra.mxu0 %v738
      %v1980 = vpop.f32.mrf.mxu0
      %v1981 = vadd.f32 0.0, %v1980
      %v1982 = vpop.f32.mrf.mxu0
      %v1983 = vpop.f32.mrf.mxu0
      %v1984 = vadd.f32 0.0, %v1983
      %v1985 = vpop.f32.mrf.mxu0
      %1986 = vmatprep.mubr.bf16.mxu0 0
      %1987 = vmatmul.mubr.bf16.gmra.mxu0 %v741
      %v1988 = vpop.f32.mrf.mxu0
      %v1989 = vadd.f32 0.0, %v1988
      %v1990 = vpop.f32.mrf.mxu0
      %v1991 = vpop.f32.mrf.mxu0
      %v1992 = vadd.f32 0.0, %v1991
      %v1993 = vpop.f32.mrf.mxu0
      %1994 = vmatprep.mubr.bf16.mxu0 0
      %1995 = vmatmul.mubr.bf16.gmra.mxu0 %v744
      %v1996 = vpop.f32.mrf.mxu0
      %v1997 = vadd.f32 0.0, %v1996
      %v1998 = vpop.f32.mrf.mxu0
      %v1999 = vpop.f32.mrf.mxu0
      %v2000 = vadd.f32 0.0, %v1999
      %v2001 = vpop.f32.mrf.mxu0
      %2002 = vmatprep.mubr.bf16.mxu0 0
      %2003 = vmatmul.mubr.bf16.gmra.mxu0 %v747
      %v2004 = vpop.f32.mrf.mxu0
      %v2005 = vadd.f32 0.0, %v2004
      %v2006 = vpop.f32.mrf.mxu0
      %v2007 = vpop.f32.mrf.mxu0
      %v2008 = vadd.f32 0.0, %v2007
      %v2009 = vpop.f32.mrf.mxu0
      %2010 = vmatprep.mubr.bf16.mxu0 0
      %2011 = vmatmul.mubr.bf16.gmra.mxu0 %v750
      %v2012 = vpop.f32.mrf.mxu0
      %v2013 = vadd.f32 0.0, %v2012
      %v2014 = vpop.f32.mrf.mxu0
      %v2015 = vpop.f32.mrf.mxu0
      %v2016 = vadd.f32 0.0, %v2015
      %v2017 = vpop.f32.mrf.mxu0
      %2018 = vmatprep.mubr.bf16.mxu0 0
      %2019 = vmatmul.mubr.bf16.gmra.mxu0 %v753
      %v2020 = vpop.f32.mrf.mxu0
      %v2021 = vadd.f32 0.0, %v2020
      %v2022 = vpop.f32.mrf.mxu0
      %v2023 = vpop.f32.mrf.mxu0
      %v2024 = vadd.f32 0.0, %v2023
      %v2025 = vpop.f32.mrf.mxu0
      %2026 = vmatprep.mubr.bf16.mxu0 0
      %2027 = vmatmul.mubr.bf16.gmra.mxu0 %v756
      %v2028 = vpop.f32.mrf.mxu0
      %v2029 = vadd.f32 0.0, %v2028
      %v2030 = vpop.f32.mrf.mxu0
      %v2031 = vpop.f32.mrf.mxu0
      %v2032 = vadd.f32 0.0, %v2031
      %v2033 = vpop.f32.mrf.mxu0
      %2034 = vmatprep.mubr.bf16.mxu0 0
      %2035 = vmatmul.mubr.bf16.gmra.mxu0 %v759
      %v2036 = vpop.f32.mrf.mxu0
      %v2037 = vadd.f32 0.0, %v2036
      %v2038 = vpop.f32.mrf.mxu0
      %v2039 = vpop.f32.mrf.mxu0
      %v2040 = vadd.f32 0.0, %v2039
      %v2041 = vpop.f32.mrf.mxu0
      %2042 = vmatprep.mubr.bf16.mxu0 0
      %2043 = vmatmul.mubr.bf16.gmra.mxu0 %v762
      %v2044 = vpop.f32.mrf.mxu0
      %v2045 = vadd.f32 0.0, %v2044
      %v2046 = vpop.f32.mrf.mxu0
      %v2047 = vpop.f32.mrf.mxu0
      %v2048 = vadd.f32 0.0, %v2047
      %v2049 = vpop.f32.mrf.mxu0
      %2050 = vmatprep.mubr.bf16.mxu0 0
      %2051 = vmatmul.mubr.bf16.gmra.mxu0 %v1896
      %v2052 = vpop.f32.mrf.mxu0
      %v2053 = vadd.f32 0.0, %v2052
      %v2054 = vpop.f32.mrf.mxu0
      %v2055 = vpop.f32.mrf.mxu0
      %v2056 = vadd.f32 0.0, %v2055
      %v2057 = vpop.f32.mrf.mxu0
      %2058 = vdwg.mxu0
      %v2059 = vadd.f32 %v1827, %v1933
      %v2060 = vadd.f32 %v1828, %v1936
      %v2061 = vadd.f32 %v1829, %v1941
      %v2062 = vadd.f32 %v1830, %v1944
      %v2063 = vadd.f32 %v1831, %v1949
      %v2064 = vadd.f32 %v1832, %v1952
      %v2065 = vadd.f32 %v1833, %v1957
      %v2066 = vadd.f32 %v1834, %v1960
      %v2067 = vadd.f32 %v1835, %v1965
      %v2068 = vadd.f32 %v1836, %v1968
      %v2069 = vadd.f32 %v1837, %v1973
      %v2070 = vadd.f32 %v1838, %v1976
      %v2071 = vadd.f32 %v1839, %v1981
      %v2072 = vadd.f32 %v1840, %v1984
      %v2073 = vadd.f32 %v1841, %v1989
      %v2074 = vadd.f32 %v1842, %v1992
      %v2075 = vadd.f32 %v1843, %v1997
      %v2076 = vadd.f32 %v1844, %v2000
      %v2077 = vadd.f32 %v1845, %v2005
      %v2078 = vadd.f32 %v1846, %v2008
      %v2079 = vadd.f32 %v1847, %v2013
      %v2080 = vadd.f32 %v1848, %v2016
      %v2081 = vadd.f32 %v1849, %v2021
      %v2082 = vadd.f32 %v1850, %v2024
      %v2083 = vadd.f32 %v1851, %v2029
      %v2084 = vadd.f32 %v1852, %v2032
      %v2085 = vadd.f32 %v1853, %v2037
      %v2086 = vadd.f32 %v1854, %v2040
      %v2087 = vadd.f32 %v1855, %v2045
      %v2088 = vadd.f32 %v1856, %v2048
      %v2089 = vadd.f32 %v1857, %v2053
      %v2090 = vadd.f32 %v1858, %v2056
      %v2092 = vrot.slane %v263, 5
      %v2093 = vrot.slane %v2092, 4
      %v2094 = vrot.slane %v264, 5
      %v2095 = vsel %vm1238, %v2093, %v2094
      %v2096 = vrot.slane %v2094, 4
      %v2097 = vrot.slane %v265, 5
      %v2098 = vsel %vm1238, %v2096, %v2097
      %s2099 = scalar_lea.vmem %s1, 40
      %v2100 = vld [vmem:[%s2099] sm:$0xf]
      %v2101 = vld [vmem:[%s2099 + $0x4] sm:$0xf]
      %v2102 = vunpack.c.l.b16 %v2095
      %v2103 = vunpack.c.l.b16 %v2098
      %v2104 = vpack.c.b16 %v2103, %v2102
      %v2107 = vunpack.c.l.b16 %v2100
      %v2108 = vunpack.c.l.b16 %v2101
      %v2109 = vpack.c.b16 %v2108, %v2107
      %v2112 = vsel %vm715, %v2104, 0
      %2114 = vmatprep.subr.bf16.mxu0 0
      %2115 = vmatpush1.bf16.msra.mxu0 0
      %2116 = vmatprep.subr.bf16.mxu0 0
      %2117 = vmatpush1.bf16.msra.mxu0 0
      %2118 = vmatprep.subr.bf16.mxu0 0
      %2119 = vmatpush1.bf16.msra.mxu0 0
      %2120 = vmatprep.subr.bf16.mxu0 0
      %2121 = vmatpush1.bf16.msra.mxu0 0
      %2122 = vmatprep.subr.bf16.mxu0 0
      %2123 = vmatpush1.bf16.msra.mxu0 0
      %2124 = vmatprep.subr.bf16.mxu0 0
      %2125 = vmatpush1.bf16.msra.mxu0 0
      %2126 = vmatprep.subr.bf16.mxu0 0
      %2127 = vmatpush1.bf16.msra.mxu0 0
      %2128 = vmatprep.subr.bf16.mxu0 0
      %2129 = vmatpush1.bf16.msra.mxu0 %v2109
      %2130 = vmatprep.subr.bf16.mxu0 0
      %2131 = vmatpush2.bf16.msra.mxu0 0
      %2132 = vmatprep.subr.bf16.mxu0 0
      %2133 = vmatpush2.bf16.msra.mxu0 0
      %2134 = vmatprep.subr.bf16.mxu0 0
      %2135 = vmatpush2.bf16.msra.mxu0 0
      %2136 = vmatprep.subr.bf16.mxu0 0
      %2137 = vmatpush2.bf16.msra.mxu0 0
      %2138 = vmatprep.subr.bf16.mxu0 0
      %2139 = vmatpush2.bf16.msra.mxu0 0
      %2140 = vmatprep.subr.bf16.mxu0 0
      %2141 = vmatpush2.bf16.msra.mxu0 0
      %2142 = vmatprep.subr.bf16.mxu0 0
      %2143 = vmatpush2.bf16.msra.mxu0 0
      %2144 = vmatprep.subr.bf16.mxu0 0
      %2145 = vmatpush2.bf16.msra.mxu0 0
      %2146 = vmatprep.mubr.bf16.mxu0 0
      %2147 = vmatmul.mubr.bf16.gmra.mxu0 %v1412
      %v2148 = vpop.f32.mrf.mxu0
      %v2149 = vadd.f32 0.0, %v2148
      %v2150 = vpop.f32.mrf.mxu0
      %v2151 = vpop.f32.mrf.mxu0
      %v2152 = vadd.f32 0.0, %v2151
      %v2153 = vpop.f32.mrf.mxu0
      %2154 = vmatprep.mubr.bf16.mxu0 0
      %2155 = vmatmul.mubr.bf16.gmra.mxu0 %v1415
      %v2156 = vpop.f32.mrf.mxu0
      %v2157 = vadd.f32 0.0, %v2156
      %v2158 = vpop.f32.mrf.mxu0
      %v2159 = vpop.f32.mrf.mxu0
      %v2160 = vadd.f32 0.0, %v2159
      %v2161 = vpop.f32.mrf.mxu0
      %2162 = vmatprep.mubr.bf16.mxu0 0
      %2163 = vmatmul.mubr.bf16.gmra.mxu0 %v1418
      %v2164 = vpop.f32.mrf.mxu0
      %v2165 = vadd.f32 0.0, %v2164
      %v2166 = vpop.f32.mrf.mxu0
      %v2167 = vpop.f32.mrf.mxu0
      %v2168 = vadd.f32 0.0, %v2167
      %v2169 = vpop.f32.mrf.mxu0
      %2170 = vmatprep.mubr.bf16.mxu0 0
      %2171 = vmatmul.mubr.bf16.gmra.mxu0 %v1421
      %v2172 = vpop.f32.mrf.mxu0
      %v2173 = vadd.f32 0.0, %v2172
      %v2174 = vpop.f32.mrf.mxu0
      %v2175 = vpop.f32.mrf.mxu0
      %v2176 = vadd.f32 0.0, %v2175
      %v2177 = vpop.f32.mrf.mxu0
      %2178 = vmatprep.mubr.bf16.mxu0 0
      %2179 = vmatmul.mubr.bf16.gmra.mxu0 %v1424
      %v2180 = vpop.f32.mrf.mxu0
      %v2181 = vadd.f32 0.0, %v2180
      %v2182 = vpop.f32.mrf.mxu0
      %v2183 = vpop.f32.mrf.mxu0
      %v2184 = vadd.f32 0.0, %v2183
      %v2185 = vpop.f32.mrf.mxu0
      %2186 = vmatprep.mubr.bf16.mxu0 0
      %2187 = vmatmul.mubr.bf16.gmra.mxu0 %v1427
      %v2188 = vpop.f32.mrf.mxu0
      %v2189 = vadd.f32 0.0, %v2188
      %v2190 = vpop.f32.mrf.mxu0
      %v2191 = vpop.f32.mrf.mxu0
      %v2192 = vadd.f32 0.0, %v2191
      %v2193 = vpop.f32.mrf.mxu0
      %2194 = vmatprep.mubr.bf16.mxu0 0
      %2195 = vmatmul.mubr.bf16.gmra.mxu0 %v1430
      %v2196 = vpop.f32.mrf.mxu0
      %v2197 = vadd.f32 0.0, %v2196
      %v2198 = vpop.f32.mrf.mxu0
      %v2199 = vpop.f32.mrf.mxu0
      %v2200 = vadd.f32 0.0, %v2199
      %v2201 = vpop.f32.mrf.mxu0
      %2202 = vmatprep.mubr.bf16.mxu0 0
      %2203 = vmatmul.mubr.bf16.gmra.mxu0 %v1433
      %v2204 = vpop.f32.mrf.mxu0
      %v2205 = vadd.f32 0.0, %v2204
      %v2206 = vpop.f32.mrf.mxu0
      %v2207 = vpop.f32.mrf.mxu0
      %v2208 = vadd.f32 0.0, %v2207
      %v2209 = vpop.f32.mrf.mxu0
      %2210 = vmatprep.mubr.bf16.mxu0 0
      %2211 = vmatmul.mubr.bf16.gmra.mxu0 %v1436
      %v2212 = vpop.f32.mrf.mxu0
      %v2213 = vadd.f32 0.0, %v2212
      %v2214 = vpop.f32.mrf.mxu0
      %v2215 = vpop.f32.mrf.mxu0
      %v2216 = vadd.f32 0.0, %v2215
      %v2217 = vpop.f32.mrf.mxu0
      %2218 = vmatprep.mubr.bf16.mxu0 0
      %2219 = vmatmul.mubr.bf16.gmra.mxu0 %v1439
      %v2220 = vpop.f32.mrf.mxu0
      %v2221 = vadd.f32 0.0, %v2220
      %v2222 = vpop.f32.mrf.mxu0
      %v2223 = vpop.f32.mrf.mxu0
      %v2224 = vadd.f32 0.0, %v2223
      %v2225 = vpop.f32.mrf.mxu0
      %2226 = vmatprep.mubr.bf16.mxu0 0
      %2227 = vmatmul.mubr.bf16.gmra.mxu0 %v1442
      %v2228 = vpop.f32.mrf.mxu0
      %v2229 = vadd.f32 0.0, %v2228
      %v2230 = vpop.f32.mrf.mxu0
      %v2231 = vpop.f32.mrf.mxu0
      %v2232 = vadd.f32 0.0, %v2231
      %v2233 = vpop.f32.mrf.mxu0
      %2234 = vmatprep.mubr.bf16.mxu0 0
      %2235 = vmatmul.mubr.bf16.gmra.mxu0 %v1445
      %v2236 = vpop.f32.mrf.mxu0
      %v2237 = vadd.f32 0.0, %v2236
      %v2238 = vpop.f32.mrf.mxu0
      %v2239 = vpop.f32.mrf.mxu0
      %v2240 = vadd.f32 0.0, %v2239
      %v2241 = vpop.f32.mrf.mxu0
      %2242 = vmatprep.mubr.bf16.mxu0 0
      %2243 = vmatmul.mubr.bf16.gmra.mxu0 %v1448
      %v2244 = vpop.f32.mrf.mxu0
      %v2245 = vadd.f32 0.0, %v2244
      %v2246 = vpop.f32.mrf.mxu0
      %v2247 = vpop.f32.mrf.mxu0
      %v2248 = vadd.f32 0.0, %v2247
      %v2249 = vpop.f32.mrf.mxu0
      %2250 = vmatprep.mubr.bf16.mxu0 0
      %2251 = vmatmul.mubr.bf16.gmra.mxu0 %v1451
      %v2252 = vpop.f32.mrf.mxu0
      %v2253 = vadd.f32 0.0, %v2252
      %v2254 = vpop.f32.mrf.mxu0
      %v2255 = vpop.f32.mrf.mxu0
      %v2256 = vadd.f32 0.0, %v2255
      %v2257 = vpop.f32.mrf.mxu0
      %2258 = vmatprep.mubr.bf16.mxu0 0
      %2259 = vmatmul.mubr.bf16.gmra.mxu0 %v1454
      %v2260 = vpop.f32.mrf.mxu0
      %v2261 = vadd.f32 0.0, %v2260
      %v2262 = vpop.f32.mrf.mxu0
      %v2263 = vpop.f32.mrf.mxu0
      %v2264 = vadd.f32 0.0, %v2263
      %v2265 = vpop.f32.mrf.mxu0
      %2266 = vmatprep.mubr.bf16.mxu0 0
      %2267 = vmatmul.mubr.bf16.gmra.mxu0 %v2112
      %v2268 = vpop.f32.mrf.mxu0
      %v2269 = vadd.f32 0.0, %v2268
      %v2270 = vpop.f32.mrf.mxu0
      %v2271 = vpop.f32.mrf.mxu0
      %v2272 = vadd.f32 0.0, %v2271
      %v2273 = vpop.f32.mrf.mxu0
      %2274 = vdwg.mxu0
      %v2275 = vadd.f32 %v2059, %v2149
      %v2276 = vadd.f32 %v2060, %v2152
      %v2277 = vadd.f32 %v2061, %v2157
      %v2278 = vadd.f32 %v2062, %v2160
      %v2279 = vadd.f32 %v2063, %v2165
      %v2280 = vadd.f32 %v2064, %v2168
      %v2281 = vadd.f32 %v2065, %v2173
      %v2282 = vadd.f32 %v2066, %v2176
      %v2283 = vadd.f32 %v2067, %v2181
      %v2284 = vadd.f32 %v2068, %v2184
      %v2285 = vadd.f32 %v2069, %v2189
      %v2286 = vadd.f32 %v2070, %v2192
      %v2287 = vadd.f32 %v2071, %v2197
      %v2288 = vadd.f32 %v2072, %v2200
      %v2289 = vadd.f32 %v2073, %v2205
      %v2290 = vadd.f32 %v2074, %v2208
      %v2291 = vadd.f32 %v2075, %v2213
      %v2292 = vadd.f32 %v2076, %v2216
      %v2293 = vadd.f32 %v2077, %v2221
      %v2294 = vadd.f32 %v2078, %v2224
      %v2295 = vadd.f32 %v2079, %v2229
      %v2296 = vadd.f32 %v2080, %v2232
      %v2297 = vadd.f32 %v2081, %v2237
      %v2298 = vadd.f32 %v2082, %v2240
      %v2299 = vadd.f32 %v2083, %v2245
      %v2300 = vadd.f32 %v2084, %v2248
      %v2301 = vadd.f32 %v2085, %v2253
      %v2302 = vadd.f32 %v2086, %v2256
      %v2303 = vadd.f32 %v2087, %v2261
      %v2304 = vadd.f32 %v2088, %v2264
      %v2305 = vadd.f32 %v2089, %v2269
      %v2306 = vadd.f32 %v2090, %v2272
      %s2307 = scalar_lea.vmem %s1, 48
      %v2308 = vld [vmem:[%s2307] sm:$0xf]
      %v2309 = vld [vmem:[%s2307 + $0x4] sm:$0xf]
      %v2312 = vunpack.c.l.b16 %v266
      %v2313 = vunpack.c.l.b16 %v267
      %v2314 = vpack.c.b16 %v2313, %v2312
      %v2317 = vunpack.c.l.b16 %v2308
      %v2318 = vunpack.c.l.b16 %v2309
      %v2319 = vpack.c.b16 %v2318, %v2317
      %v2322 = vsel %vm715, %v2314, 0
      %2324 = vmatprep.subr.bf16.mxu0 0
      %2325 = vmatpush1.bf16.msra.mxu0 0
      %2326 = vmatprep.subr.bf16.mxu0 0
      %2327 = vmatpush1.bf16.msra.mxu0 0
      %2328 = vmatprep.subr.bf16.mxu0 0
      %2329 = vmatpush1.bf16.msra.mxu0 0
      %2330 = vmatprep.subr.bf16.mxu0 0
      %2331 = vmatpush1.bf16.msra.mxu0 0
      %2332 = vmatprep.subr.bf16.mxu0 0
      %2333 = vmatpush1.bf16.msra.mxu0 0
      %2334 = vmatprep.subr.bf16.mxu0 0
      %2335 = vmatpush1.bf16.msra.mxu0 0
      %2336 = vmatprep.subr.bf16.mxu0 0
      %2337 = vmatpush1.bf16.msra.mxu0 0
      %2338 = vmatprep.subr.bf16.mxu0 0
      %2339 = vmatpush1.bf16.msra.mxu0 %v2319
      %2340 = vmatprep.subr.bf16.mxu0 0
      %2341 = vmatpush2.bf16.msra.mxu0 0
      %2342 = vmatprep.subr.bf16.mxu0 0
      %2343 = vmatpush2.bf16.msra.mxu0 0
      %2344 = vmatprep.subr.bf16.mxu0 0
      %2345 = vmatpush2.bf16.msra.mxu0 0
      %2346 = vmatprep.subr.bf16.mxu0 0
      %2347 = vmatpush2.bf16.msra.mxu0 0
      %2348 = vmatprep.subr.bf16.mxu0 0
      %2349 = vmatpush2.bf16.msra.mxu0 0
      %2350 = vmatprep.subr.bf16.mxu0 0
      %2351 = vmatpush2.bf16.msra.mxu0 0
      %2352 = vmatprep.subr.bf16.mxu0 0
      %2353 = vmatpush2.bf16.msra.mxu0 0
      %2354 = vmatprep.subr.bf16.mxu0 0
      %2355 = vmatpush2.bf16.msra.mxu0 0
      %2356 = vmatprep.mubr.bf16.mxu0 0
      %2357 = vmatmul.mubr.bf16.gmra.mxu0 %v1018
      %v2358 = vpop.f32.mrf.mxu0
      %v2359 = vadd.f32 0.0, %v2358
      %v2360 = vpop.f32.mrf.mxu0
      %v2361 = vpop.f32.mrf.mxu0
      %v2362 = vadd.f32 0.0, %v2361
      %v2363 = vpop.f32.mrf.mxu0
      %2364 = vmatprep.mubr.bf16.mxu0 0
      %2365 = vmatmul.mubr.bf16.gmra.mxu0 %v1021
      %v2366 = vpop.f32.mrf.mxu0
      %v2367 = vadd.f32 0.0, %v2366
      %v2368 = vpop.f32.mrf.mxu0
      %v2369 = vpop.f32.mrf.mxu0
      %v2370 = vadd.f32 0.0, %v2369
      %v2371 = vpop.f32.mrf.mxu0
      %2372 = vmatprep.mubr.bf16.mxu0 0
      %2373 = vmatmul.mubr.bf16.gmra.mxu0 %v1024
      %v2374 = vpop.f32.mrf.mxu0
      %v2375 = vadd.f32 0.0, %v2374
      %v2376 = vpop.f32.mrf.mxu0
      %v2377 = vpop.f32.mrf.mxu0
      %v2378 = vadd.f32 0.0, %v2377
      %v2379 = vpop.f32.mrf.mxu0
      %2380 = vmatprep.mubr.bf16.mxu0 0
      %2381 = vmatmul.mubr.bf16.gmra.mxu0 %v1027
      %v2382 = vpop.f32.mrf.mxu0
      %v2383 = vadd.f32 0.0, %v2382
      %v2384 = vpop.f32.mrf.mxu0
      %v2385 = vpop.f32.mrf.mxu0
      %v2386 = vadd.f32 0.0, %v2385
      %v2387 = vpop.f32.mrf.mxu0
      %2388 = vmatprep.mubr.bf16.mxu0 0
      %2389 = vmatmul.mubr.bf16.gmra.mxu0 %v1030
      %v2390 = vpop.f32.mrf.mxu0
      %v2391 = vadd.f32 0.0, %v2390
      %v2392 = vpop.f32.mrf.mxu0
      %v2393 = vpop.f32.mrf.mxu0
      %v2394 = vadd.f32 0.0, %v2393
      %v2395 = vpop.f32.mrf.mxu0
      %2396 = vmatprep.mubr.bf16.mxu0 0
      %2397 = vmatmul.mubr.bf16.gmra.mxu0 %v1033
      %v2398 = vpop.f32.mrf.mxu0
      %v2399 = vadd.f32 0.0, %v2398
      %v2400 = vpop.f32.mrf.mxu0
      %v2401 = vpop.f32.mrf.mxu0
      %v2402 = vadd.f32 0.0, %v2401
      %v2403 = vpop.f32.mrf.mxu0
      %2404 = vmatprep.mubr.bf16.mxu0 0
      %2405 = vmatmul.mubr.bf16.gmra.mxu0 %v1036
      %v2406 = vpop.f32.mrf.mxu0
      %v2407 = vadd.f32 0.0, %v2406
      %v2408 = vpop.f32.mrf.mxu0
      %v2409 = vpop.f32.mrf.mxu0
      %v2410 = vadd.f32 0.0, %v2409
      %v2411 = vpop.f32.mrf.mxu0
      %2412 = vmatprep.mubr.bf16.mxu0 0
      %2413 = vmatmul.mubr.bf16.gmra.mxu0 %v1039
      %v2414 = vpop.f32.mrf.mxu0
      %v2415 = vadd.f32 0.0, %v2414
      %v2416 = vpop.f32.mrf.mxu0
      %v2417 = vpop.f32.mrf.mxu0
      %v2418 = vadd.f32 0.0, %v2417
      %v2419 = vpop.f32.mrf.mxu0
      %2420 = vmatprep.mubr.bf16.mxu0 0
      %2421 = vmatmul.mubr.bf16.gmra.mxu0 %v1042
      %v2422 = vpop.f32.mrf.mxu0
      %v2423 = vadd.f32 0.0, %v2422
      %v2424 = vpop.f32.mrf.mxu0
      %v2425 = vpop.f32.mrf.mxu0
      %v2426 = vadd.f32 0.0, %v2425
      %v2427 = vpop.f32.mrf.mxu0
      %2428 = vmatprep.mubr.bf16.mxu0 0
      %2429 = vmatmul.mubr.bf16.gmra.mxu0 %v1045
      %v2430 = vpop.f32.mrf.mxu0
      %v2431 = vadd.f32 0.0, %v2430
      %v2432 = vpop.f32.mrf.mxu0
      %v2433 = vpop.f32.mrf.mxu0
      %v2434 = vadd.f32 0.0, %v2433
      %v2435 = vpop.f32.mrf.mxu0
      %2436 = vmatprep.mubr.bf16.mxu0 0
      %2437 = vmatmul.mubr.bf16.gmra.mxu0 %v1048
      %v2438 = vpop.f32.mrf.mxu0
      %v2439 = vadd.f32 0.0, %v2438
      %v2440 = vpop.f32.mrf.mxu0
      %v2441 = vpop.f32.mrf.mxu0
      %v2442 = vadd.f32 0.0, %v2441
      %v2443 = vpop.f32.mrf.mxu0
      %2444 = vmatprep.mubr.bf16.mxu0 0
      %2445 = vmatmul.mubr.bf16.gmra.mxu0 %v1051
      %v2446 = vpop.f32.mrf.mxu0
      %v2447 = vadd.f32 0.0, %v2446
      %v2448 = vpop.f32.mrf.mxu0
      %v2449 = vpop.f32.mrf.mxu0
      %v2450 = vadd.f32 0.0, %v2449
      %v2451 = vpop.f32.mrf.mxu0
      %2452 = vmatprep.mubr.bf16.mxu0 0
      %2453 = vmatmul.mubr.bf16.gmra.mxu0 %v1054
      %v2454 = vpop.f32.mrf.mxu0
      %v2455 = vadd.f32 0.0, %v2454
      %v2456 = vpop.f32.mrf.mxu0
      %v2457 = vpop.f32.mrf.mxu0
      %v2458 = vadd.f32 0.0, %v2457
      %v2459 = vpop.f32.mrf.mxu0
      %2460 = vmatprep.mubr.bf16.mxu0 0
      %2461 = vmatmul.mubr.bf16.gmra.mxu0 %v1057
      %v2462 = vpop.f32.mrf.mxu0
      %v2463 = vadd.f32 0.0, %v2462
      %v2464 = vpop.f32.mrf.mxu0
      %v2465 = vpop.f32.mrf.mxu0
      %v2466 = vadd.f32 0.0, %v2465
      %v2467 = vpop.f32.mrf.mxu0
      %2468 = vmatprep.mubr.bf16.mxu0 0
      %2469 = vmatmul.mubr.bf16.gmra.mxu0 %v1664
      %v2470 = vpop.f32.mrf.mxu0
      %v2471 = vadd.f32 0.0, %v2470
      %v2472 = vpop.f32.mrf.mxu0
      %v2473 = vpop.f32.mrf.mxu0
      %v2474 = vadd.f32 0.0, %v2473
      %v2475 = vpop.f32.mrf.mxu0
      %2476 = vmatprep.mubr.bf16.mxu0 0
      %2477 = vmatmul.mubr.bf16.gmra.mxu0 %v2322
      %v2478 = vpop.f32.mrf.mxu0
      %v2479 = vadd.f32 0.0, %v2478
      %v2480 = vpop.f32.mrf.mxu0
      %v2481 = vpop.f32.mrf.mxu0
      %v2482 = vadd.f32 0.0, %v2481
      %v2483 = vpop.f32.mrf.mxu0
      %2484 = vdwg.mxu0
      %v2485 = vadd.f32 %v2275, %v2359
      %v2486 = vadd.f32 %v2276, %v2362
      %v2487 = vadd.f32 %v2277, %v2367
      %v2488 = vadd.f32 %v2278, %v2370
      %v2489 = vadd.f32 %v2279, %v2375
      %v2490 = vadd.f32 %v2280, %v2378
      %v2491 = vadd.f32 %v2281, %v2383
      %v2492 = vadd.f32 %v2282, %v2386
      %v2493 = vadd.f32 %v2283, %v2391
      %v2494 = vadd.f32 %v2284, %v2394
      %v2495 = vadd.f32 %v2285, %v2399
      %v2496 = vadd.f32 %v2286, %v2402
      %v2497 = vadd.f32 %v2287, %v2407
      %v2498 = vadd.f32 %v2288, %v2410
      %v2499 = vadd.f32 %v2289, %v2415
      %v2500 = vadd.f32 %v2290, %v2418
      %v2501 = vadd.f32 %v2291, %v2423
      %v2502 = vadd.f32 %v2292, %v2426
      %v2503 = vadd.f32 %v2293, %v2431
      %v2504 = vadd.f32 %v2294, %v2434
      %v2505 = vadd.f32 %v2295, %v2439
      %v2506 = vadd.f32 %v2296, %v2442
      %v2507 = vadd.f32 %v2297, %v2447
      %v2508 = vadd.f32 %v2298, %v2450
      %v2509 = vadd.f32 %v2299, %v2455
      %v2510 = vadd.f32 %v2300, %v2458
      %v2511 = vadd.f32 %v2301, %v2463
      %v2512 = vadd.f32 %v2302, %v2466
      %v2513 = vadd.f32 %v2303, %v2471
      %v2514 = vadd.f32 %v2304, %v2474
      %v2515 = vadd.f32 %v2305, %v2479
      %v2516 = vadd.f32 %v2306, %v2482
      %v2518 = vshrl.u32 %v266, 16
      %v2520 = vrot.slane %v2518, 4
      %v2521 = vshll.u32 %v266, 16
      %v2523 = vrot.slane %v2521, 5
      %v2524 = vor.u32 %v2520, %v2523
      %v2525 = vrot.slane %v2524, 4
      %v2527 = vshll.u32 %v267, 16
      %v2529 = vrot.slane %v2527, 5
      %v2530 = vsel %vm273, %v2525, %v2529
      %v2531 = vshrl.u32 %v267, 16
      %v2533 = vrot.slane %v2531, 4
      %v2534 = vor.u32 %v2533, %v2529
      %v2535 = vrot.slane %v2534, 4
      %v2537 = vshll.u32 %v268, 16
      %v2539 = vrot.slane %v2537, 5
      %v2540 = vsel %vm273, %v2535, %v2539
      %s2541 = scalar_lea.vmem %s1, 56
      %v2542 = vld [vmem:[%s2541] sm:$0xf]
      %v2543 = vld [vmem:[%s2541 + $0x4] sm:$0xf]
      %v2544 = vunpack.c.l.b16 %v2530
      %v2545 = vunpack.c.l.b16 %v2540
      %v2546 = vpack.c.b16 %v2545, %v2544
      %v2549 = vunpack.c.l.b16 %v2542
      %v2550 = vunpack.c.l.b16 %v2543
      %v2551 = vpack.c.b16 %v2550, %v2549
      %v2554 = vsel %vm715, %v2546, 0
      %2556 = vmatprep.subr.bf16.mxu0 0
      %2557 = vmatpush1.bf16.msra.mxu0 0
      %2558 = vmatprep.subr.bf16.mxu0 0
      %2559 = vmatpush1.bf16.msra.mxu0 0
      %2560 = vmatprep.subr.bf16.mxu0 0
      %2561 = vmatpush1.bf16.msra.mxu0 0
      %2562 = vmatprep.subr.bf16.mxu0 0
      %2563 = vmatpush1.bf16.msra.mxu0 0
      %2564 = vmatprep.subr.bf16.mxu0 0
      %2565 = vmatpush1.bf16.msra.mxu0 0
      %2566 = vmatprep.subr.bf16.mxu0 0
      %2567 = vmatpush1.bf16.msra.mxu0 0
      %2568 = vmatprep.subr.bf16.mxu0 0
      %2569 = vmatpush1.bf16.msra.mxu0 0
      %2570 = vmatprep.subr.bf16.mxu0 0
      %2571 = vmatpush1.bf16.msra.mxu0 %v2551
      %2572 = vmatprep.subr.bf16.mxu0 0
      %2573 = vmatpush2.bf16.msra.mxu0 0
      %2574 = vmatprep.subr.bf16.mxu0 0
      %2575 = vmatpush2.bf16.msra.mxu0 0
      %2576 = vmatprep.subr.bf16.mxu0 0
      %2577 = vmatpush2.bf16.msra.mxu0 0
      %2578 = vmatprep.subr.bf16.mxu0 0
      %2579 = vmatpush2.bf16.msra.mxu0 0
      %2580 = vmatprep.subr.bf16.mxu0 0
      %2581 = vmatpush2.bf16.msra.mxu0 0
      %2582 = vmatprep.subr.bf16.mxu0 0
      %2583 = vmatpush2.bf16.msra.mxu0 0
      %2584 = vmatprep.subr.bf16.mxu0 0
      %2585 = vmatpush2.bf16.msra.mxu0 0
      %2586 = vmatprep.subr.bf16.mxu0 0
      %2587 = vmatpush2.bf16.msra.mxu0 0
      %2588 = vmatprep.mubr.bf16.mxu0 0
      %2589 = vmatmul.mubr.bf16.gmra.mxu0 %v723
      %v2590 = vpop.f32.mrf.mxu0
      %v2591 = vadd.f32 0.0, %v2590
      %v2592 = vpop.f32.mrf.mxu0
      %v2593 = vpop.f32.mrf.mxu0
      %v2594 = vadd.f32 0.0, %v2593
      %v2595 = vpop.f32.mrf.mxu0
      %2596 = vmatprep.mubr.bf16.mxu0 0
      %2597 = vmatmul.mubr.bf16.gmra.mxu0 %v726
      %v2598 = vpop.f32.mrf.mxu0
      %v2599 = vadd.f32 0.0, %v2598
      %v2600 = vpop.f32.mrf.mxu0
      %v2601 = vpop.f32.mrf.mxu0
      %v2602 = vadd.f32 0.0, %v2601
      %v2603 = vpop.f32.mrf.mxu0
      %2604 = vmatprep.mubr.bf16.mxu0 0
      %2605 = vmatmul.mubr.bf16.gmra.mxu0 %v729
      %v2606 = vpop.f32.mrf.mxu0
      %v2607 = vadd.f32 0.0, %v2606
      %v2608 = vpop.f32.mrf.mxu0
      %v2609 = vpop.f32.mrf.mxu0
      %v2610 = vadd.f32 0.0, %v2609
      %v2611 = vpop.f32.mrf.mxu0
      %2612 = vmatprep.mubr.bf16.mxu0 0
      %2613 = vmatmul.mubr.bf16.gmra.mxu0 %v732
      %v2614 = vpop.f32.mrf.mxu0
      %v2615 = vadd.f32 0.0, %v2614
      %v2616 = vpop.f32.mrf.mxu0
      %v2617 = vpop.f32.mrf.mxu0
      %v2618 = vadd.f32 0.0, %v2617
      %v2619 = vpop.f32.mrf.mxu0
      %2620 = vmatprep.mubr.bf16.mxu0 0
      %2621 = vmatmul.mubr.bf16.gmra.mxu0 %v735
      %v2622 = vpop.f32.mrf.mxu0
      %v2623 = vadd.f32 0.0, %v2622
      %v2624 = vpop.f32.mrf.mxu0
      %v2625 = vpop.f32.mrf.mxu0
      %v2626 = vadd.f32 0.0, %v2625
      %v2627 = vpop.f32.mrf.mxu0
      %2628 = vmatprep.mubr.bf16.mxu0 0
      %2629 = vmatmul.mubr.bf16.gmra.mxu0 %v738
      %v2630 = vpop.f32.mrf.mxu0
      %v2631 = vadd.f32 0.0, %v2630
      %v2632 = vpop.f32.mrf.mxu0
      %v2633 = vpop.f32.mrf.mxu0
      %v2634 = vadd.f32 0.0, %v2633
      %v2635 = vpop.f32.mrf.mxu0
      %2636 = vmatprep.mubr.bf16.mxu0 0
      %2637 = vmatmul.mubr.bf16.gmra.mxu0 %v741
      %v2638 = vpop.f32.mrf.mxu0
      %v2639 = vadd.f32 0.0, %v2638
      %v2640 = vpop.f32.mrf.mxu0
      %v2641 = vpop.f32.mrf.mxu0
      %v2642 = vadd.f32 0.0, %v2641
      %v2643 = vpop.f32.mrf.mxu0
      %2644 = vmatprep.mubr.bf16.mxu0 0
      %2645 = vmatmul.mubr.bf16.gmra.mxu0 %v744
      %v2646 = vpop.f32.mrf.mxu0
      %v2647 = vadd.f32 0.0, %v2646
      %v2648 = vpop.f32.mrf.mxu0
      %v2649 = vpop.f32.mrf.mxu0
      %v2650 = vadd.f32 0.0, %v2649
      %v2651 = vpop.f32.mrf.mxu0
      %2652 = vmatprep.mubr.bf16.mxu0 0
      %2653 = vmatmul.mubr.bf16.gmra.mxu0 %v747
      %v2654 = vpop.f32.mrf.mxu0
      %v2655 = vadd.f32 0.0, %v2654
      %v2656 = vpop.f32.mrf.mxu0
      %v2657 = vpop.f32.mrf.mxu0
      %v2658 = vadd.f32 0.0, %v2657
      %v2659 = vpop.f32.mrf.mxu0
      %2660 = vmatprep.mubr.bf16.mxu0 0
      %2661 = vmatmul.mubr.bf16.gmra.mxu0 %v750
      %v2662 = vpop.f32.mrf.mxu0
      %v2663 = vadd.f32 0.0, %v2662
      %v2664 = vpop.f32.mrf.mxu0
      %v2665 = vpop.f32.mrf.mxu0
      %v2666 = vadd.f32 0.0, %v2665
      %v2667 = vpop.f32.mrf.mxu0
      %2668 = vmatprep.mubr.bf16.mxu0 0
      %2669 = vmatmul.mubr.bf16.gmra.mxu0 %v753
      %v2670 = vpop.f32.mrf.mxu0
      %v2671 = vadd.f32 0.0, %v2670
      %v2672 = vpop.f32.mrf.mxu0
      %v2673 = vpop.f32.mrf.mxu0
      %v2674 = vadd.f32 0.0, %v2673
      %v2675 = vpop.f32.mrf.mxu0
      %2676 = vmatprep.mubr.bf16.mxu0 0
      %2677 = vmatmul.mubr.bf16.gmra.mxu0 %v756
      %v2678 = vpop.f32.mrf.mxu0
      %v2679 = vadd.f32 0.0, %v2678
      %v2680 = vpop.f32.mrf.mxu0
      %v2681 = vpop.f32.mrf.mxu0
      %v2682 = vadd.f32 0.0, %v2681
      %v2683 = vpop.f32.mrf.mxu0
      %2684 = vmatprep.mubr.bf16.mxu0 0
      %2685 = vmatmul.mubr.bf16.gmra.mxu0 %v759
      %v2686 = vpop.f32.mrf.mxu0
      %v2687 = vadd.f32 0.0, %v2686
      %v2688 = vpop.f32.mrf.mxu0
      %v2689 = vpop.f32.mrf.mxu0
      %v2690 = vadd.f32 0.0, %v2689
      %v2691 = vpop.f32.mrf.mxu0
      %2692 = vmatprep.mubr.bf16.mxu0 0
      %2693 = vmatmul.mubr.bf16.gmra.mxu0 %v762
      %v2694 = vpop.f32.mrf.mxu0
      %v2695 = vadd.f32 0.0, %v2694
      %v2696 = vpop.f32.mrf.mxu0
      %v2697 = vpop.f32.mrf.mxu0
      %v2698 = vadd.f32 0.0, %v2697
      %v2699 = vpop.f32.mrf.mxu0
      %2700 = vmatprep.mubr.bf16.mxu0 0
      %2701 = vmatmul.mubr.bf16.gmra.mxu0 %v1896
      %v2702 = vpop.f32.mrf.mxu0
      %v2703 = vadd.f32 0.0, %v2702
      %v2704 = vpop.f32.mrf.mxu0
      %v2705 = vpop.f32.mrf.mxu0
      %v2706 = vadd.f32 0.0, %v2705
      %v2707 = vpop.f32.mrf.mxu0
      %2708 = vmatprep.mubr.bf16.mxu0 0
      %2709 = vmatmul.mubr.bf16.gmra.mxu0 %v2554
      %v2710 = vpop.f32.mrf.mxu0
      %v2711 = vadd.f32 0.0, %v2710
      %v2712 = vpop.f32.mrf.mxu0
      %v2713 = vpop.f32.mrf.mxu0
      %v2714 = vadd.f32 0.0, %v2713
      %v2715 = vpop.f32.mrf.mxu0
      %2716 = vdwg.mxu0
      %v2717 = vadd.f32 %v2485, %v2591
      %v2718 = vadd.f32 %v2486, %v2594
      %v2719 = vadd.f32 %v2487, %v2599
      %v2720 = vadd.f32 %v2488, %v2602
      %v2721 = vadd.f32 %v2489, %v2607
      %v2722 = vadd.f32 %v2490, %v2610
      %v2723 = vadd.f32 %v2491, %v2615
      %v2724 = vadd.f32 %v2492, %v2618
      %v2725 = vadd.f32 %v2493, %v2623
      %v2726 = vadd.f32 %v2494, %v2626
      %v2727 = vadd.f32 %v2495, %v2631
      %v2728 = vadd.f32 %v2496, %v2634
      %v2729 = vadd.f32 %v2497, %v2639
      %v2730 = vadd.f32 %v2498, %v2642
      %v2731 = vadd.f32 %v2499, %v2647
      %v2732 = vadd.f32 %v2500, %v2650
      %v2733 = vadd.f32 %v2501, %v2655
      %v2734 = vadd.f32 %v2502, %v2658
      %v2735 = vadd.f32 %v2503, %v2663
      %v2736 = vadd.f32 %v2504, %v2666
      %v2737 = vadd.f32 %v2505, %v2671
      %v2738 = vadd.f32 %v2506, %v2674
      %v2739 = vadd.f32 %v2507, %v2679
      %v2740 = vadd.f32 %v2508, %v2682
      %v2741 = vadd.f32 %v2509, %v2687
      %v2742 = vadd.f32 %v2510, %v2690
      %v2743 = vadd.f32 %v2511, %v2695
      %v2744 = vadd.f32 %v2512, %v2698
      %v2745 = vadd.f32 %v2513, %v2703
      %v2746 = vadd.f32 %v2514, %v2706
      %v2747 = vadd.f32 %v2515, %v2711
      %v2748 = vadd.f32 %v2516, %v2714
      %v2750 = vrot.slane %v266, 5
      %v2751 = vrot.slane %v2750, 4
      %v2752 = vrot.slane %v267, 5
      %v2753 = vsel %vm1238, %v2751, %v2752
      %v2754 = vrot.slane %v2752, 4
      %v2755 = vrot.slane %v268, 5
      %v2756 = vsel %vm1238, %v2754, %v2755
      %s2757 = scalar_lea.vmem %s1, 64
      %v2758 = vld [vmem:[%s2757] sm:$0xf]
      %v2759 = vld [vmem:[%s2757 + $0x4] sm:$0xf]
      %v2760 = vunpack.c.l.b16 %v2753
      %v2761 = vunpack.c.l.b16 %v2756
      %v2762 = vpack.c.b16 %v2761, %v2760
      %v2765 = vunpack.c.l.b16 %v2758
      %v2766 = vunpack.c.l.b16 %v2759
      %v2767 = vpack.c.b16 %v2766, %v2765
      %v2770 = vsel %vm715, %v2762, 0
      %2772 = vmatprep.subr.bf16.mxu0 0
      %2773 = vmatpush1.bf16.msra.mxu0 0
      %2774 = vmatprep.subr.bf16.mxu0 0
      %2775 = vmatpush1.bf16.msra.mxu0 0
      %2776 = vmatprep.subr.bf16.mxu0 0
      %2777 = vmatpush1.bf16.msra.mxu0 0
      %2778 = vmatprep.subr.bf16.mxu0 0
      %2779 = vmatpush1.bf16.msra.mxu0 0
      %2780 = vmatprep.subr.bf16.mxu0 0
      %2781 = vmatpush1.bf16.msra.mxu0 0
      %2782 = vmatprep.subr.bf16.mxu0 0
      %2783 = vmatpush1.bf16.msra.mxu0 0
      %2784 = vmatprep.subr.bf16.mxu0 0
      %2785 = vmatpush1.bf16.msra.mxu0 0
      %2786 = vmatprep.subr.bf16.mxu0 0
      %2787 = vmatpush1.bf16.msra.mxu0 %v2767
      %2788 = vmatprep.subr.bf16.mxu0 0
      %2789 = vmatpush2.bf16.msra.mxu0 0
      %2790 = vmatprep.subr.bf16.mxu0 0
      %2791 = vmatpush2.bf16.msra.mxu0 0
      %2792 = vmatprep.subr.bf16.mxu0 0
      %2793 = vmatpush2.bf16.msra.mxu0 0
      %2794 = vmatprep.subr.bf16.mxu0 0
      %2795 = vmatpush2.bf16.msra.mxu0 0
      %2796 = vmatprep.subr.bf16.mxu0 0
      %2797 = vmatpush2.bf16.msra.mxu0 0
      %2798 = vmatprep.subr.bf16.mxu0 0
      %2799 = vmatpush2.bf16.msra.mxu0 0
      %2800 = vmatprep.subr.bf16.mxu0 0
      %2801 = vmatpush2.bf16.msra.mxu0 0
      %2802 = vmatprep.subr.bf16.mxu0 0
      %2803 = vmatpush2.bf16.msra.mxu0 0
      %2804 = vmatprep.mubr.bf16.mxu0 0
      %2805 = vmatmul.mubr.bf16.gmra.mxu0 %v1415
      %v2806 = vpop.f32.mrf.mxu0
      %v2807 = vadd.f32 0.0, %v2806
      %v2808 = vpop.f32.mrf.mxu0
      %v2809 = vpop.f32.mrf.mxu0
      %v2810 = vadd.f32 0.0, %v2809
      %v2811 = vpop.f32.mrf.mxu0
      %2812 = vmatprep.mubr.bf16.mxu0 0
      %2813 = vmatmul.mubr.bf16.gmra.mxu0 %v1418
      %v2814 = vpop.f32.mrf.mxu0
      %v2815 = vadd.f32 0.0, %v2814
      %v2816 = vpop.f32.mrf.mxu0
      %v2817 = vpop.f32.mrf.mxu0
      %v2818 = vadd.f32 0.0, %v2817
      %v2819 = vpop.f32.mrf.mxu0
      %2820 = vmatprep.mubr.bf16.mxu0 0
      %2821 = vmatmul.mubr.bf16.gmra.mxu0 %v1421
      %v2822 = vpop.f32.mrf.mxu0
      %v2823 = vadd.f32 0.0, %v2822
      %v2824 = vpop.f32.mrf.mxu0
      %v2825 = vpop.f32.mrf.mxu0
      %v2826 = vadd.f32 0.0, %v2825
      %v2827 = vpop.f32.mrf.mxu0
      %2828 = vmatprep.mubr.bf16.mxu0 0
      %2829 = vmatmul.mubr.bf16.gmra.mxu0 %v1424
      %v2830 = vpop.f32.mrf.mxu0
      %v2831 = vadd.f32 0.0, %v2830
      %v2832 = vpop.f32.mrf.mxu0
      %v2833 = vpop.f32.mrf.mxu0
      %v2834 = vadd.f32 0.0, %v2833
      %v2835 = vpop.f32.mrf.mxu0
      %2836 = vmatprep.mubr.bf16.mxu0 0
      %2837 = vmatmul.mubr.bf16.gmra.mxu0 %v1427
      %v2838 = vpop.f32.mrf.mxu0
      %v2839 = vadd.f32 0.0, %v2838
      %v2840 = vpop.f32.mrf.mxu0
      %v2841 = vpop.f32.mrf.mxu0
      %v2842 = vadd.f32 0.0, %v2841
      %v2843 = vpop.f32.mrf.mxu0
      %2844 = vmatprep.mubr.bf16.mxu0 0
      %2845 = vmatmul.mubr.bf16.gmra.mxu0 %v1430
      %v2846 = vpop.f32.mrf.mxu0
      %v2847 = vadd.f32 0.0, %v2846
      %v2848 = vpop.f32.mrf.mxu0
      %v2849 = vpop.f32.mrf.mxu0
      %v2850 = vadd.f32 0.0, %v2849
      %v2851 = vpop.f32.mrf.mxu0
      %2852 = vmatprep.mubr.bf16.mxu0 0
      %2853 = vmatmul.mubr.bf16.gmra.mxu0 %v1433
      %v2854 = vpop.f32.mrf.mxu0
      %v2855 = vadd.f32 0.0, %v2854
      %v2856 = vpop.f32.mrf.mxu0
      %v2857 = vpop.f32.mrf.mxu0
      %v2858 = vadd.f32 0.0, %v2857
      %v2859 = vpop.f32.mrf.mxu0
      %2860 = vmatprep.mubr.bf16.mxu0 0
      %2861 = vmatmul.mubr.bf16.gmra.mxu0 %v1436
      %v2862 = vpop.f32.mrf.mxu0
      %v2863 = vadd.f32 0.0, %v2862
      %v2864 = vpop.f32.mrf.mxu0
      %v2865 = vpop.f32.mrf.mxu0
      %v2866 = vadd.f32 0.0, %v2865
      %v2867 = vpop.f32.mrf.mxu0
      %2868 = vmatprep.mubr.bf16.mxu0 0
      %2869 = vmatmul.mubr.bf16.gmra.mxu0 %v1439
      %v2870 = vpop.f32.mrf.mxu0
      %v2871 = vadd.f32 0.0, %v2870
      %v2872 = vpop.f32.mrf.mxu0
      %v2873 = vpop.f32.mrf.mxu0
      %v2874 = vadd.f32 0.0, %v2873
      %v2875 = vpop.f32.mrf.mxu0
      %2876 = vmatprep.mubr.bf16.mxu0 0
      %2877 = vmatmul.mubr.bf16.gmra.mxu0 %v1442
      %v2878 = vpop.f32.mrf.mxu0
      %v2879 = vadd.f32 0.0, %v2878
      %v2880 = vpop.f32.mrf.mxu0
      %v2881 = vpop.f32.mrf.mxu0
      %v2882 = vadd.f32 0.0, %v2881
      %v2883 = vpop.f32.mrf.mxu0
      %2884 = vmatprep.mubr.bf16.mxu0 0
      %2885 = vmatmul.mubr.bf16.gmra.mxu0 %v1445
      %v2886 = vpop.f32.mrf.mxu0
      %v2887 = vadd.f32 0.0, %v2886
      %v2888 = vpop.f32.mrf.mxu0
      %v2889 = vpop.f32.mrf.mxu0
      %v2890 = vadd.f32 0.0, %v2889
      %v2891 = vpop.f32.mrf.mxu0
      %2892 = vmatprep.mubr.bf16.mxu0 0
      %2893 = vmatmul.mubr.bf16.gmra.mxu0 %v1448
      %v2894 = vpop.f32.mrf.mxu0
      %v2895 = vadd.f32 0.0, %v2894
      %v2896 = vpop.f32.mrf.mxu0
      %v2897 = vpop.f32.mrf.mxu0
      %v2898 = vadd.f32 0.0, %v2897
      %v2899 = vpop.f32.mrf.mxu0
      %2900 = vmatprep.mubr.bf16.mxu0 0
      %2901 = vmatmul.mubr.bf16.gmra.mxu0 %v1451
      %v2902 = vpop.f32.mrf.mxu0
      %v2903 = vadd.f32 0.0, %v2902
      %v2904 = vpop.f32.mrf.mxu0
      %v2905 = vpop.f32.mrf.mxu0
      %v2906 = vadd.f32 0.0, %v2905
      %v2907 = vpop.f32.mrf.mxu0
      %2908 = vmatprep.mubr.bf16.mxu0 0
      %2909 = vmatmul.mubr.bf16.gmra.mxu0 %v1454
      %v2910 = vpop.f32.mrf.mxu0
      %v2911 = vadd.f32 0.0, %v2910
      %v2912 = vpop.f32.mrf.mxu0
      %v2913 = vpop.f32.mrf.mxu0
      %v2914 = vadd.f32 0.0, %v2913
      %v2915 = vpop.f32.mrf.mxu0
      %2916 = vmatprep.mubr.bf16.mxu0 0
      %2917 = vmatmul.mubr.bf16.gmra.mxu0 %v2112
      %v2918 = vpop.f32.mrf.mxu0
      %v2919 = vadd.f32 0.0, %v2918
      %v2920 = vpop.f32.mrf.mxu0
      %v2921 = vpop.f32.mrf.mxu0
      %v2922 = vadd.f32 0.0, %v2921
      %v2923 = vpop.f32.mrf.mxu0
      %2924 = vmatprep.mubr.bf16.mxu0 0
      %2925 = vmatmul.mubr.bf16.gmra.mxu0 %v2770
      %v2926 = vpop.f32.mrf.mxu0
      %v2927 = vadd.f32 0.0, %v2926
      %v2928 = vpop.f32.mrf.mxu0
      %v2929 = vpop.f32.mrf.mxu0
      %v2930 = vadd.f32 0.0, %v2929
      %v2931 = vpop.f32.mrf.mxu0
      %2932 = vdwg.mxu0
      %v2933 = vadd.f32 %v2717, %v2807
      %v2934 = vadd.f32 %v2718, %v2810
      %v2935 = vadd.f32 %v2719, %v2815
      %v2936 = vadd.f32 %v2720, %v2818
      %v2937 = vadd.f32 %v2721, %v2823
      %v2938 = vadd.f32 %v2722, %v2826
      %v2939 = vadd.f32 %v2723, %v2831
      %v2940 = vadd.f32 %v2724, %v2834
      %v2941 = vadd.f32 %v2725, %v2839
      %v2942 = vadd.f32 %v2726, %v2842
      %v2943 = vadd.f32 %v2727, %v2847
      %v2944 = vadd.f32 %v2728, %v2850
      %v2945 = vadd.f32 %v2729, %v2855
      %v2946 = vadd.f32 %v2730, %v2858
      %v2947 = vadd.f32 %v2731, %v2863
      %v2948 = vadd.f32 %v2732, %v2866
      %v2949 = vadd.f32 %v2733, %v2871
      %v2950 = vadd.f32 %v2734, %v2874
      %v2951 = vadd.f32 %v2735, %v2879
      %v2952 = vadd.f32 %v2736, %v2882
      %v2953 = vadd.f32 %v2737, %v2887
      %v2954 = vadd.f32 %v2738, %v2890
      %v2955 = vadd.f32 %v2739, %v2895
      %v2956 = vadd.f32 %v2740, %v2898
      %v2957 = vadd.f32 %v2741, %v2903
      %v2958 = vadd.f32 %v2742, %v2906
      %v2959 = vadd.f32 %v2743, %v2911
      %v2960 = vadd.f32 %v2744, %v2914
      %v2961 = vadd.f32 %v2745, %v2919
      %v2962 = vadd.f32 %v2746, %v2922
      %v2963 = vadd.f32 %v2747, %v2927
      %v2964 = vadd.f32 %v2748, %v2930
      %vm2965 = vcmask 64512
      %v2966 = vsel %vm2965, %v2933, 0.0
      %v2967 = vsel %vm2965, %v2934, 0.0
      %v2968 = vadd.f32 %v2966, %v2967
      %v2969 = vsel %vm2965, %v2935, 0.0
      %v2970 = vadd.f32 %v2968, %v2969
      %v2971 = vsel %vm2965, %v2936, 0.0
      %v2972 = vadd.f32 %v2970, %v2971
      %v2973 = vsel %vm2965, %v2937, 0.0
      %v2974 = vadd.f32 %v2972, %v2973
      %v2975 = vsel %vm2965, %v2938, 0.0
      %v2976 = vadd.f32 %v2974, %v2975
      %v2977 = vsel %vm2965, %v2939, 0.0
      %v2978 = vadd.f32 %v2976, %v2977
      %v2979 = vsel %vm2965, %v2940, 0.0
      %v2980 = vadd.f32 %v2978, %v2979
      %v2981 = vsel %vm2965, %v2941, 0.0
      %v2982 = vadd.f32 %v2980, %v2981
      %v2983 = vsel %vm2965, %v2942, 0.0
      %v2984 = vadd.f32 %v2982, %v2983
      %v2985 = vsel %vm2965, %v2943, 0.0
      %v2986 = vadd.f32 %v2984, %v2985
      %v2987 = vsel %vm2965, %v2944, 0.0
      %v2988 = vadd.f32 %v2986, %v2987
      %v2989 = vsel %vm2965, %v2945, 0.0
      %v2990 = vadd.f32 %v2988, %v2989
      %v2991 = vsel %vm2965, %v2946, 0.0
      %v2992 = vadd.f32 %v2990, %v2991
      %v2993 = vsel %vm2965, %v2947, 0.0
      %v2994 = vadd.f32 %v2992, %v2993
      %v2995 = vsel %vm2965, %v2948, 0.0
      %v2996 = vadd.f32 %v2994, %v2995
      %v2997 = vsel %vm2965, %v2949, 0.0
      %v2998 = vadd.f32 %v2996, %v2997
      %v2999 = vsel %vm2965, %v2950, 0.0
      %v3000 = vadd.f32 %v2998, %v2999
      %v3001 = vsel %vm2965, %v2951, 0.0
      %v3002 = vadd.f32 %v3000, %v3001
      %v3003 = vsel %vm2965, %v2952, 0.0
      %v3004 = vadd.f32 %v3002, %v3003
      %v3005 = vsel %vm2965, %v2953, 0.0
      %v3006 = vadd.f32 %v3004, %v3005
      %v3007 = vsel %vm2965, %v2954, 0.0
      %v3008 = vadd.f32 %v3006, %v3007
      %v3009 = vsel %vm2965, %v2955, 0.0
      %v3010 = vadd.f32 %v3008, %v3009
      %v3011 = vsel %vm2965, %v2956, 0.0
      %v3012 = vadd.f32 %v3010, %v3011
      %v3013 = vsel %vm2965, %v2957, 0.0
      %v3014 = vadd.f32 %v3012, %v3013
      %v3015 = vsel %vm2965, %v2958, 0.0
      %v3016 = vadd.f32 %v3014, %v3015
      %v3017 = vsel %vm2965, %v2959, 0.0
      %v3018 = vadd.f32 %v3016, %v3017
      %v3019 = vsel %vm2965, %v2960, 0.0
      %v3020 = vadd.f32 %v3018, %v3019
      %v3021 = vsel %vm2965, %v2961, 0.0
      %v3022 = vadd.f32 %v3020, %v3021
      %v3023 = vsel %vm2965, %v2962, 0.0
      %v3024 = vadd.f32 %v3022, %v3023
      %v3025 = vsel %vm2965, %v2963, 0.0
      %v3026 = vadd.f32 %v3024, %v3025
      %v3027 = vsel %vm2965, %v2964, 0.0
      %v3028 = vadd.f32 %v3026, %v3027
      %v3029 = vrot.slane %v3028, 4
      %v3030 = vadd.f32 %v3028, %v3029
      %v3031 = vrot.slane %v3030, 2
      %v3032 = vadd.f32 %v3030, %v3031
      %v3033 = vrot.slane %v3032, 1
      %v3034 = vadd.f32 %v3032, %v3033
      %vm3035 = vcmask 57344
      %3036 = vst.msk [vmem:[%s208] sm:$0x1] %vm3035, %v3034
      %v3037 = vmul.f32 %v2933, %v2933
      %v3038 = vmul.f32 %v2934, %v2934
      %v3039 = vmul.f32 %v2935, %v2935
      %v3040 = vmul.f32 %v2936, %v2936
      %v3041 = vmul.f32 %v2937, %v2937
      %v3042 = vmul.f32 %v2938, %v2938
      %v3043 = vmul.f32 %v2939, %v2939
      %v3044 = vmul.f32 %v2940, %v2940
      %v3045 = vmul.f32 %v2941, %v2941
      %v3046 = vmul.f32 %v2942, %v2942
      %v3047 = vmul.f32 %v2943, %v2943
      %v3048 = vmul.f32 %v2944, %v2944
      %v3049 = vmul.f32 %v2945, %v2945
      %v3050 = vmul.f32 %v2946, %v2946
      %v3051 = vmul.f32 %v2947, %v2947
      %v3052 = vmul.f32 %v2948, %v2948
      %v3053 = vmul.f32 %v2949, %v2949
      %v3054 = vmul.f32 %v2950, %v2950
      %v3055 = vmul.f32 %v2951, %v2951
      %v3056 = vmul.f32 %v2952, %v2952
      %v3057 = vmul.f32 %v2953, %v2953
      %v3058 = vmul.f32 %v2954, %v2954
      %v3059 = vmul.f32 %v2955, %v2955
      %v3060 = vmul.f32 %v2956, %v2956
      %v3061 = vmul.f32 %v2957, %v2957
      %v3062 = vmul.f32 %v2958, %v2958
      %v3063 = vmul.f32 %v2959, %v2959
      %v3064 = vmul.f32 %v2960, %v2960
      %v3065 = vmul.f32 %v2961, %v2961
      %v3066 = vmul.f32 %v2962, %v2962
      %v3067 = vmul.f32 %v2963, %v2963
      %v3068 = vmul.f32 %v2964, %v2964
      %v3069 = vsel %vm2965, %v3037, 0.0
      %v3070 = vsel %vm2965, %v3038, 0.0
      %v3071 = vadd.f32 %v3069, %v3070
      %v3072 = vsel %vm2965, %v3039, 0.0
      %v3073 = vadd.f32 %v3071, %v3072
      %v3074 = vsel %vm2965, %v3040, 0.0
      %v3075 = vadd.f32 %v3073, %v3074
      %v3076 = vsel %vm2965, %v3041, 0.0
      %v3077 = vadd.f32 %v3075, %v3076
      %v3078 = vsel %vm2965, %v3042, 0.0
      %v3079 = vadd.f32 %v3077, %v3078
      %v3080 = vsel %vm2965, %v3043, 0.0
      %v3081 = vadd.f32 %v3079, %v3080
      %v3082 = vsel %vm2965, %v3044, 0.0
      %v3083 = vadd.f32 %v3081, %v3082
      %v3084 = vsel %vm2965, %v3045, 0.0
      %v3085 = vadd.f32 %v3083, %v3084
      %v3086 = vsel %vm2965, %v3046, 0.0
      %v3087 = vadd.f32 %v3085, %v3086
      %v3088 = vsel %vm2965, %v3047, 0.0
      %v3089 = vadd.f32 %v3087, %v3088
      %v3090 = vsel %vm2965, %v3048, 0.0
      %v3091 = vadd.f32 %v3089, %v3090
      %v3092 = vsel %vm2965, %v3049, 0.0
      %v3093 = vadd.f32 %v3091, %v3092
      %v3094 = vsel %vm2965, %v3050, 0.0
      %v3095 = vadd.f32 %v3093, %v3094
      %v3096 = vsel %vm2965, %v3051, 0.0
      %v3097 = vadd.f32 %v3095, %v3096
      %v3098 = vsel %vm2965, %v3052, 0.0
      %v3099 = vadd.f32 %v3097, %v3098
      %v3100 = vsel %vm2965, %v3053, 0.0
      %v3101 = vadd.f32 %v3099, %v3100
      %v3102 = vsel %vm2965, %v3054, 0.0
      %v3103 = vadd.f32 %v3101, %v3102
      %v3104 = vsel %vm2965, %v3055, 0.0
      %v3105 = vadd.f32 %v3103, %v3104
      %v3106 = vsel %vm2965, %v3056, 0.0
      %v3107 = vadd.f32 %v3105, %v3106
      %v3108 = vsel %vm2965, %v3057, 0.0
      %v3109 = vadd.f32 %v3107, %v3108
      %v3110 = vsel %vm2965, %v3058, 0.0
      %v3111 = vadd.f32 %v3109, %v3110
      %v3112 = vsel %vm2965, %v3059, 0.0
      %v3113 = vadd.f32 %v3111, %v3112
      %v3114 = vsel %vm2965, %v3060, 0.0
      %v3115 = vadd.f32 %v3113, %v3114
      %v3116 = vsel %vm2965, %v3061, 0.0
      %v3117 = vadd.f32 %v3115, %v3116
      %v3118 = vsel %vm2965, %v3062, 0.0
      %v3119 = vadd.f32 %v3117, %v3118
      %v3120 = vsel %vm2965, %v3063, 0.0
      %v3121 = vadd.f32 %v3119, %v3120
      %v3122 = vsel %vm2965, %v3064, 0.0
      %v3123 = vadd.f32 %v3121, %v3122
      %v3124 = vsel %vm2965, %v3065, 0.0
      %v3125 = vadd.f32 %v3123, %v3124
      %v3126 = vsel %vm2965, %v3066, 0.0
      %v3127 = vadd.f32 %v3125, %v3126
      %v3128 = vsel %vm2965, %v3067, 0.0
      %v3129 = vadd.f32 %v3127, %v3128
      %v3130 = vsel %vm2965, %v3068, 0.0
      %v3131 = vadd.f32 %v3129, %v3130
      %v3132 = vrot.slane %v3131, 4
      %v3133 = vadd.f32 %v3131, %v3132
      %v3134 = vrot.slane %v3133, 2
      %v3135 = vadd.f32 %v3133, %v3134
      %v3136 = vrot.slane %v3135, 1
      %v3137 = vadd.f32 %v3135, %v3136
      %3138 = vst.msk [vmem:[%s208 + $0x1] sm:$0x1] %vm3035, %v3137
      %v3139 = vpack.c.bf16 %v2934, %v2933
      %v3140 = vpack.c.bf16 %v2936, %v2935
      %v3141 = vpack.c.bf16 %v2938, %v2937
      %v3142 = vpack.c.bf16 %v2940, %v2939
      %v3143 = vpack.c.bf16 %v2942, %v2941
      %v3144 = vpack.c.bf16 %v2944, %v2943
      %v3145 = vpack.c.bf16 %v2946, %v2945
      %v3146 = vpack.c.bf16 %v2948, %v2947
      %v3147 = vpack.c.bf16 %v2950, %v2949
      %v3148 = vpack.c.bf16 %v2952, %v2951
      %v3149 = vpack.c.bf16 %v2954, %v2953
      %v3150 = vpack.c.bf16 %v2956, %v2955
      %v3151 = vpack.c.bf16 %v2958, %v2957
      %v3152 = vpack.c.bf16 %v2960, %v2959
      %v3153 = vpack.c.bf16 %v2962, %v2961
      %v3154 = vpack.c.bf16 %v2964, %v2963
      %v3171 = vunpack.c.l.b16 %v3139
      %v3172 = vunpack.c.h.b16 %v3139
      %v3173 = vunpack.c.l.b16 %v3140
      %v3174 = vunpack.c.h.b16 %v3140
      %v3175 = vunpack.c.l.b16 %v3141
      %v3176 = vunpack.c.h.b16 %v3141
      %v3177 = vunpack.c.l.b16 %v3142
      %v3178 = vunpack.c.h.b16 %v3142
      %v3179 = vunpack.c.l.b16 %v3143
      %v3180 = vunpack.c.h.b16 %v3143
      %v3181 = vunpack.c.l.b16 %v3144
      %v3182 = vunpack.c.h.b16 %v3144
      %v3183 = vunpack.c.l.b16 %v3145
      %v3184 = vunpack.c.h.b16 %v3145
      %v3185 = vunpack.c.l.b16 %v3146
      %v3186 = vunpack.c.h.b16 %v3146
      %v3187 = vunpack.c.l.b16 %v3147
      %v3188 = vunpack.c.h.b16 %v3147
      %v3189 = vunpack.c.l.b16 %v3148
      %v3190 = vunpack.c.h.b16 %v3148
      %v3191 = vunpack.c.l.b16 %v3149
      %v3192 = vunpack.c.h.b16 %v3149
      %v3193 = vunpack.c.l.b16 %v3150
      %v3194 = vunpack.c.h.b16 %v3150
      %v3195 = vunpack.c.l.b16 %v3151
      %v3196 = vunpack.c.h.b16 %v3151
      %v3197 = vunpack.c.l.b16 %v3152
      %v3198 = vunpack.c.h.b16 %v3152
      %v3199 = vunpack.c.l.b16 %v3153
      %v3200 = vunpack.c.h.b16 %v3153
      %v3201 = vunpack.c.l.b16 %v3154
      %v3202 = vunpack.c.h.b16 %v3154
      %v3203 = vpack.c.b16 %v3171, %v3171
      %v3204 = vpack.c.b16 %v3172, %v3172
      %v3205 = vpack.c.b16 %v3173, %v3173
      %v3206 = vpack.c.b16 %v3174, %v3174
      %v3207 = vpack.c.b16 %v3175, %v3175
      %v3208 = vpack.c.b16 %v3176, %v3176
      %v3209 = vpack.c.b16 %v3177, %v3177
      %v3210 = vpack.c.b16 %v3178, %v3178
      %v3211 = vpack.c.b16 %v3179, %v3179
      %v3212 = vpack.c.b16 %v3180, %v3180
      %v3213 = vpack.c.b16 %v3181, %v3181
      %v3214 = vpack.c.b16 %v3182, %v3182
      %v3215 = vpack.c.b16 %v3183, %v3183
      %v3216 = vpack.c.b16 %v3184, %v3184
      %v3217 = vpack.c.b16 %v3185, %v3185
      %v3218 = vpack.c.b16 %v3186, %v3186
      %v3219 = vpack.c.b16 %v3187, %v3187
      %v3220 = vpack.c.b16 %v3188, %v3188
      %v3221 = vpack.c.b16 %v3189, %v3189
      %v3222 = vpack.c.b16 %v3190, %v3190
      %v3223 = vpack.c.b16 %v3191, %v3191
      %v3224 = vpack.c.b16 %v3192, %v3192
      %v3225 = vpack.c.b16 %v3193, %v3193
      %v3226 = vpack.c.b16 %v3194, %v3194
      %v3227 = vpack.c.b16 %v3195, %v3195
      %v3228 = vpack.c.b16 %v3196, %v3196
      %v3229 = vpack.c.b16 %v3197, %v3197
      %v3230 = vpack.c.b16 %v3198, %v3198
      %v3231 = vpack.c.b16 %v3199, %v3199
      %v3232 = vpack.c.b16 %v3200, %v3200
      %v3233 = vpack.c.b16 %v3201, %v3201
      %v3234 = vpack.c.b16 %v3202, %v3202
      %vm3267 = vcmask 60416
      %3268 = vst.msk [vmem:[%s202] sm:$0xf] %vm3267, %v3203
      %3269 = vst.msk [vmem:[%s202 + $0x4] sm:$0xf] %vm3267, %v3204
      %3270 = vst.msk [vmem:[%s202 + $0x8] sm:$0xf] %vm3267, %v3205
      %3271 = vst.msk [vmem:[%s202 + $0xc] sm:$0xf] %vm3267, %v3206
      %3272 = vst.msk [vmem:[%s202 + $0x10] sm:$0xf] %vm3267, %v3207
      %3273 = vst.msk [vmem:[%s202 + $0x14] sm:$0xf] %vm3267, %v3208
      %3274 = vst.msk [vmem:[%s202 + $0x18] sm:$0xf] %vm3267, %v3209
      %3275 = vst.msk [vmem:[%s202 + $0x1c] sm:$0xf] %vm3267, %v3210
      %3276 = vst.msk [vmem:[%s202 + $0x20] sm:$0xf] %vm3267, %v3211
      %3277 = vst.msk [vmem:[%s202 + $0x24] sm:$0xf] %vm3267, %v3212
      %3278 = vst.msk [vmem:[%s202 + $0x28] sm:$0xf] %vm3267, %v3213
      %3279 = vst.msk [vmem:[%s202 + $0x2c] sm:$0xf] %vm3267, %v3214
      %3280 = vst.msk [vmem:[%s202 + $0x30] sm:$0xf] %vm3267, %v3215
      %3281 = vst.msk [vmem:[%s202 + $0x34] sm:$0xf] %vm3267, %v3216
      %3282 = vst.msk [vmem:[%s202 + $0x38] sm:$0xf] %vm3267, %v3217
      %3283 = vst.msk [vmem:[%s202 + $0x3c] sm:$0xf] %vm3267, %v3218
      %3284 = vst.msk [vmem:[%s202 + $0x40] sm:$0xf] %vm3267, %v3219
      %3285 = vst.msk [vmem:[%s202 + $0x44] sm:$0xf] %vm3267, %v3220
      %3286 = vst.msk [vmem:[%s202 + $0x48] sm:$0xf] %vm3267, %v3221
      %3287 = vst.msk [vmem:[%s202 + $0x4c] sm:$0xf] %vm3267, %v3222
      %3288 = vst.msk [vmem:[%s202 + $0x50] sm:$0xf] %vm3267, %v3223
      %3289 = vst.msk [vmem:[%s202 + $0x54] sm:$0xf] %vm3267, %v3224
      %3290 = vst.msk [vmem:[%s202 + $0x58] sm:$0xf] %vm3267, %v3225
      %3291 = vst.msk [vmem:[%s202 + $0x5c] sm:$0xf] %vm3267, %v3226
      %3292 = vst.msk [vmem:[%s202 + $0x60] sm:$0xf] %vm3267, %v3227
      %3293 = vst.msk [vmem:[%s202 + $0x64] sm:$0xf] %vm3267, %v3228
      %3294 = vst.msk [vmem:[%s202 + $0x68] sm:$0xf] %vm3267, %v3229
      %3295 = vst.msk [vmem:[%s202 + $0x6c] sm:$0xf] %vm3267, %v3230
      %3296 = vst.msk [vmem:[%s202 + $0x70] sm:$0xf] %vm3267, %v3231
      %3297 = vst.msk [vmem:[%s202 + $0x74] sm:$0xf] %vm3267, %v3232
      %3298 = vst.msk [vmem:[%s202 + $0x78] sm:$0xf] %vm3267, %v3233
      %3299 = vst.msk [vmem:[%s202 + $0x7c] sm:$0xf] %vm3267, %v3234
      %s3300 = smul.u32 32, %s20
      %p3301 = scmp.lt.s32.totalorder %s19, 1
      %s3302 = scalar_select %p3301, %s19, 1
      %p3303 = scmp.lt.s32.totalorder %s3300, 31
      %s3304 = scalar_select %p3303, %s3300, 31
      %s3305 = smul.addr %s3302, 32
      %s3306 = sadd.s32 %s3304, %s3305
      %s3307 = smul.addr %s3306, 4
      %s3308 = scalar_lea.vmem %s2, %s3307
      %s3309 = sadd.s32 %s19, %s20
      %p3310 = scmp.lt.s32.totalorder %s3309, 1
      %s3311 = scalar_select %p3310, %s3309, 1
      %s3312 = smul.addr %s3311, 2
      %s3313 = scalar_lea.vmem %s3, %s3312
      // Predicated region
      $region29: #{_forward.2} parent=27 // pred_check
        %p3314 = pneg %p94
      $region30: #{_forward.2} parent=27 // pred_check_branch
        %3316 = sbr.rel (%p3314) target = $region32
      $region31: #{_forward.2} parent=27 // pred_region
        %s3317 = smul.u32 32, %s20
      $region32: #{_forward.2} parent=27 // pred_fallthru
        _
      // Predicated region
      $region33: #{_forward.2} parent=27 // pred_check
        %p3318 = pneg %p122
      $region34: #{_forward.2} parent=27 // pred_check_branch
        %3320 = sbr.rel (%p3318) target = $region36
      $region35: #{_forward.2} parent=27 // pred_region
        %s3321 = sadd.s32 %s19, %s20
      $region36: #{_forward.2} parent=27 // pred_fallthru
        _
    $region28: #{_forward.2} parent=5 // pred_fallthru
      _
    %p3322 = scmp.le.s32.totalorder 2, %s10
    // Predicated region
    $region37: #{_forward.2} parent=5 // pred_check
      %p3323 = pneg %p3322
    $region38: #{_forward.2} parent=5 // pred_check_branch
      %3325 = sbr.rel (%p3323) target = $region40
    $region39: #{_forward.2} parent=5 // pred_region
      %s3326 = ssub.s32 %s10, 2
      // Predicated region
      $region41: #{_forward.2} parent=39 // pred_check
        %p3327 = pneg %p100
      $region42: #{_forward.2} parent=39 // pred_check_branch
        %3329 = sbr.rel (%p3327) target = $region44
      $region43: #{_forward.2} parent=39 // pred_region
        %s3330 = smul.u32 32, %s22
        %p3331 = scmp.lt.s32.totalorder %s21, 1
        %s3332 = scalar_select %p3331, %s21, 1
        %p3333 = scmp.lt.s32.totalorder %s3330, 31
        %s3334 = scalar_select %p3333, %s3330, 31
        %s3335 = smul.addr %s3332, 32
        %s3336 = sadd.s32 %s3334, %s3335
        %s3337 = smul.addr %s3336, 4
        %s3338 = scalar_lea.vmem %s2, %s3337
      $region44: #{_forward.2} parent=39 // pred_fallthru
        _
      // Predicated region
      $region45: #{_forward.2} parent=39 // pred_check
        %p3339 = pneg %p128
      $region46: #{_forward.2} parent=39 // pred_check_branch
        %3341 = sbr.rel (%p3339) target = $region48
      $region47: #{_forward.2} parent=39 // pred_region
        %s3342 = sadd.s32 %s21, %s22
        %p3343 = scmp.lt.s32.totalorder %s3342, 1
        %s3344 = scalar_select %p3343, %s3342, 1
        %s3345 = smul.addr %s3344, 2
        %s3346 = scalar_lea.vmem %s3, %s3345
      $region48: #{_forward.2} parent=39 // pred_fallthru
        _
    $region40: #{_forward.2} parent=5 // pred_fallthru
      _
  $region6: #{_forward.2} parent=0 // loop_footer
    %s14 = sadd.s32 1, %s10
  $region7: #{_forward.2} parent=0 // loop_footer_branch
    %9 = sbr.rel target = $region3
  $region8: #{_forward.2} parent=0 // loop_exit
    _

</llo_original>
